<compile_context>
chip_gen: v7x
topology: tpu7x:2x2x1
jax: 0.10.0
libtpu: 0.0.40
codegen_flags: <defaults>
</compile_context>

<pallas_src>
import functools

import jax
import jax.numpy as jnp
from jax.experimental import pallas as pl
from jax.experimental.pallas import tpu as pltpu

# Keep the plain-JAX reference matmuls in true f32 so the comparison against
# the (f32) Pallas kernel is meaningful on TPU.
jax.config.update("jax_default_matmul_precision", "highest")

EMBED = 64       # forced by in_proj_weight shape (64, 64)
SEQ = 64         # module is used with 64 tokens, batch collapsed to 1
NUM_HEADS = 4


def mha_kernel(scale, q_ref, k_ref, v_ref, w_in_t_ref, w_vo_ref, b_out_ref,
               o_ref):
    """Fused CustomMultiheadAttention.custom_forward (batch=1 collapsed)."""
    w_in_t = w_in_t_ref[...]

    # Projections. q/k feed the scores matmul; vo (= value @ W_in^T @ W_out^T)
    # is only needed for the final matmul, so it sits off the critical path.
    q = jnp.dot(q_ref[...], w_in_t, preferred_element_type=jnp.float32) * scale
    k = jnp.dot(k_ref[...], w_in_t, preferred_element_type=jnp.float32)
    vo = jnp.dot(v_ref[...], w_vo_ref[...], preferred_element_type=jnp.float32)

    # scores = q @ k^T, contracting the embed axes directly (no transpose).
    s = jax.lax.dot_general(q, k,
                            dimension_numbers=(((1,), (1,)), ((), ())),
                            preferred_element_type=jnp.float32)

    # softmax(dim=-1); exact reciprocal to keep attn_weights at 1e-5 tolerance.
    m = jnp.max(s, axis=-1, keepdims=True)
    p = jnp.exp(s - m)
    p = p * pl.reciprocal(jnp.sum(p, axis=-1, keepdims=True), approx=False)
    # TODO(synk): dropout on attention weights is identity here (p=0 / eval).

    # out_proj is already folded into vo; just add the bias.
    out = jnp.dot(p, vo, preferred_element_type=jnp.float32) + b_out_ref[...]

    # Pack both module outputs into one lane-dense (64, 128) block so the HBM
    # writeback is a single unmasked full-tile DMA.
    o_ref[:, :EMBED] = out
    o_ref[:, EMBED:] = p


def prepare_params(w_in, w_out, b_out):
    """Parameter-time constants; call once, outside the per-step path."""
    w_in_t = w_in.T                                   # (64, 64)
    w_vo = jnp.matmul(w_in.T, w_out.T)                # (64, 64)  fold out_proj
    b_out2 = b_out.reshape(1, EMBED)                  # (1, 64)
    # TODO(synk): in_proj_bias exists as a parameter but custom_forward never
    # uses it, so it is intentionally not consumed here.
    return w_in_t, w_vo, b_out2


@functools.partial(jax.jit, static_argnames=("num_heads",))
def custom_multihead_attention(query, key, value, w_in_t, w_vo, b_out2,
                               num_heads=NUM_HEADS):
    """query/key/value: (1, SEQ, EMBED). Returns (attn_output, attn_weights)."""
    head_dim = EMBED // num_heads
    scale = float(head_dim) ** (-0.5)

    packed = pl.pallas_call(
        functools.partial(mha_kernel, scale),
        out_shape=jax.ShapeDtypeStruct((SEQ, 2 * EMBED), jnp.float32),
        in_specs=[pl.BlockSpec(memory_space=pltpu.MemorySpace.VMEM)] * 6,
        out_specs=pl.BlockSpec(memory_space=pltpu.MemorySpace.VMEM),
    )(query[0], key[0], value[0], w_in_t, w_vo, b_out2)

    attn_output = packed[:, :EMBED].reshape(1, SEQ, EMBED)
    attn_weights = packed[:, EMBED:].reshape(1, SEQ, SEQ)
    return attn_output, attn_weights


def reference_forward(query, key, value, w_in, w_out, b_out, scale):
    """Plain-JAX reproduction of CustomMultiheadAttention.custom_forward."""
    q = (query @ w_in.T) * scale
    k = key @ w_in.T
    v = value @ w_in.T
    s = jnp.einsum("bqe,bke->bqk", q, k)
    p = jax.nn.softmax(s, axis=-1)
    a = jnp.einsum("bqk,bke->bqe", p, v)
    out = a @ w_out.T + b_out
    return out, p


if __name__ == "__main__":
    head_dim = EMBED // NUM_HEADS
    scale = head_dim ** (-0.5)

    ks = jax.random.split(jax.random.PRNGKey(0), 6)

    # Parameters (xavier-uniform style, as in reset_parameters()).
    xav = (6.0 / (EMBED + EMBED)) ** 0.5
    w_in = jax.random.uniform(ks[0], (EMBED, EMBED), jnp.float32, -xav, xav)
    w_out = jax.random.uniform(ks[1], (EMBED, EMBED), jnp.float32, -xav, xav)
    # out_proj.bias is init'd to 0 in the module; use a random value here to
    # exercise the bias path (it is a learned parameter either way).
    b_out = jax.random.uniform(ks[2], (EMBED,), jnp.float32, -0.1, 0.1)

    query = jax.random.normal(ks[3], (1, SEQ, EMBED), jnp.float32)
    key_in = jax.random.normal(ks[4], (1, SEQ, EMBED), jnp.float32)
    value_in = jax.random.normal(ks[5], (1, SEQ, EMBED), jnp.float32)

    # Hoisted parameter prep (done once, not per forward call).
    w_in_t, w_vo, b_out2 = prepare_params(w_in, w_out, b_out)
    w_in_t = jax.block_until_ready(w_in_t)
    w_vo = jax.block_until_ready(w_vo)

    attn_out, attn_w = custom_multihead_attention(query, key_in, value_in,
                                                  w_in_t, w_vo, b_out2)
    attn_out = jax.block_until_ready(attn_out)
    attn_w = jax.block_until_ready(attn_w)

    ref_out, ref_w = reference_forward(query, key_in, value_in,
                                       w_in, w_out, b_out, scale)
    assert attn_out.shape == (1, SEQ, EMBED)
    assert attn_w.shape == (1, SEQ, SEQ)
    assert jnp.allclose(attn_out, ref_out, atol=1e-4, rtol=1e-4), \
        "attn_output mismatch"
    assert jnp.allclose(attn_w, ref_w, atol=1e-5, rtol=1e-5), \
        "attn_weights mismatch"

    print("KERNEL_OK")
</pallas_src>

<mosaic_0001>
module attributes {stable_mosaic.version = 11 : i64} {
  func.func @mha_kernel(%arg0: memref<64x64xf32, #tpu.memory_space<vmem>>, %arg1: memref<64x64xf32, #tpu.memory_space<vmem>>, %arg2: memref<64x64xf32, #tpu.memory_space<vmem>>, %arg3: memref<64x64xf32, #tpu.memory_space<vmem>>, %arg4: memref<64x64xf32, #tpu.memory_space<vmem>>, %arg5: memref<1x64xf32, #tpu.memory_space<vmem>>, %arg6: memref<64x128xf32, #tpu.memory_space<vmem>>) attributes {dimension_semantics = [], scalar_prefetch = 0 : i64, scratch_operands = 0 : i64, tpu.core_type = #tpu.core_type<tc>} {
    %c0 = arith.constant 0 : index
    %c0_0 = arith.constant 0 : index
    %0 = vector.load %arg3[%c0, %c0_0] : memref<64x64xf32, #tpu.memory_space<vmem>>, vector<64x64xf32>
    %c0_1 = arith.constant 0 : index
    %c0_2 = arith.constant 0 : index
    %1 = vector.load %arg0[%c0_1, %c0_2] : memref<64x64xf32, #tpu.memory_space<vmem>>, vector<64x64xf32>
    %cst = arith.constant dense<0.000000e+00> : vector<64x64xf32>
    %2 = tpu.matmul %1, %0, %cst {dimension_numbers = #tpu.dot_dimension_numbers<[1], [0], [0], [1], [0, 0, 1, 1], [], []>, precision = #tpu.contract_precision<fp32>} : vector<64x64xf32>, vector<64x64xf32>, vector<64x64xf32> -> vector<64x64xf32>
    %cst_3 = arith.constant 2.500000e-01 : f32
    %3 = vector.broadcast %cst_3 : f32 to vector<64x64xf32>
    %4 = arith.mulf %2, %3 : vector<64x64xf32>
    %c0_4 = arith.constant 0 : index
    %c0_5 = arith.constant 0 : index
    %5 = vector.load %arg1[%c0_4, %c0_5] : memref<64x64xf32, #tpu.memory_space<vmem>>, vector<64x64xf32>
    %cst_6 = arith.constant dense<0.000000e+00> : vector<64x64xf32>
    %6 = tpu.matmul %5, %0, %cst_6 {dimension_numbers = #tpu.dot_dimension_numbers<[1], [0], [0], [1], [0, 0, 1, 1], [], []>, precision = #tpu.contract_precision<fp32>} : vector<64x64xf32>, vector<64x64xf32>, vector<64x64xf32> -> vector<64x64xf32>
    %c0_7 = arith.constant 0 : index
    %c0_8 = arith.constant 0 : index
    %7 = vector.load %arg2[%c0_7, %c0_8] : memref<64x64xf32, #tpu.memory_space<vmem>>, vector<64x64xf32>
    %c0_9 = arith.constant 0 : index
    %c0_10 = arith.constant 0 : index
    %8 = vector.load %arg4[%c0_9, %c0_10] : memref<64x64xf32, #tpu.memory_space<vmem>>, vector<64x64xf32>
    %cst_11 = arith.constant dense<0.000000e+00> : vector<64x64xf32>
    %9 = tpu.matmul %7, %8, %cst_11 {dimension_numbers = #tpu.dot_dimension_numbers<[1], [0], [0], [1], [0, 0, 1, 1], [], []>, precision = #tpu.contract_precision<fp32>} : vector<64x64xf32>, vector<64x64xf32>, vector<64x64xf32> -> vector<64x64xf32>
    %cst_12 = arith.constant dense<0.000000e+00> : vector<64x64xf32>
    %10 = tpu.matmul %4, %6, %cst_12 {dimension_numbers = #tpu.dot_dimension_numbers<[1], [1], [0], [0], [0, 0, 1, 0], [], []>, precision = #tpu.contract_precision<fp32>} : vector<64x64xf32>, vector<64x64xf32>, vector<64x64xf32> -> vector<64x64xf32>
    %cst_13 = arith.constant dense<0xFF800000> : vector<64xf32>
    %11 = vector.multi_reduction <maximumf>, %10, %cst_13 [1] : vector<64x64xf32> to vector<64xf32>
    %12 = vector.shape_cast %11 : vector<64xf32> to vector<64x1xf32>
    %13 = vector.broadcast %12 : vector<64x1xf32> to vector<64x64xf32>
    %14 = arith.subf %10, %13 : vector<64x64xf32>
    %15 = math.exp %14 : vector<64x64xf32>
    %cst_14 = arith.constant dense<0.000000e+00> : vector<64xf32>
    %16 = vector.multi_reduction <add>, %15, %cst_14 [1] : vector<64x64xf32> to vector<64xf32>
    %17 = vector.shape_cast %16 : vector<64xf32> to vector<64x1xf32>
    %18 = tpu.reciprocal %17 : vector<64x1xf32> -> vector<64x1xf32>
    %19 = vector.broadcast %18 : vector<64x1xf32> to vector<64x64xf32>
    %20 = arith.mulf %15, %19 : vector<64x64xf32>
    %cst_15 = arith.constant dense<0.000000e+00> : vector<64x64xf32>
    %21 = tpu.matmul %20, %9, %cst_15 {dimension_numbers = #tpu.dot_dimension_numbers<[1], [0], [0], [1], [0, 0, 1, 1], [], []>, precision = #tpu.contract_precision<fp32>} : vector<64x64xf32>, vector<64x64xf32>, vector<64x64xf32> -> vector<64x64xf32>
    %c0_16 = arith.constant 0 : index
    %c0_17 = arith.constant 0 : index
    %22 = vector.load %arg5[%c0_16, %c0_17] : memref<1x64xf32, #tpu.memory_space<vmem>>, vector<1x64xf32>
    %23 = vector.broadcast %22 : vector<1x64xf32> to vector<64x64xf32>
    %24 = arith.addf %21, %23 : vector<64x64xf32>
    %c0_18 = arith.constant 0 : index
    %c0_19 = arith.constant 0 : index
    %25 = vector.load %arg6[%c0_18, %c0_19] : memref<64x128xf32, #tpu.memory_space<vmem>>, vector<64x64xf32>
    tpu.vector_store %arg6[%c0_18, %c0_19], %24 {strides = array<i32>} : memref<64x128xf32, #tpu.memory_space<vmem>>, vector<64x64xf32>,
    %c0_20 = arith.constant 0 : index
    %c64 = arith.constant 64 : index
    %26 = vector.load %arg6[%c0_20, %c64] : memref<64x128xf32, #tpu.memory_space<vmem>>, vector<64x64xf32>
    tpu.vector_store %arg6[%c0_20, %c64], %20 {strides = array<i32>} : memref<64x128xf32, #tpu.memory_space<vmem>>, vector<64x64xf32>,
    return
  }
}

</mosaic_0001>

<llo_original>
// kernel: custom_multihead_attention.1
$region0: #{custom_multihead_attention.1}
  #allocation0 [shape = 'u32[]', space=smem, size = 0x4, offset = 0x4, fixed_abs, tag = 'smem constant byte address 0x4 - core index']
  #allocation1 [shape = 'u32[144,128]{1,0:T(1,128)}', space=vmem, size = 0x12000, scoped, tag = 'internal scratch']
  %s0 = inlined_call_operand.hbm [shape: f32[64,64], index: 0, kind: input, shape index: {}]
  %s1 = inlined_call_operand.hbm [shape: f32[64,64], index: 1, kind: input, shape index: {}]
  %s2 = inlined_call_operand.hbm [shape: f32[64,64], index: 2, kind: input, shape index: {}]
  %s3 = inlined_call_operand.hbm [shape: f32[64,64], index: 3, kind: input, shape index: {}]
  %s4 = inlined_call_operand.hbm [shape: f32[64,64], index: 4, kind: input, shape index: {}]
  %s5 = inlined_call_operand.vmem [shape: f32[1,64], index: 5, kind: input, shape index: {}]
  %s6 = inlined_call_operand.vmem [shape: f32[64,128], index: 6, kind: output, shape index: {}]
  %s7 = sld [smem:[#allocation0]]
  $region54: #{custom_multihead_attention.1} parent=0
    _
  %s9 = ssub.s32 1, %s7
  %s10 = scalar_select 0, %s9, %s7
  $region1: #{custom_multihead_attention.1} parent=0
    #allocation2 [shape = 'u8[32768]{0}', space=vmem, size = 0x8000, scoped, tag = 'input window, operand 0, single buffered']
    #allocation3 [shape = 's32[1]{0}', space=sflag, size = 0x4, scoped, tag = 'scoped memory for custom_multihead_attention.1']
    #allocation4 [shape = 'u8[32768]{0}', space=vmem, size = 0x8000, scoped, tag = 'input window, operand 1, single buffered']
    #allocation5 [shape = 's32[1]{0}', space=sflag, size = 0x4, scoped, tag = 'scoped memory for custom_multihead_attention.1']
    #allocation6 [shape = 'u8[32768]{0}', space=vmem, size = 0x8000, scoped, tag = 'input window, operand 2, single buffered']
    #allocation7 [shape = 'u8[32768]{0}', space=vmem, size = 0x8000, scoped, tag = 'input window, operand 3, single buffered']
    #allocation8 [shape = 's32[1]{0}', space=sflag, size = 0x4, scoped, tag = 'scoped memory for custom_multihead_attention.1']
    #allocation9 [shape = 'u8[32768]{0}', space=vmem, size = 0x8000, scoped, tag = 'input window, operand 4, single buffered']
    %11 = vsyncpa [#allocation3], 0
    %12 = vsyncpa [#allocation5], 0
    %13 = vsyncpa [#allocation8], 0
    // Predicated region
    $region2: #{custom_multihead_attention.1} parent=1 // pred_check
      _
    $region3: #{custom_multihead_attention.1} parent=1 // pred_check_branch
      %15 = sbr.rel (0) target = $region5
    $region4: #{custom_multihead_attention.1} parent=1 // pred_region
      %s17 = ssub.s32 1024, 1024
      %18 = vsyncadd [#allocation3], %s17
      %s19 = sshll.u32 [#allocation2], 4
      %s20 = int_to_ptr.vmem [resolvable:$true] %s19
      %25 = dma.hbm_to_vmem [thread:$0]  %s0, 1024, %s20, [#allocation3], 128, 128, 8
    $region5: #{custom_multihead_attention.1} parent=1 // pred_fallthru
      _
    // Predicated region
    $region6: #{custom_multihead_attention.1} parent=1 // pred_check
      _
    $region7: #{custom_multihead_attention.1} parent=1 // pred_check_branch
      %27 = sbr.rel (0) target = $region9
    $region8: #{custom_multihead_attention.1} parent=1 // pred_region
      %s29 = ssub.s32 1024, 1024
      %30 = vsyncadd [#allocation5], %s29
      %s31 = sshll.u32 [#allocation4], 4
      %s32 = int_to_ptr.vmem [resolvable:$true] %s31
      %37 = dma.hbm_to_vmem [thread:$0]  %s1, 1024, %s32, [#allocation5], 128, 128, 8
    $region9: #{custom_multihead_attention.1} parent=1 // pred_fallthru
      _
    // Predicated region
    $region10: #{custom_multihead_attention.1} parent=1 // pred_check
      _
    $region11: #{custom_multihead_attention.1} parent=1 // pred_check_branch
      %39 = sbr.rel (0) target = $region13
    $region12: #{custom_multihead_attention.1} parent=1 // pred_region
      %s41 = ssub.s32 1024, 1024
      %42 = vsyncadd [#allocation5], %s41
      %s43 = sshll.u32 [#allocation6], 4
      %s44 = int_to_ptr.vmem [resolvable:$true] %s43
      %49 = dma.hbm_to_vmem [thread:$0]  %s2, 1024, %s44, [#allocation5], 128, 128, 8
    $region13: #{custom_multihead_attention.1} parent=1 // pred_fallthru
      _
    // Predicated region
    $region14: #{custom_multihead_attention.1} parent=1 // pred_check
      _
    $region15: #{custom_multihead_attention.1} parent=1 // pred_check_branch
      %51 = sbr.rel (0) target = $region17
    $region16: #{custom_multihead_attention.1} parent=1 // pred_region
      %s53 = ssub.s32 1024, 1024
      %54 = vsyncadd [#allocation8], %s53
      %s55 = sshll.u32 [#allocation7], 4
      %s56 = int_to_ptr.vmem [resolvable:$true] %s55
      %61 = dma.hbm_to_vmem [thread:$0]  %s3, 1024, %s56, [#allocation8], 128, 128, 8
    $region17: #{custom_multihead_attention.1} parent=1 // pred_fallthru
      _
    // Predicated region
    $region18: #{custom_multihead_attention.1} parent=1 // pred_check
      _
    $region19: #{custom_multihead_attention.1} parent=1 // pred_check_branch
      %63 = sbr.rel (0) target = $region21
    $region20: #{custom_multihead_attention.1} parent=1 // pred_region
      %s65 = ssub.s32 1024, 1024
      %66 = vsyncadd [#allocation8], %s65
      %s67 = sshll.u32 [#allocation9], 4
      %s68 = int_to_ptr.vmem [resolvable:$true] %s67
      %73 = dma.hbm_to_vmem [thread:$0]  %s4, 1024, %s68, [#allocation8], 128, 128, 8
    $region21: #{custom_multihead_attention.1} parent=1 // pred_fallthru
      _
    // Predicated region
    $region22: #{custom_multihead_attention.1} parent=1 // pred_check
      _
    $region23: #{custom_multihead_attention.1} parent=1 // pred_check_branch
      %75 = sbr.rel (0) target = $region25
    $region24: #{custom_multihead_attention.1} parent=1 // pred_region
      _
    $region25: #{custom_multihead_attention.1} parent=1 // pred_fallthru
      _
    // Predicated region
    $region26: #{custom_multihead_attention.1} parent=1 // pred_check
      _
    $region27: #{custom_multihead_attention.1} parent=1 // pred_check_branch
      %77 = sbr.rel (0) target = $region29
    $region28: #{custom_multihead_attention.1} parent=1 // pred_region
      %78 = dma.done [#allocation3], 1024
    $region29: #{custom_multihead_attention.1} parent=1 // pred_fallthru
      _
    // Predicated region
    $region30: #{custom_multihead_attention.1} parent=1 // pred_check
      _
    $region31: #{custom_multihead_attention.1} parent=1 // pred_check_branch
      %80 = sbr.rel (0) target = $region33
    $region32: #{custom_multihead_attention.1} parent=1 // pred_region
      %81 = dma.done [#allocation5], 1024
    $region33: #{custom_multihead_attention.1} parent=1 // pred_fallthru
      _
    // Predicated region
    $region34: #{custom_multihead_attention.1} parent=1 // pred_check
      _
    $region35: #{custom_multihead_attention.1} parent=1 // pred_check_branch
      %83 = sbr.rel (0) target = $region37
    $region36: #{custom_multihead_attention.1} parent=1 // pred_region
      %84 = dma.done [#allocation5], 1024
    $region37: #{custom_multihead_attention.1} parent=1 // pred_fallthru
      _
    // Predicated region
    $region38: #{custom_multihead_attention.1} parent=1 // pred_check
      _
    $region39: #{custom_multihead_attention.1} parent=1 // pred_check_branch
      %86 = sbr.rel (0) target = $region41
    $region40: #{custom_multihead_attention.1} parent=1 // pred_region
      %87 = dma.done [#allocation8], 1024
    $region41: #{custom_multihead_attention.1} parent=1 // pred_fallthru
      _
    // Predicated region
    $region42: #{custom_multihead_attention.1} parent=1 // pred_check
      _
    $region43: #{custom_multihead_attention.1} parent=1 // pred_check_branch
      %89 = sbr.rel (0) target = $region45
    $region44: #{custom_multihead_attention.1} parent=1 // pred_region
      %90 = dma.done [#allocation8], 1024
    $region45: #{custom_multihead_attention.1} parent=1 // pred_fallthru
      _
    %v91 = vld [vmem:[#allocation7] sm:$0xff]
    %v92 = vld [vmem:[#allocation7 + $0x8] sm:$0xff]
    %v93 = vld [vmem:[#allocation7 + $0x10] sm:$0xff]
    %v94 = vld [vmem:[#allocation7 + $0x18] sm:$0xff]
    %v95 = vld [vmem:[#allocation7 + $0x20] sm:$0xff]
    %v96 = vld [vmem:[#allocation7 + $0x28] sm:$0xff]
    %v97 = vld [vmem:[#allocation7 + $0x30] sm:$0xff]
    %v98 = vld [vmem:[#allocation7 + $0x38] sm:$0xff]
    %v99 = vld [vmem:[#allocation2] sm:$0xff]
    %v100 = vld [vmem:[#allocation2 + $0x8] sm:$0xff]
    %v101 = vld [vmem:[#allocation2 + $0x10] sm:$0xff]
    %v102 = vld [vmem:[#allocation2 + $0x18] sm:$0xff]
    %v103 = vld [vmem:[#allocation2 + $0x20] sm:$0xff]
    %v104 = vld [vmem:[#allocation2 + $0x28] sm:$0xff]
    %v105 = vld [vmem:[#allocation2 + $0x30] sm:$0xff]
    %v106 = vld [vmem:[#allocation2 + $0x38] sm:$0xff]
    %vm107 = vcmask 523264
    %v109 = vsel %vm107, %v99, 0
    %v112 = vsel %vm107, %v100, 0
    %v115 = vsel %vm107, %v101, 0
    %v118 = vsel %vm107, %v102, 0
    %v121 = vsel %vm107, %v103, 0
    %v124 = vsel %vm107, %v104, 0
    %v127 = vsel %vm107, %v105, 0
    %v130 = vsel %vm107, %v106, 0
    %132 = vmatprep.subr.mxu0 0.0
    %v133 = vand.u32 %v91, 4294901760
    %134 = vmatpush1.msra.mxu0 %v133
    %135 = vmatprep.subr.mxu0 0.0
    %v136 = vand.u32 %v92, 4294901760
    %137 = vmatpush1.msra.mxu0 %v136
    %138 = vmatprep.subr.mxu0 0.0
    %v139 = vand.u32 %v93, 4294901760
    %140 = vmatpush1.msra.mxu0 %v139
    %141 = vmatprep.subr.mxu0 0.0
    %v142 = vand.u32 %v94, 4294901760
    %143 = vmatpush1.msra.mxu0 %v142
    %144 = vmatprep.subr.mxu0 0.0
    %v145 = vand.u32 %v95, 4294901760
    %146 = vmatpush1.msra.mxu0 %v145
    %147 = vmatprep.subr.mxu0 0.0
    %v148 = vand.u32 %v96, 4294901760
    %149 = vmatpush1.msra.mxu0 %v148
    %150 = vmatprep.subr.mxu0 0.0
    %v151 = vand.u32 %v97, 4294901760
    %152 = vmatpush1.msra.mxu0 %v151
    %153 = vmatprep.subr.mxu0 0.0
    %v154 = vand.u32 %v98, 4294901760
    %155 = vmatpush1.msra.mxu0 %v154
    %156 = vmatprep.subr.mxu0 0.0
    %157 = vmatpush1.msra.mxu0 0.0
    %158 = vmatprep.subr.mxu0 0.0
    %159 = vmatpush1.msra.mxu0 0.0
    %160 = vmatprep.subr.mxu0 0.0
    %161 = vmatpush1.msra.mxu0 0.0
    %162 = vmatprep.subr.mxu0 0.0
    %163 = vmatpush1.msra.mxu0 0.0
    %164 = vmatprep.subr.mxu0 0.0
    %165 = vmatpush1.msra.mxu0 0.0
    %166 = vmatprep.subr.mxu0 0.0
    %167 = vmatpush1.msra.mxu0 0.0
    %168 = vmatprep.subr.mxu0 0.0
    %169 = vmatpush1.msra.mxu0 0.0
    %170 = vmatprep.subr.mxu0 0.0
    %171 = vmatpush1.msra.mxu0 0.0
    %172 = vmatprep.subr.mxu0 0.0
    %173 = vmatpush1.msra.mxu0 0.0
    %174 = vmatprep.subr.mxu0 0.0
    %175 = vmatpush1.msra.mxu0 0.0
    %176 = vmatprep.subr.mxu0 0.0
    %177 = vmatpush1.msra.mxu0 0.0
    %178 = vmatprep.subr.mxu0 0.0
    %179 = vmatpush1.msra.mxu0 0.0
    %180 = vmatprep.subr.mxu0 0.0
    %181 = vmatpush1.msra.mxu0 0.0
    %182 = vmatprep.subr.mxu0 0.0
    %183 = vmatpush1.msra.mxu0 0.0
    %184 = vmatprep.subr.mxu0 0.0
    %185 = vmatpush1.msra.mxu0 0.0
    %186 = vmatprep.subr.mxu0 0.0
    %187 = vmatpush1.msra.mxu0 0.0
    %188 = vmatprep.subr.mxu0 0.0
    %189 = vmatpush1.msra.mxu0 0.0
    %190 = vmatprep.subr.mxu0 0.0
    %191 = vmatpush1.msra.mxu0 0.0
    %192 = vmatprep.subr.mxu0 0.0
    %193 = vmatpush1.msra.mxu0 0.0
    %194 = vmatprep.subr.mxu0 0.0
    %195 = vmatpush1.msra.mxu0 0.0
    %196 = vmatprep.subr.mxu0 0.0
    %197 = vmatpush1.msra.mxu0 0.0
    %198 = vmatprep.subr.mxu0 0.0
    %199 = vmatpush1.msra.mxu0 0.0
    %200 = vmatprep.subr.mxu0 0.0
    %201 = vmatpush1.msra.mxu0 0.0
    %202 = vmatprep.subr.mxu0 0.0
    %203 = vmatpush1.msra.mxu0 0.0
    %204 = vmatprep.mubr.f32.mxu0 0.0
    %v205 = vand.u32 %v109, 4294901760
    %v206 = vsub.f32 %v109, %v205
    %v207 = vand.u32 %v206, 4294901760
    %v208 = vsub.f32 %v206, %v207
    %v209 = vand.u32 %v208, 4294901760
    %210 = vmatmul.mubr.f32.gmra.mrb[0].mxu0 %v209
    %v211 = vpop.f32.mrb[0].mxu0
    %v212 = vadd.f32 0.0, %v211
    %v213 = vpop.f32.mrb[0].mxu0
    %214 = vmatprep.mubr.f32.mxu0 0.0
    %v215 = vand.u32 %v112, 4294901760
    %v216 = vsub.f32 %v112, %v215
    %v217 = vand.u32 %v216, 4294901760
    %v218 = vsub.f32 %v216, %v217
    %v219 = vand.u32 %v218, 4294901760
    %220 = vmatmul.mubr.f32.gmra.mrb[0].mxu0 %v219
    %v221 = vpop.f32.mrb[0].mxu0
    %v222 = vadd.f32 0.0, %v221
    %v223 = vpop.f32.mrb[0].mxu0
    %224 = vmatprep.mubr.f32.mxu0 0.0
    %v225 = vand.u32 %v115, 4294901760
    %v226 = vsub.f32 %v115, %v225
    %v227 = vand.u32 %v226, 4294901760
    %v228 = vsub.f32 %v226, %v227
    %v229 = vand.u32 %v228, 4294901760
    %230 = vmatmul.mubr.f32.gmra.mrb[0].mxu0 %v229
    %v231 = vpop.f32.mrb[0].mxu0
    %v232 = vadd.f32 0.0, %v231
    %v233 = vpop.f32.mrb[0].mxu0
    %234 = vmatprep.mubr.f32.mxu0 0.0
    %v235 = vand.u32 %v118, 4294901760
    %v236 = vsub.f32 %v118, %v235
    %v237 = vand.u32 %v236, 4294901760
    %v238 = vsub.f32 %v236, %v237
    %v239 = vand.u32 %v238, 4294901760
    %240 = vmatmul.mubr.f32.gmra.mrb[0].mxu0 %v239
    %v241 = vpop.f32.mrb[0].mxu0
    %v242 = vadd.f32 0.0, %v241
    %v243 = vpop.f32.mrb[0].mxu0
    %244 = vmatprep.mubr.f32.mxu0 0.0
    %v245 = vand.u32 %v121, 4294901760
    %v246 = vsub.f32 %v121, %v245
    %v247 = vand.u32 %v246, 4294901760
    %v248 = vsub.f32 %v246, %v247
    %v249 = vand.u32 %v248, 4294901760
    %250 = vmatmul.mubr.f32.gmra.mrb[0].mxu0 %v249
    %v251 = vpop.f32.mrb[0].mxu0
    %v252 = vadd.f32 0.0, %v251
    %v253 = vpop.f32.mrb[0].mxu0
    %254 = vmatprep.mubr.f32.mxu0 0.0
    %v255 = vand.u32 %v124, 4294901760
    %v256 = vsub.f32 %v124, %v255
    %v257 = vand.u32 %v256, 4294901760
    %v258 = vsub.f32 %v256, %v257
    %v259 = vand.u32 %v258, 4294901760
    %260 = vmatmul.mubr.f32.gmra.mrb[0].mxu0 %v259
    %v261 = vpop.f32.mrb[0].mxu0
    %v262 = vadd.f32 0.0, %v261
    %v263 = vpop.f32.mrb[0].mxu0
    %264 = vmatprep.mubr.f32.mxu0 0.0
    %v265 = vand.u32 %v127, 4294901760
    %v266 = vsub.f32 %v127, %v265
    %v267 = vand.u32 %v266, 4294901760
    %v268 = vsub.f32 %v266, %v267
    %v269 = vand.u32 %v268, 4294901760
    %270 = vmatmul.mubr.f32.gmra.mrb[0].mxu0 %v269
    %v271 = vpop.f32.mrb[0].mxu0
    %v272 = vadd.f32 0.0, %v271
    %v273 = vpop.f32.mrb[0].mxu0
    %274 = vmatprep.mubr.f32.mxu0 0.0
    %v275 = vand.u32 %v130, 4294901760
    %v276 = vsub.f32 %v130, %v275
    %v277 = vand.u32 %v276, 4294901760
    %v278 = vsub.f32 %v276, %v277
    %v279 = vand.u32 %v278, 4294901760
    %280 = vmatmul.mubr.f32.gmra.mrb[0].mxu0 %v279
    %v281 = vpop.f32.mrb[0].mxu0
    %v282 = vadd.f32 0.0, %v281
    %v283 = vpop.f32.mrb[0].mxu0
    %284 = vdwg.mxu0
    %285 = vmatprep.subr.mxu0 0.0
    %v286 = vand.u32 %v91, 4294901760
    %v287 = vsub.f32 %v91, %v286
    %v288 = vand.u32 %v287, 4294901760
    %v289 = vsub.f32 %v287, %v288
    %v290 = vand.u32 %v289, 4294901760
    %291 = vmatpush1.msra.mxu0 %v290
    %292 = vmatprep.subr.mxu0 0.0
    %v293 = vand.u32 %v92, 4294901760
    %v294 = vsub.f32 %v92, %v293
    %v295 = vand.u32 %v294, 4294901760
    %v296 = vsub.f32 %v294, %v295
    %v297 = vand.u32 %v296, 4294901760
    %298 = vmatpush1.msra.mxu0 %v297
    %299 = vmatprep.subr.mxu0 0.0
    %v300 = vand.u32 %v93, 4294901760
    %v301 = vsub.f32 %v93, %v300
    %v302 = vand.u32 %v301, 4294901760
    %v303 = vsub.f32 %v301, %v302
    %v304 = vand.u32 %v303, 4294901760
    %305 = vmatpush1.msra.mxu0 %v304
    %306 = vmatprep.subr.mxu0 0.0
    %v307 = vand.u32 %v94, 4294901760
    %v308 = vsub.f32 %v94, %v307
    %v309 = vand.u32 %v308, 4294901760
    %v310 = vsub.f32 %v308, %v309
    %v311 = vand.u32 %v310, 4294901760
    %312 = vmatpush1.msra.mxu0 %v311
    %313 = vmatprep.subr.mxu0 0.0
    %v314 = vand.u32 %v95, 4294901760
    %v315 = vsub.f32 %v95, %v314
    %v316 = vand.u32 %v315, 4294901760
    %v317 = vsub.f32 %v315, %v316
    %v318 = vand.u32 %v317, 4294901760
    %319 = vmatpush1.msra.mxu0 %v318
    %320 = vmatprep.subr.mxu0 0.0
    %v321 = vand.u32 %v96, 4294901760
    %v322 = vsub.f32 %v96, %v321
    %v323 = vand.u32 %v322, 4294901760
    %v324 = vsub.f32 %v322, %v323
    %v325 = vand.u32 %v324, 4294901760
    %326 = vmatpush1.msra.mxu0 %v325
    %327 = vmatprep.subr.mxu0 0.0
    %v328 = vand.u32 %v97, 4294901760
    %v329 = vsub.f32 %v97, %v328
    %v330 = vand.u32 %v329, 4294901760
    %v331 = vsub.f32 %v329, %v330
    %v332 = vand.u32 %v331, 4294901760
    %333 = vmatpush1.msra.mxu0 %v332
    %334 = vmatprep.subr.mxu0 0.0
    %v335 = vand.u32 %v98, 4294901760
    %v336 = vsub.f32 %v98, %v335
    %v337 = vand.u32 %v336, 4294901760
    %v338 = vsub.f32 %v336, %v337
    %v339 = vand.u32 %v338, 4294901760
    %340 = vmatpush1.msra.mxu0 %v339
    %341 = vmatprep.subr.mxu0 0.0
    %342 = vmatpush1.msra.mxu0 0.0
    %343 = vmatprep.subr.mxu0 0.0
    %344 = vmatpush1.msra.mxu0 0.0
    %345 = vmatprep.subr.mxu0 0.0
    %346 = vmatpush1.msra.mxu0 0.0
    %347 = vmatprep.subr.mxu0 0.0
    %348 = vmatpush1.msra.mxu0 0.0
    %349 = vmatprep.subr.mxu0 0.0
    %350 = vmatpush1.msra.mxu0 0.0
    %351 = vmatprep.subr.mxu0 0.0
    %352 = vmatpush1.msra.mxu0 0.0
    %353 = vmatprep.subr.mxu0 0.0
    %354 = vmatpush1.msra.mxu0 0.0
    %355 = vmatprep.subr.mxu0 0.0
    %356 = vmatpush1.msra.mxu0 0.0
    %357 = vmatprep.subr.mxu0 0.0
    %358 = vmatpush1.msra.mxu0 0.0
    %359 = vmatprep.subr.mxu0 0.0
    %360 = vmatpush1.msra.mxu0 0.0
    %361 = vmatprep.subr.mxu0 0.0
    %362 = vmatpush1.msra.mxu0 0.0
    %363 = vmatprep.subr.mxu0 0.0
    %364 = vmatpush1.msra.mxu0 0.0
    %365 = vmatprep.subr.mxu0 0.0
    %366 = vmatpush1.msra.mxu0 0.0
    %367 = vmatprep.subr.mxu0 0.0
    %368 = vmatpush1.msra.mxu0 0.0
    %369 = vmatprep.subr.mxu0 0.0
    %370 = vmatpush1.msra.mxu0 0.0
    %371 = vmatprep.subr.mxu0 0.0
    %372 = vmatpush1.msra.mxu0 0.0
    %373 = vmatprep.subr.mxu0 0.0
    %374 = vmatpush1.msra.mxu0 0.0
    %375 = vmatprep.subr.mxu0 0.0
    %376 = vmatpush1.msra.mxu0 0.0
    %377 = vmatprep.subr.mxu0 0.0
    %378 = vmatpush1.msra.mxu0 0.0
    %379 = vmatprep.subr.mxu0 0.0
    %380 = vmatpush1.msra.mxu0 0.0
    %381 = vmatprep.subr.mxu0 0.0
    %382 = vmatpush1.msra.mxu0 0.0
    %383 = vmatprep.subr.mxu0 0.0
    %384 = vmatpush1.msra.mxu0 0.0
    %385 = vmatprep.subr.mxu0 0.0
    %386 = vmatpush1.msra.mxu0 0.0
    %387 = vmatprep.subr.mxu0 0.0
    %388 = vmatpush1.msra.mxu0 0.0
    %389 = vmatprep.mubr.f32.mxu0 0.0
    %v390 = vand.u32 %v109, 4294901760
    %391 = vmatmul.mubr.f32.gmra.mrb[0].mxu0 %v390
    %v392 = vpop.f32.mrb[0].mxu0
    %v393 = vadd.f32 %v212, %v392
    %v394 = vpop.f32.mrb[0].mxu0
    %395 = vmatprep.mubr.f32.mxu0 0.0
    %v396 = vand.u32 %v112, 4294901760
    %397 = vmatmul.mubr.f32.gmra.mrb[0].mxu0 %v396
    %v398 = vpop.f32.mrb[0].mxu0
    %v399 = vadd.f32 %v222, %v398
    %v400 = vpop.f32.mrb[0].mxu0
    %401 = vmatprep.mubr.f32.mxu0 0.0
    %v402 = vand.u32 %v115, 4294901760
    %403 = vmatmul.mubr.f32.gmra.mrb[0].mxu0 %v402
    %v404 = vpop.f32.mrb[0].mxu0
    %v405 = vadd.f32 %v232, %v404
    %v406 = vpop.f32.mrb[0].mxu0
    %407 = vmatprep.mubr.f32.mxu0 0.0
    %v408 = vand.u32 %v118, 4294901760
    %409 = vmatmul.mubr.f32.gmra.mrb[0].mxu0 %v408
    %v410 = vpop.f32.mrb[0].mxu0
    %v411 = vadd.f32 %v242, %v410
    %v412 = vpop.f32.mrb[0].mxu0
    %413 = vmatprep.mubr.f32.mxu0 0.0
    %v414 = vand.u32 %v121, 4294901760
    %415 = vmatmul.mubr.f32.gmra.mrb[0].mxu0 %v414
    %v416 = vpop.f32.mrb[0].mxu0
    %v417 = vadd.f32 %v252, %v416
    %v418 = vpop.f32.mrb[0].mxu0
    %419 = vmatprep.mubr.f32.mxu0 0.0
    %v420 = vand.u32 %v124, 4294901760
    %421 = vmatmul.mubr.f32.gmra.mrb[0].mxu0 %v420
    %v422 = vpop.f32.mrb[0].mxu0
    %v423 = vadd.f32 %v262, %v422
    %v424 = vpop.f32.mrb[0].mxu0
    %425 = vmatprep.mubr.f32.mxu0 0.0
    %v426 = vand.u32 %v127, 4294901760
    %427 = vmatmul.mubr.f32.gmra.mrb[0].mxu0 %v426
    %v428 = vpop.f32.mrb[0].mxu0
    %v429 = vadd.f32 %v272, %v428
    %v430 = vpop.f32.mrb[0].mxu0
    %431 = vmatprep.mubr.f32.mxu0 0.0
    %v432 = vand.u32 %v130, 4294901760
    %433 = vmatmul.mubr.f32.gmra.mrb[0].mxu0 %v432
    %v434 = vpop.f32.mrb[0].mxu0
    %v435 = vadd.f32 %v282, %v434
    %v436 = vpop.f32.mrb[0].mxu0
    %437 = vdwg.mxu0
    %438 = vmatprep.subr.mxu0 0.0
    %v439 = vand.u32 %v91, 4294901760
    %v440 = vsub.f32 %v91, %v439
    %441 = vmatpush1.msra.mxu0 %v440
    %442 = vmatprep.subr.mxu0 0.0
    %v443 = vand.u32 %v92, 4294901760
    %v444 = vsub.f32 %v92, %v443
    %445 = vmatpush1.msra.mxu0 %v444
    %446 = vmatprep.subr.mxu0 0.0
    %v447 = vand.u32 %v93, 4294901760
    %v448 = vsub.f32 %v93, %v447
    %449 = vmatpush1.msra.mxu0 %v448
    %450 = vmatprep.subr.mxu0 0.0
    %v451 = vand.u32 %v94, 4294901760
    %v452 = vsub.f32 %v94, %v451
    %453 = vmatpush1.msra.mxu0 %v452
    %454 = vmatprep.subr.mxu0 0.0
    %v455 = vand.u32 %v95, 4294901760
    %v456 = vsub.f32 %v95, %v455
    %457 = vmatpush1.msra.mxu0 %v456
    %458 = vmatprep.subr.mxu0 0.0
    %v459 = vand.u32 %v96, 4294901760
    %v460 = vsub.f32 %v96, %v459
    %461 = vmatpush1.msra.mxu0 %v460
    %462 = vmatprep.subr.mxu0 0.0
    %v463 = vand.u32 %v97, 4294901760
    %v464 = vsub.f32 %v97, %v463
    %465 = vmatpush1.msra.mxu0 %v464
    %466 = vmatprep.subr.mxu0 0.0
    %v467 = vand.u32 %v98, 4294901760
    %v468 = vsub.f32 %v98, %v467
    %469 = vmatpush1.msra.mxu0 %v468
    %470 = vmatprep.subr.mxu0 0.0
    %471 = vmatpush1.msra.mxu0 0.0
    %472 = vmatprep.subr.mxu0 0.0
    %473 = vmatpush1.msra.mxu0 0.0
    %474 = vmatprep.subr.mxu0 0.0
    %475 = vmatpush1.msra.mxu0 0.0
    %476 = vmatprep.subr.mxu0 0.0
    %477 = vmatpush1.msra.mxu0 0.0
    %478 = vmatprep.subr.mxu0 0.0
    %479 = vmatpush1.msra.mxu0 0.0
    %480 = vmatprep.subr.mxu0 0.0
    %481 = vmatpush1.msra.mxu0 0.0
    %482 = vmatprep.subr.mxu0 0.0
    %483 = vmatpush1.msra.mxu0 0.0
    %484 = vmatprep.subr.mxu0 0.0
    %485 = vmatpush1.msra.mxu0 0.0
    %486 = vmatprep.subr.mxu0 0.0
    %487 = vmatpush1.msra.mxu0 0.0
    %488 = vmatprep.subr.mxu0 0.0
    %489 = vmatpush1.msra.mxu0 0.0
    %490 = vmatprep.subr.mxu0 0.0
    %491 = vmatpush1.msra.mxu0 0.0
    %492 = vmatprep.subr.mxu0 0.0
    %493 = vmatpush1.msra.mxu0 0.0
    %494 = vmatprep.subr.mxu0 0.0
    %495 = vmatpush1.msra.mxu0 0.0
    %496 = vmatprep.subr.mxu0 0.0
    %497 = vmatpush1.msra.mxu0 0.0
    %498 = vmatprep.subr.mxu0 0.0
    %499 = vmatpush1.msra.mxu0 0.0
    %500 = vmatprep.subr.mxu0 0.0
    %501 = vmatpush1.msra.mxu0 0.0
    %502 = vmatprep.subr.mxu0 0.0
    %503 = vmatpush1.msra.mxu0 0.0
    %504 = vmatprep.subr.mxu0 0.0
    %505 = vmatpush1.msra.mxu0 0.0
    %506 = vmatprep.subr.mxu0 0.0
    %507 = vmatpush1.msra.mxu0 0.0
    %508 = vmatprep.subr.mxu0 0.0
    %509 = vmatpush1.msra.mxu0 0.0
    %510 = vmatprep.subr.mxu0 0.0
    %511 = vmatpush1.msra.mxu0 0.0
    %512 = vmatprep.subr.mxu0 0.0
    %513 = vmatpush1.msra.mxu0 0.0
    %514 = vmatprep.subr.mxu0 0.0
    %515 = vmatpush1.msra.mxu0 0.0
    %516 = vmatprep.subr.mxu0 0.0
    %517 = vmatpush1.msra.mxu0 0.0
    %518 = vmatprep.mubr.f32.mxu0 0.0
    %v519 = vand.u32 %v109, 4294901760
    %v520 = vsub.f32 %v109, %v519
    %521 = vmatmul.mubr.f32.gmra.mrb[0].mxu0 %v520
    %v522 = vpop.f32.mrb[0].mxu0
    %v523 = vadd.f32 %v393, %v522
    %v524 = vpop.f32.mrb[0].mxu0
    %525 = vmatprep.mubr.f32.mxu0 0.0
    %v526 = vand.u32 %v112, 4294901760
    %v527 = vsub.f32 %v112, %v526
    %528 = vmatmul.mubr.f32.gmra.mrb[0].mxu0 %v527
    %v529 = vpop.f32.mrb[0].mxu0
    %v530 = vadd.f32 %v399, %v529
    %v531 = vpop.f32.mrb[0].mxu0
    %532 = vmatprep.mubr.f32.mxu0 0.0
    %v533 = vand.u32 %v115, 4294901760
    %v534 = vsub.f32 %v115, %v533
    %535 = vmatmul.mubr.f32.gmra.mrb[0].mxu0 %v534
    %v536 = vpop.f32.mrb[0].mxu0
    %v537 = vadd.f32 %v405, %v536
    %v538 = vpop.f32.mrb[0].mxu0
    %539 = vmatprep.mubr.f32.mxu0 0.0
    %v540 = vand.u32 %v118, 4294901760
    %v541 = vsub.f32 %v118, %v540
    %542 = vmatmul.mubr.f32.gmra.mrb[0].mxu0 %v541
    %v543 = vpop.f32.mrb[0].mxu0
    %v544 = vadd.f32 %v411, %v543
    %v545 = vpop.f32.mrb[0].mxu0
    %546 = vmatprep.mubr.f32.mxu0 0.0
    %v547 = vand.u32 %v121, 4294901760
    %v548 = vsub.f32 %v121, %v547
    %549 = vmatmul.mubr.f32.gmra.mrb[0].mxu0 %v548
    %v550 = vpop.f32.mrb[0].mxu0
    %v551 = vadd.f32 %v417, %v550
    %v552 = vpop.f32.mrb[0].mxu0
    %553 = vmatprep.mubr.f32.mxu0 0.0
    %v554 = vand.u32 %v124, 4294901760
    %v555 = vsub.f32 %v124, %v554
    %556 = vmatmul.mubr.f32.gmra.mrb[0].mxu0 %v555
    %v557 = vpop.f32.mrb[0].mxu0
    %v558 = vadd.f32 %v423, %v557
    %v559 = vpop.f32.mrb[0].mxu0
    %560 = vmatprep.mubr.f32.mxu0 0.0
    %v561 = vand.u32 %v127, 4294901760
    %v562 = vsub.f32 %v127, %v561
    %563 = vmatmul.mubr.f32.gmra.mrb[0].mxu0 %v562
    %v564 = vpop.f32.mrb[0].mxu0
    %v565 = vadd.f32 %v429, %v564
    %v566 = vpop.f32.mrb[0].mxu0
    %567 = vmatprep.mubr.f32.mxu0 0.0
    %v568 = vand.u32 %v130, 4294901760
    %v569 = vsub.f32 %v130, %v568
    %570 = vmatmul.mubr.f32.gmra.mrb[0].mxu0 %v569
    %v571 = vpop.f32.mrb[0].mxu0
    %v572 = vadd.f32 %v435, %v571
    %v573 = vpop.f32.mrb[0].mxu0
    %574 = vdwg.mxu0
    %575 = vmatprep.subr.mxu0 0.0
    %v576 = vand.u32 %v91, 4294901760
    %577 = vmatpush1.msra.mxu0 %v576
    %578 = vmatprep.subr.mxu0 0.0
    %v579 = vand.u32 %v92, 4294901760
    %580 = vmatpush1.msra.mxu0 %v579
    %581 = vmatprep.subr.mxu0 0.0
    %v582 = vand.u32 %v93, 4294901760
    %583 = vmatpush1.msra.mxu0 %v582
    %584 = vmatprep.subr.mxu0 0.0
    %v585 = vand.u32 %v94, 4294901760
    %586 = vmatpush1.msra.mxu0 %v585
    %587 = vmatprep.subr.mxu0 0.0
    %v588 = vand.u32 %v95, 4294901760
    %589 = vmatpush1.msra.mxu0 %v588
    %590 = vmatprep.subr.mxu0 0.0
    %v591 = vand.u32 %v96, 4294901760
    %592 = vmatpush1.msra.mxu0 %v591
    %593 = vmatprep.subr.mxu0 0.0
    %v594 = vand.u32 %v97, 4294901760
    %595 = vmatpush1.msra.mxu0 %v594
    %596 = vmatprep.subr.mxu0 0.0
    %v597 = vand.u32 %v98, 4294901760
    %598 = vmatpush1.msra.mxu0 %v597
    %599 = vmatprep.subr.mxu0 0.0
    %600 = vmatpush1.msra.mxu0 0.0
    %601 = vmatprep.subr.mxu0 0.0
    %602 = vmatpush1.msra.mxu0 0.0
    %603 = vmatprep.subr.mxu0 0.0
    %604 = vmatpush1.msra.mxu0 0.0
    %605 = vmatprep.subr.mxu0 0.0
    %606 = vmatpush1.msra.mxu0 0.0
    %607 = vmatprep.subr.mxu0 0.0
    %608 = vmatpush1.msra.mxu0 0.0
    %609 = vmatprep.subr.mxu0 0.0
    %610 = vmatpush1.msra.mxu0 0.0
    %611 = vmatprep.subr.mxu0 0.0
    %612 = vmatpush1.msra.mxu0 0.0
    %613 = vmatprep.subr.mxu0 0.0
    %614 = vmatpush1.msra.mxu0 0.0
    %615 = vmatprep.subr.mxu0 0.0
    %616 = vmatpush1.msra.mxu0 0.0
    %617 = vmatprep.subr.mxu0 0.0
    %618 = vmatpush1.msra.mxu0 0.0
    %619 = vmatprep.subr.mxu0 0.0
    %620 = vmatpush1.msra.mxu0 0.0
    %621 = vmatprep.subr.mxu0 0.0
    %622 = vmatpush1.msra.mxu0 0.0
    %623 = vmatprep.subr.mxu0 0.0
    %624 = vmatpush1.msra.mxu0 0.0
    %625 = vmatprep.subr.mxu0 0.0
    %626 = vmatpush1.msra.mxu0 0.0
    %627 = vmatprep.subr.mxu0 0.0
    %628 = vmatpush1.msra.mxu0 0.0
    %629 = vmatprep.subr.mxu0 0.0
    %630 = vmatpush1.msra.mxu0 0.0
    %631 = vmatprep.subr.mxu0 0.0
    %632 = vmatpush1.msra.mxu0 0.0
    %633 = vmatprep.subr.mxu0 0.0
    %634 = vmatpush1.msra.mxu0 0.0
    %635 = vmatprep.subr.mxu0 0.0
    %636 = vmatpush1.msra.mxu0 0.0
    %637 = vmatprep.subr.mxu0 0.0
    %638 = vmatpush1.msra.mxu0 0.0
    %639 = vmatprep.subr.mxu0 0.0
    %640 = vmatpush1.msra.mxu0 0.0
    %641 = vmatprep.subr.mxu0 0.0
    %642 = vmatpush1.msra.mxu0 0.0
    %643 = vmatprep.subr.mxu0 0.0
    %644 = vmatpush1.msra.mxu0 0.0
    %645 = vmatprep.subr.mxu0 0.0
    %646 = vmatpush1.msra.mxu0 0.0
    %647 = vmatprep.mubr.f32.mxu0 0.0
    %v648 = vand.u32 %v109, 4294901760
    %v649 = vsub.f32 %v109, %v648
    %v650 = vand.u32 %v649, 4294901760
    %651 = vmatmul.mubr.f32.gmra.mrb[0].mxu0 %v650
    %v652 = vpop.f32.mrb[0].mxu0
    %v653 = vadd.f32 %v523, %v652
    %v654 = vpop.f32.mrb[0].mxu0
    %655 = vmatprep.mubr.f32.mxu0 0.0
    %v656 = vand.u32 %v112, 4294901760
    %v657 = vsub.f32 %v112, %v656
    %v658 = vand.u32 %v657, 4294901760
    %659 = vmatmul.mubr.f32.gmra.mrb[0].mxu0 %v658
    %v660 = vpop.f32.mrb[0].mxu0
    %v661 = vadd.f32 %v530, %v660
    %v662 = vpop.f32.mrb[0].mxu0
    %663 = vmatprep.mubr.f32.mxu0 0.0
    %v664 = vand.u32 %v115, 4294901760
    %v665 = vsub.f32 %v115, %v664
    %v666 = vand.u32 %v665, 4294901760
    %667 = vmatmul.mubr.f32.gmra.mrb[0].mxu0 %v666
    %v668 = vpop.f32.mrb[0].mxu0
    %v669 = vadd.f32 %v537, %v668
    %v670 = vpop.f32.mrb[0].mxu0
    %671 = vmatprep.mubr.f32.mxu0 0.0
    %v672 = vand.u32 %v118, 4294901760
    %v673 = vsub.f32 %v118, %v672
    %v674 = vand.u32 %v673, 4294901760
    %675 = vmatmul.mubr.f32.gmra.mrb[0].mxu0 %v674
    %v676 = vpop.f32.mrb[0].mxu0
    %v677 = vadd.f32 %v544, %v676
    %v678 = vpop.f32.mrb[0].mxu0
    %679 = vmatprep.mubr.f32.mxu0 0.0
    %v680 = vand.u32 %v121, 4294901760
    %v681 = vsub.f32 %v121, %v680
    %v682 = vand.u32 %v681, 4294901760
    %683 = vmatmul.mubr.f32.gmra.mrb[0].mxu0 %v682
    %v684 = vpop.f32.mrb[0].mxu0
    %v685 = vadd.f32 %v551, %v684
    %v686 = vpop.f32.mrb[0].mxu0
    %687 = vmatprep.mubr.f32.mxu0 0.0
    %v688 = vand.u32 %v124, 4294901760
    %v689 = vsub.f32 %v124, %v688
    %v690 = vand.u32 %v689, 4294901760
    %691 = vmatmul.mubr.f32.gmra.mrb[0].mxu0 %v690
    %v692 = vpop.f32.mrb[0].mxu0
    %v693 = vadd.f32 %v558, %v692
    %v694 = vpop.f32.mrb[0].mxu0
    %695 = vmatprep.mubr.f32.mxu0 0.0
    %v696 = vand.u32 %v127, 4294901760
    %v697 = vsub.f32 %v127, %v696
    %v698 = vand.u32 %v697, 4294901760
    %699 = vmatmul.mubr.f32.gmra.mrb[0].mxu0 %v698
    %v700 = vpop.f32.mrb[0].mxu0
    %v701 = vadd.f32 %v565, %v700
    %v702 = vpop.f32.mrb[0].mxu0
    %703 = vmatprep.mubr.f32.mxu0 0.0
    %v704 = vand.u32 %v130, 4294901760
    %v705 = vsub.f32 %v130, %v704
    %v706 = vand.u32 %v705, 4294901760
    %707 = vmatmul.mubr.f32.gmra.mrb[0].mxu0 %v706
    %v708 = vpop.f32.mrb[0].mxu0
    %v709 = vadd.f32 %v572, %v708
    %v710 = vpop.f32.mrb[0].mxu0
    %711 = vdwg.mxu0
    %712 = vmatprep.subr.mxu0 0.0
    %v713 = vand.u32 %v91, 4294901760
    %v714 = vsub.f32 %v91, %v713
    %v715 = vand.u32 %v714, 4294901760
    %716 = vmatpush1.msra.mxu0 %v715
    %717 = vmatprep.subr.mxu0 0.0
    %v718 = vand.u32 %v92, 4294901760
    %v719 = vsub.f32 %v92, %v718
    %v720 = vand.u32 %v719, 4294901760
    %721 = vmatpush1.msra.mxu0 %v720
    %722 = vmatprep.subr.mxu0 0.0
    %v723 = vand.u32 %v93, 4294901760
    %v724 = vsub.f32 %v93, %v723
    %v725 = vand.u32 %v724, 4294901760
    %726 = vmatpush1.msra.mxu0 %v725
    %727 = vmatprep.subr.mxu0 0.0
    %v728 = vand.u32 %v94, 4294901760
    %v729 = vsub.f32 %v94, %v728
    %v730 = vand.u32 %v729, 4294901760
    %731 = vmatpush1.msra.mxu0 %v730
    %732 = vmatprep.subr.mxu0 0.0
    %v733 = vand.u32 %v95, 4294901760
    %v734 = vsub.f32 %v95, %v733
    %v735 = vand.u32 %v734, 4294901760
    %736 = vmatpush1.msra.mxu0 %v735
    %737 = vmatprep.subr.mxu0 0.0
    %v738 = vand.u32 %v96, 4294901760
    %v739 = vsub.f32 %v96, %v738
    %v740 = vand.u32 %v739, 4294901760
    %741 = vmatpush1.msra.mxu0 %v740
    %742 = vmatprep.subr.mxu0 0.0
    %v743 = vand.u32 %v97, 4294901760
    %v744 = vsub.f32 %v97, %v743
    %v745 = vand.u32 %v744, 4294901760
    %746 = vmatpush1.msra.mxu0 %v745
    %747 = vmatprep.subr.mxu0 0.0
    %v748 = vand.u32 %v98, 4294901760
    %v749 = vsub.f32 %v98, %v748
    %v750 = vand.u32 %v749, 4294901760
    %751 = vmatpush1.msra.mxu0 %v750
    %752 = vmatprep.subr.mxu0 0.0
    %753 = vmatpush1.msra.mxu0 0.0
    %754 = vmatprep.subr.mxu0 0.0
    %755 = vmatpush1.msra.mxu0 0.0
    %756 = vmatprep.subr.mxu0 0.0
    %757 = vmatpush1.msra.mxu0 0.0
    %758 = vmatprep.subr.mxu0 0.0
    %759 = vmatpush1.msra.mxu0 0.0
    %760 = vmatprep.subr.mxu0 0.0
    %761 = vmatpush1.msra.mxu0 0.0
    %762 = vmatprep.subr.mxu0 0.0
    %763 = vmatpush1.msra.mxu0 0.0
    %764 = vmatprep.subr.mxu0 0.0
    %765 = vmatpush1.msra.mxu0 0.0
    %766 = vmatprep.subr.mxu0 0.0
    %767 = vmatpush1.msra.mxu0 0.0
    %768 = vmatprep.subr.mxu0 0.0
    %769 = vmatpush1.msra.mxu0 0.0
    %770 = vmatprep.subr.mxu0 0.0
    %771 = vmatpush1.msra.mxu0 0.0
    %772 = vmatprep.subr.mxu0 0.0
    %773 = vmatpush1.msra.mxu0 0.0
    %774 = vmatprep.subr.mxu0 0.0
    %775 = vmatpush1.msra.mxu0 0.0
    %776 = vmatprep.subr.mxu0 0.0
    %777 = vmatpush1.msra.mxu0 0.0
    %778 = vmatprep.subr.mxu0 0.0
    %779 = vmatpush1.msra.mxu0 0.0
    %780 = vmatprep.subr.mxu0 0.0
    %781 = vmatpush1.msra.mxu0 0.0
    %782 = vmatprep.subr.mxu0 0.0
    %783 = vmatpush1.msra.mxu0 0.0
    %784 = vmatprep.subr.mxu0 0.0
    %785 = vmatpush1.msra.mxu0 0.0
    %786 = vmatprep.subr.mxu0 0.0
    %787 = vmatpush1.msra.mxu0 0.0
    %788 = vmatprep.subr.mxu0 0.0
    %789 = vmatpush1.msra.mxu0 0.0
    %790 = vmatprep.subr.mxu0 0.0
    %791 = vmatpush1.msra.mxu0 0.0
    %792 = vmatprep.subr.mxu0 0.0
    %793 = vmatpush1.msra.mxu0 0.0
    %794 = vmatprep.subr.mxu0 0.0
    %795 = vmatpush1.msra.mxu0 0.0
    %796 = vmatprep.subr.mxu0 0.0
    %797 = vmatpush1.msra.mxu0 0.0
    %798 = vmatprep.subr.mxu0 0.0
    %799 = vmatpush1.msra.mxu0 0.0
    %800 = vmatprep.mubr.f32.mxu0 0.0
    %v801 = vand.u32 %v109, 4294901760
    %802 = vmatmul.mubr.f32.gmra.mrb[0].mxu0 %v801
    %v803 = vpop.f32.mrb[0].mxu0
    %v804 = vadd.f32 %v653, %v803
    %v805 = vpop.f32.mrb[0].mxu0
    %806 = vmatprep.mubr.f32.mxu0 0.0
    %v807 = vand.u32 %v112, 4294901760
    %808 = vmatmul.mubr.f32.gmra.mrb[0].mxu0 %v807
    %v809 = vpop.f32.mrb[0].mxu0
    %v810 = vadd.f32 %v661, %v809
    %v811 = vpop.f32.mrb[0].mxu0
    %812 = vmatprep.mubr.f32.mxu0 0.0
    %v813 = vand.u32 %v115, 4294901760
    %814 = vmatmul.mubr.f32.gmra.mrb[0].mxu0 %v813
    %v815 = vpop.f32.mrb[0].mxu0
    %v816 = vadd.f32 %v669, %v815
    %v817 = vpop.f32.mrb[0].mxu0
    %818 = vmatprep.mubr.f32.mxu0 0.0
    %v819 = vand.u32 %v118, 4294901760
    %820 = vmatmul.mubr.f32.gmra.mrb[0].mxu0 %v819
    %v821 = vpop.f32.mrb[0].mxu0
    %v822 = vadd.f32 %v677, %v821
    %v823 = vpop.f32.mrb[0].mxu0
    %824 = vmatprep.mubr.f32.mxu0 0.0
    %v825 = vand.u32 %v121, 4294901760
    %826 = vmatmul.mubr.f32.gmra.mrb[0].mxu0 %v825
    %v827 = vpop.f32.mrb[0].mxu0
    %v828 = vadd.f32 %v685, %v827
    %v829 = vpop.f32.mrb[0].mxu0
    %830 = vmatprep.mubr.f32.mxu0 0.0
    %v831 = vand.u32 %v124, 4294901760
    %832 = vmatmul.mubr.f32.gmra.mrb[0].mxu0 %v831
    %v833 = vpop.f32.mrb[0].mxu0
    %v834 = vadd.f32 %v693, %v833
    %v835 = vpop.f32.mrb[0].mxu0
    %836 = vmatprep.mubr.f32.mxu0 0.0
    %v837 = vand.u32 %v127, 4294901760
    %838 = vmatmul.mubr.f32.gmra.mrb[0].mxu0 %v837
    %v839 = vpop.f32.mrb[0].mxu0
    %v840 = vadd.f32 %v701, %v839
    %v841 = vpop.f32.mrb[0].mxu0
    %842 = vmatprep.mubr.f32.mxu0 0.0
    %v843 = vand.u32 %v130, 4294901760
    %844 = vmatmul.mubr.f32.gmra.mrb[0].mxu0 %v843
    %v845 = vpop.f32.mrb[0].mxu0
    %v846 = vadd.f32 %v709, %v845
    %v847 = vpop.f32.mrb[0].mxu0
    %848 = vdwg.mxu0
    %849 = vmatprep.subr.mxu0 0.0
    %v850 = vand.u32 %v91, 4294901760
    %851 = vmatpush1.msra.mxu0 %v850
    %852 = vmatprep.subr.mxu0 0.0
    %v853 = vand.u32 %v92, 4294901760
    %854 = vmatpush1.msra.mxu0 %v853
    %855 = vmatprep.subr.mxu0 0.0
    %v856 = vand.u32 %v93, 4294901760
    %857 = vmatpush1.msra.mxu0 %v856
    %858 = vmatprep.subr.mxu0 0.0
    %v859 = vand.u32 %v94, 4294901760
    %860 = vmatpush1.msra.mxu0 %v859
    %861 = vmatprep.subr.mxu0 0.0
    %v862 = vand.u32 %v95, 4294901760
    %863 = vmatpush1.msra.mxu0 %v862
    %864 = vmatprep.subr.mxu0 0.0
    %v865 = vand.u32 %v96, 4294901760
    %866 = vmatpush1.msra.mxu0 %v865
    %867 = vmatprep.subr.mxu0 0.0
    %v868 = vand.u32 %v97, 4294901760
    %869 = vmatpush1.msra.mxu0 %v868
    %870 = vmatprep.subr.mxu0 0.0
    %v871 = vand.u32 %v98, 4294901760
    %872 = vmatpush1.msra.mxu0 %v871
    %873 = vmatprep.subr.mxu0 0.0
    %874 = vmatpush1.msra.mxu0 0.0
    %875 = vmatprep.subr.mxu0 0.0
    %876 = vmatpush1.msra.mxu0 0.0
    %877 = vmatprep.subr.mxu0 0.0
    %878 = vmatpush1.msra.mxu0 0.0
    %879 = vmatprep.subr.mxu0 0.0
    %880 = vmatpush1.msra.mxu0 0.0
    %881 = vmatprep.subr.mxu0 0.0
    %882 = vmatpush1.msra.mxu0 0.0
    %883 = vmatprep.subr.mxu0 0.0
    %884 = vmatpush1.msra.mxu0 0.0
    %885 = vmatprep.subr.mxu0 0.0
    %886 = vmatpush1.msra.mxu0 0.0
    %887 = vmatprep.subr.mxu0 0.0
    %888 = vmatpush1.msra.mxu0 0.0
    %889 = vmatprep.subr.mxu0 0.0
    %890 = vmatpush1.msra.mxu0 0.0
    %891 = vmatprep.subr.mxu0 0.0
    %892 = vmatpush1.msra.mxu0 0.0
    %893 = vmatprep.subr.mxu0 0.0
    %894 = vmatpush1.msra.mxu0 0.0
    %895 = vmatprep.subr.mxu0 0.0
    %896 = vmatpush1.msra.mxu0 0.0
    %897 = vmatprep.subr.mxu0 0.0
    %898 = vmatpush1.msra.mxu0 0.0
    %899 = vmatprep.subr.mxu0 0.0
    %900 = vmatpush1.msra.mxu0 0.0
    %901 = vmatprep.subr.mxu0 0.0
    %902 = vmatpush1.msra.mxu0 0.0
    %903 = vmatprep.subr.mxu0 0.0
    %904 = vmatpush1.msra.mxu0 0.0
    %905 = vmatprep.subr.mxu0 0.0
    %906 = vmatpush1.msra.mxu0 0.0
    %907 = vmatprep.subr.mxu0 0.0
    %908 = vmatpush1.msra.mxu0 0.0
    %909 = vmatprep.subr.mxu0 0.0
    %910 = vmatpush1.msra.mxu0 0.0
    %911 = vmatprep.subr.mxu0 0.0
    %912 = vmatpush1.msra.mxu0 0.0
    %913 = vmatprep.subr.mxu0 0.0
    %914 = vmatpush1.msra.mxu0 0.0
    %915 = vmatprep.subr.mxu0 0.0
    %916 = vmatpush1.msra.mxu0 0.0
    %917 = vmatprep.subr.mxu0 0.0
    %918 = vmatpush1.msra.mxu0 0.0
    %919 = vmatprep.subr.mxu0 0.0
    %920 = vmatpush1.msra.mxu0 0.0
    %921 = vmatprep.mubr.f32.mxu0 0.0
    %v922 = vand.u32 %v109, 4294901760
    %923 = vmatmul.mubr.f32.gmra.mrb[0].mxu0 %v922
    %v924 = vpop.f32.mrb[0].mxu0
    %v925 = vadd.f32 %v804, %v924
    %v926 = vpop.f32.mrb[0].mxu0
    %927 = vmatprep.mubr.f32.mxu0 0.0
    %v928 = vand.u32 %v112, 4294901760
    %929 = vmatmul.mubr.f32.gmra.mrb[0].mxu0 %v928
    %v930 = vpop.f32.mrb[0].mxu0
    %v931 = vadd.f32 %v810, %v930
    %v932 = vpop.f32.mrb[0].mxu0
    %933 = vmatprep.mubr.f32.mxu0 0.0
    %v934 = vand.u32 %v115, 4294901760
    %935 = vmatmul.mubr.f32.gmra.mrb[0].mxu0 %v934
    %v936 = vpop.f32.mrb[0].mxu0
    %v937 = vadd.f32 %v816, %v936
    %v938 = vpop.f32.mrb[0].mxu0
    %939 = vmatprep.mubr.f32.mxu0 0.0
    %v940 = vand.u32 %v118, 4294901760
    %941 = vmatmul.mubr.f32.gmra.mrb[0].mxu0 %v940
    %v942 = vpop.f32.mrb[0].mxu0
    %v943 = vadd.f32 %v822, %v942
    %v944 = vpop.f32.mrb[0].mxu0
    %945 = vmatprep.mubr.f32.mxu0 0.0
    %v946 = vand.u32 %v121, 4294901760
    %947 = vmatmul.mubr.f32.gmra.mrb[0].mxu0 %v946
    %v948 = vpop.f32.mrb[0].mxu0
    %v949 = vadd.f32 %v828, %v948
    %v950 = vpop.f32.mrb[0].mxu0
    %951 = vmatprep.mubr.f32.mxu0 0.0
    %v952 = vand.u32 %v124, 4294901760
    %953 = vmatmul.mubr.f32.gmra.mrb[0].mxu0 %v952
    %v954 = vpop.f32.mrb[0].mxu0
    %v955 = vadd.f32 %v834, %v954
    %v956 = vpop.f32.mrb[0].mxu0
    %957 = vmatprep.mubr.f32.mxu0 0.0
    %v958 = vand.u32 %v127, 4294901760
    %959 = vmatmul.mubr.f32.gmra.mrb[0].mxu0 %v958
    %v960 = vpop.f32.mrb[0].mxu0
    %v961 = vadd.f32 %v840, %v960
    %v962 = vpop.f32.mrb[0].mxu0
    %963 = vmatprep.mubr.f32.mxu0 0.0
    %v964 = vand.u32 %v130, 4294901760
    %965 = vmatmul.mubr.f32.gmra.mrb[0].mxu0 %v964
    %v966 = vpop.f32.mrb[0].mxu0
    %v967 = vadd.f32 %v846, %v966
    %v968 = vpop.f32.mrb[0].mxu0
    %969 = vdwg.mxu0
    %v970 = vmul.f32 %v925, 0.25
    %v971 = vmul.f32 %v931, 0.25
    %v972 = vmul.f32 %v937, 0.25
    %v973 = vmul.f32 %v943, 0.25
    %v974 = vmul.f32 %v949, 0.25
    %v975 = vmul.f32 %v955, 0.25
    %v976 = vmul.f32 %v961, 0.25
    %v977 = vmul.f32 %v967, 0.25
    %v978 = vld [vmem:[#allocation4] sm:$0xff]
    %v979 = vld [vmem:[#allocation4 + $0x8] sm:$0xff]
    %v980 = vld [vmem:[#allocation4 + $0x10] sm:$0xff]
    %v981 = vld [vmem:[#allocation4 + $0x18] sm:$0xff]
    %v982 = vld [vmem:[#allocation4 + $0x20] sm:$0xff]
    %v983 = vld [vmem:[#allocation4 + $0x28] sm:$0xff]
    %v984 = vld [vmem:[#allocation4 + $0x30] sm:$0xff]
    %v985 = vld [vmem:[#allocation4 + $0x38] sm:$0xff]
    %v987 = vsel %vm107, %v978, 0
    %v990 = vsel %vm107, %v979, 0
    %v993 = vsel %vm107, %v980, 0
    %v996 = vsel %vm107, %v981, 0
    %v999 = vsel %vm107, %v982, 0
    %v1002 = vsel %vm107, %v983, 0
    %v1005 = vsel %vm107, %v984, 0
    %v1008 = vsel %vm107, %v985, 0
    %1010 = vmatprep.subr.mxu0 0.0
    %v1011 = vand.u32 %v91, 4294901760
    %1012 = vmatpush1.msra.mxu0 %v1011
    %1013 = vmatprep.subr.mxu0 0.0
    %v1014 = vand.u32 %v92, 4294901760
    %1015 = vmatpush1.msra.mxu0 %v1014
    %1016 = vmatprep.subr.mxu0 0.0
    %v1017 = vand.u32 %v93, 4294901760
    %1018 = vmatpush1.msra.mxu0 %v1017
    %1019 = vmatprep.subr.mxu0 0.0
    %v1020 = vand.u32 %v94, 4294901760
    %1021 = vmatpush1.msra.mxu0 %v1020
    %1022 = vmatprep.subr.mxu0 0.0
    %v1023 = vand.u32 %v95, 4294901760
    %1024 = vmatpush1.msra.mxu0 %v1023
    %1025 = vmatprep.subr.mxu0 0.0
    %v1026 = vand.u32 %v96, 4294901760
    %1027 = vmatpush1.msra.mxu0 %v1026
    %1028 = vmatprep.subr.mxu0 0.0
    %v1029 = vand.u32 %v97, 4294901760
    %1030 = vmatpush1.msra.mxu0 %v1029
    %1031 = vmatprep.subr.mxu0 0.0
    %v1032 = vand.u32 %v98, 4294901760
    %1033 = vmatpush1.msra.mxu0 %v1032
    %1034 = vmatprep.subr.mxu0 0.0
    %1035 = vmatpush1.msra.mxu0 0.0
    %1036 = vmatprep.subr.mxu0 0.0
    %1037 = vmatpush1.msra.mxu0 0.0
    %1038 = vmatprep.subr.mxu0 0.0
    %1039 = vmatpush1.msra.mxu0 0.0
    %1040 = vmatprep.subr.mxu0 0.0
    %1041 = vmatpush1.msra.mxu0 0.0
    %1042 = vmatprep.subr.mxu0 0.0
    %1043 = vmatpush1.msra.mxu0 0.0
    %1044 = vmatprep.subr.mxu0 0.0
    %1045 = vmatpush1.msra.mxu0 0.0
    %1046 = vmatprep.subr.mxu0 0.0
    %1047 = vmatpush1.msra.mxu0 0.0
    %1048 = vmatprep.subr.mxu0 0.0
    %1049 = vmatpush1.msra.mxu0 0.0
    %1050 = vmatprep.subr.mxu0 0.0
    %1051 = vmatpush1.msra.mxu0 0.0
    %1052 = vmatprep.subr.mxu0 0.0
    %1053 = vmatpush1.msra.mxu0 0.0
    %1054 = vmatprep.subr.mxu0 0.0
    %1055 = vmatpush1.msra.mxu0 0.0
    %1056 = vmatprep.subr.mxu0 0.0
    %1057 = vmatpush1.msra.mxu0 0.0
    %1058 = vmatprep.subr.mxu0 0.0
    %1059 = vmatpush1.msra.mxu0 0.0
    %1060 = vmatprep.subr.mxu0 0.0
    %1061 = vmatpush1.msra.mxu0 0.0
    %1062 = vmatprep.subr.mxu0 0.0
    %1063 = vmatpush1.msra.mxu0 0.0
    %1064 = vmatprep.subr.mxu0 0.0
    %1065 = vmatpush1.msra.mxu0 0.0
    %1066 = vmatprep.subr.mxu0 0.0
    %1067 = vmatpush1.msra.mxu0 0.0
    %1068 = vmatprep.subr.mxu0 0.0
    %1069 = vmatpush1.msra.mxu0 0.0
    %1070 = vmatprep.subr.mxu0 0.0
    %1071 = vmatpush1.msra.mxu0 0.0
    %1072 = vmatprep.subr.mxu0 0.0
    %1073 = vmatpush1.msra.mxu0 0.0
    %1074 = vmatprep.subr.mxu0 0.0
    %1075 = vmatpush1.msra.mxu0 0.0
    %1076 = vmatprep.subr.mxu0 0.0
    %1077 = vmatpush1.msra.mxu0 0.0
    %1078 = vmatprep.subr.mxu0 0.0
    %1079 = vmatpush1.msra.mxu0 0.0
    %1080 = vmatprep.subr.mxu0 0.0
    %1081 = vmatpush1.msra.mxu0 0.0
    %1082 = vmatprep.mubr.f32.mxu0 0.0
    %v1083 = vand.u32 %v987, 4294901760
    %v1084 = vsub.f32 %v987, %v1083
    %v1085 = vand.u32 %v1084, 4294901760
    %v1086 = vsub.f32 %v1084, %v1085
    %v1087 = vand.u32 %v1086, 4294901760
    %1088 = vmatmul.mubr.f32.gmra.mrb[0].mxu0 %v1087
    %v1089 = vpop.f32.mrb[0].mxu0
    %v1090 = vadd.f32 0.0, %v1089
    %v1091 = vpop.f32.mrb[0].mxu0
    %1092 = vmatprep.mubr.f32.mxu0 0.0
    %v1093 = vand.u32 %v990, 4294901760
    %v1094 = vsub.f32 %v990, %v1093
    %v1095 = vand.u32 %v1094, 4294901760
    %v1096 = vsub.f32 %v1094, %v1095
    %v1097 = vand.u32 %v1096, 4294901760
    %1098 = vmatmul.mubr.f32.gmra.mrb[0].mxu0 %v1097
    %v1099 = vpop.f32.mrb[0].mxu0
    %v1100 = vadd.f32 0.0, %v1099
    %v1101 = vpop.f32.mrb[0].mxu0
    %1102 = vmatprep.mubr.f32.mxu0 0.0
    %v1103 = vand.u32 %v993, 4294901760
    %v1104 = vsub.f32 %v993, %v1103
    %v1105 = vand.u32 %v1104, 4294901760
    %v1106 = vsub.f32 %v1104, %v1105
    %v1107 = vand.u32 %v1106, 4294901760
    %1108 = vmatmul.mubr.f32.gmra.mrb[0].mxu0 %v1107
    %v1109 = vpop.f32.mrb[0].mxu0
    %v1110 = vadd.f32 0.0, %v1109
    %v1111 = vpop.f32.mrb[0].mxu0
    %1112 = vmatprep.mubr.f32.mxu0 0.0
    %v1113 = vand.u32 %v996, 4294901760
    %v1114 = vsub.f32 %v996, %v1113
    %v1115 = vand.u32 %v1114, 4294901760
    %v1116 = vsub.f32 %v1114, %v1115
    %v1117 = vand.u32 %v1116, 4294901760
    %1118 = vmatmul.mubr.f32.gmra.mrb[0].mxu0 %v1117
    %v1119 = vpop.f32.mrb[0].mxu0
    %v1120 = vadd.f32 0.0, %v1119
    %v1121 = vpop.f32.mrb[0].mxu0
    %1122 = vmatprep.mubr.f32.mxu0 0.0
    %v1123 = vand.u32 %v999, 4294901760
    %v1124 = vsub.f32 %v999, %v1123
    %v1125 = vand.u32 %v1124, 4294901760
    %v1126 = vsub.f32 %v1124, %v1125
    %v1127 = vand.u32 %v1126, 4294901760
    %1128 = vmatmul.mubr.f32.gmra.mrb[0].mxu0 %v1127
    %v1129 = vpop.f32.mrb[0].mxu0
    %v1130 = vadd.f32 0.0, %v1129
    %v1131 = vpop.f32.mrb[0].mxu0
    %1132 = vmatprep.mubr.f32.mxu0 0.0
    %v1133 = vand.u32 %v1002, 4294901760
    %v1134 = vsub.f32 %v1002, %v1133
    %v1135 = vand.u32 %v1134, 4294901760
    %v1136 = vsub.f32 %v1134, %v1135
    %v1137 = vand.u32 %v1136, 4294901760
    %1138 = vmatmul.mubr.f32.gmra.mrb[0].mxu0 %v1137
    %v1139 = vpop.f32.mrb[0].mxu0
    %v1140 = vadd.f32 0.0, %v1139
    %v1141 = vpop.f32.mrb[0].mxu0
    %1142 = vmatprep.mubr.f32.mxu0 0.0
    %v1143 = vand.u32 %v1005, 4294901760
    %v1144 = vsub.f32 %v1005, %v1143
    %v1145 = vand.u32 %v1144, 4294901760
    %v1146 = vsub.f32 %v1144, %v1145
    %v1147 = vand.u32 %v1146, 4294901760
    %1148 = vmatmul.mubr.f32.gmra.mrb[0].mxu0 %v1147
    %v1149 = vpop.f32.mrb[0].mxu0
    %v1150 = vadd.f32 0.0, %v1149
    %v1151 = vpop.f32.mrb[0].mxu0
    %1152 = vmatprep.mubr.f32.mxu0 0.0
    %v1153 = vand.u32 %v1008, 4294901760
    %v1154 = vsub.f32 %v1008, %v1153
    %v1155 = vand.u32 %v1154, 4294901760
    %v1156 = vsub.f32 %v1154, %v1155
    %v1157 = vand.u32 %v1156, 4294901760
    %1158 = vmatmul.mubr.f32.gmra.mrb[0].mxu0 %v1157
    %v1159 = vpop.f32.mrb[0].mxu0
    %v1160 = vadd.f32 0.0, %v1159
    %v1161 = vpop.f32.mrb[0].mxu0
    %1162 = vdwg.mxu0
    %1163 = vmatprep.subr.mxu0 0.0
    %v1164 = vand.u32 %v91, 4294901760
    %v1165 = vsub.f32 %v91, %v1164
    %v1166 = vand.u32 %v1165, 4294901760
    %v1167 = vsub.f32 %v1165, %v1166
    %v1168 = vand.u32 %v1167, 4294901760
    %1169 = vmatpush1.msra.mxu0 %v1168
    %1170 = vmatprep.subr.mxu0 0.0
    %v1171 = vand.u32 %v92, 4294901760
    %v1172 = vsub.f32 %v92, %v1171
    %v1173 = vand.u32 %v1172, 4294901760
    %v1174 = vsub.f32 %v1172, %v1173
    %v1175 = vand.u32 %v1174, 4294901760
    %1176 = vmatpush1.msra.mxu0 %v1175
    %1177 = vmatprep.subr.mxu0 0.0
    %v1178 = vand.u32 %v93, 4294901760
    %v1179 = vsub.f32 %v93, %v1178
    %v1180 = vand.u32 %v1179, 4294901760
    %v1181 = vsub.f32 %v1179, %v1180
    %v1182 = vand.u32 %v1181, 4294901760
    %1183 = vmatpush1.msra.mxu0 %v1182
    %1184 = vmatprep.subr.mxu0 0.0
    %v1185 = vand.u32 %v94, 4294901760
    %v1186 = vsub.f32 %v94, %v1185
    %v1187 = vand.u32 %v1186, 4294901760
    %v1188 = vsub.f32 %v1186, %v1187
    %v1189 = vand.u32 %v1188, 4294901760
    %1190 = vmatpush1.msra.mxu0 %v1189
    %1191 = vmatprep.subr.mxu0 0.0
    %v1192 = vand.u32 %v95, 4294901760
    %v1193 = vsub.f32 %v95, %v1192
    %v1194 = vand.u32 %v1193, 4294901760
    %v1195 = vsub.f32 %v1193, %v1194
    %v1196 = vand.u32 %v1195, 4294901760
    %1197 = vmatpush1.msra.mxu0 %v1196
    %1198 = vmatprep.subr.mxu0 0.0
    %v1199 = vand.u32 %v96, 4294901760
    %v1200 = vsub.f32 %v96, %v1199
    %v1201 = vand.u32 %v1200, 4294901760
    %v1202 = vsub.f32 %v1200, %v1201
    %v1203 = vand.u32 %v1202, 4294901760
    %1204 = vmatpush1.msra.mxu0 %v1203
    %1205 = vmatprep.subr.mxu0 0.0
    %v1206 = vand.u32 %v97, 4294901760
    %v1207 = vsub.f32 %v97, %v1206
    %v1208 = vand.u32 %v1207, 4294901760
    %v1209 = vsub.f32 %v1207, %v1208
    %v1210 = vand.u32 %v1209, 4294901760
    %1211 = vmatpush1.msra.mxu0 %v1210
    %1212 = vmatprep.subr.mxu0 0.0
    %v1213 = vand.u32 %v98, 4294901760
    %v1214 = vsub.f32 %v98, %v1213
    %v1215 = vand.u32 %v1214, 4294901760
    %v1216 = vsub.f32 %v1214, %v1215
    %v1217 = vand.u32 %v1216, 4294901760
    %1218 = vmatpush1.msra.mxu0 %v1217
    %1219 = vmatprep.subr.mxu0 0.0
    %1220 = vmatpush1.msra.mxu0 0.0
    %1221 = vmatprep.subr.mxu0 0.0
    %1222 = vmatpush1.msra.mxu0 0.0
    %1223 = vmatprep.subr.mxu0 0.0
    %1224 = vmatpush1.msra.mxu0 0.0
    %1225 = vmatprep.subr.mxu0 0.0
    %1226 = vmatpush1.msra.mxu0 0.0
    %1227 = vmatprep.subr.mxu0 0.0
    %1228 = vmatpush1.msra.mxu0 0.0
    %1229 = vmatprep.subr.mxu0 0.0
    %1230 = vmatpush1.msra.mxu0 0.0
    %1231 = vmatprep.subr.mxu0 0.0
    %1232 = vmatpush1.msra.mxu0 0.0
    %1233 = vmatprep.subr.mxu0 0.0
    %1234 = vmatpush1.msra.mxu0 0.0
    %1235 = vmatprep.subr.mxu0 0.0
    %1236 = vmatpush1.msra.mxu0 0.0
    %1237 = vmatprep.subr.mxu0 0.0
    %1238 = vmatpush1.msra.mxu0 0.0
    %1239 = vmatprep.subr.mxu0 0.0
    %1240 = vmatpush1.msra.mxu0 0.0
    %1241 = vmatprep.subr.mxu0 0.0
    %1242 = vmatpush1.msra.mxu0 0.0
    %1243 = vmatprep.subr.mxu0 0.0
    %1244 = vmatpush1.msra.mxu0 0.0
    %1245 = vmatprep.subr.mxu0 0.0
    %1246 = vmatpush1.msra.mxu0 0.0
    %1247 = vmatprep.subr.mxu0 0.0
    %1248 = vmatpush1.msra.mxu0 0.0
    %1249 = vmatprep.subr.mxu0 0.0
    %1250 = vmatpush1.msra.mxu0 0.0
    %1251 = vmatprep.subr.mxu0 0.0
    %1252 = vmatpush1.msra.mxu0 0.0
    %1253 = vmatprep.subr.mxu0 0.0
    %1254 = vmatpush1.msra.mxu0 0.0
    %1255 = vmatprep.subr.mxu0 0.0
    %1256 = vmatpush1.msra.mxu0 0.0
    %1257 = vmatprep.subr.mxu0 0.0
    %1258 = vmatpush1.msra.mxu0 0.0
    %1259 = vmatprep.subr.mxu0 0.0
    %1260 = vmatpush1.msra.mxu0 0.0
    %1261 = vmatprep.subr.mxu0 0.0
    %1262 = vmatpush1.msra.mxu0 0.0
    %1263 = vmatprep.subr.mxu0 0.0
    %1264 = vmatpush1.msra.mxu0 0.0
    %1265 = vmatprep.subr.mxu0 0.0
    %1266 = vmatpush1.msra.mxu0 0.0
    %1267 = vmatprep.mubr.f32.mxu0 0.0
    %v1268 = vand.u32 %v987, 4294901760
    %1269 = vmatmul.mubr.f32.gmra.mrb[0].mxu0 %v1268
    %v1270 = vpop.f32.mrb[0].mxu0
    %v1271 = vadd.f32 %v1090, %v1270
    %v1272 = vpop.f32.mrb[0].mxu0
    %1273 = vmatprep.mubr.f32.mxu0 0.0
    %v1274 = vand.u32 %v990, 4294901760
    %1275 = vmatmul.mubr.f32.gmra.mrb[0].mxu0 %v1274
    %v1276 = vpop.f32.mrb[0].mxu0
    %v1277 = vadd.f32 %v1100, %v1276
    %v1278 = vpop.f32.mrb[0].mxu0
    %1279 = vmatprep.mubr.f32.mxu0 0.0
    %v1280 = vand.u32 %v993, 4294901760
    %1281 = vmatmul.mubr.f32.gmra.mrb[0].mxu0 %v1280
    %v1282 = vpop.f32.mrb[0].mxu0
    %v1283 = vadd.f32 %v1110, %v1282
    %v1284 = vpop.f32.mrb[0].mxu0
    %1285 = vmatprep.mubr.f32.mxu0 0.0
    %v1286 = vand.u32 %v996, 4294901760
    %1287 = vmatmul.mubr.f32.gmra.mrb[0].mxu0 %v1286
    %v1288 = vpop.f32.mrb[0].mxu0
    %v1289 = vadd.f32 %v1120, %v1288
    %v1290 = vpop.f32.mrb[0].mxu0
    %1291 = vmatprep.mubr.f32.mxu0 0.0
    %v1292 = vand.u32 %v999, 4294901760
    %1293 = vmatmul.mubr.f32.gmra.mrb[0].mxu0 %v1292
    %v1294 = vpop.f32.mrb[0].mxu0
    %v1295 = vadd.f32 %v1130, %v1294
    %v1296 = vpop.f32.mrb[0].mxu0
    %1297 = vmatprep.mubr.f32.mxu0 0.0
    %v1298 = vand.u32 %v1002, 4294901760
    %1299 = vmatmul.mubr.f32.gmra.mrb[0].mxu0 %v1298
    %v1300 = vpop.f32.mrb[0].mxu0
    %v1301 = vadd.f32 %v1140, %v1300
    %v1302 = vpop.f32.mrb[0].mxu0
    %1303 = vmatprep.mubr.f32.mxu0 0.0
    %v1304 = vand.u32 %v1005, 4294901760
    %1305 = vmatmul.mubr.f32.gmra.mrb[0].mxu0 %v1304
    %v1306 = vpop.f32.mrb[0].mxu0
    %v1307 = vadd.f32 %v1150, %v1306
    %v1308 = vpop.f32.mrb[0].mxu0
    %1309 = vmatprep.mubr.f32.mxu0 0.0
    %v1310 = vand.u32 %v1008, 4294901760
    %1311 = vmatmul.mubr.f32.gmra.mrb[0].mxu0 %v1310
    %v1312 = vpop.f32.mrb[0].mxu0
    %v1313 = vadd.f32 %v1160, %v1312
    %v1314 = vpop.f32.mrb[0].mxu0
    %1315 = vdwg.mxu0
    %1316 = vmatprep.subr.mxu0 0.0
    %v1317 = vand.u32 %v91, 4294901760
    %v1318 = vsub.f32 %v91, %v1317
    %1319 = vmatpush1.msra.mxu0 %v1318
    %1320 = vmatprep.subr.mxu0 0.0
    %v1321 = vand.u32 %v92, 4294901760
    %v1322 = vsub.f32 %v92, %v1321
    %1323 = vmatpush1.msra.mxu0 %v1322
    %1324 = vmatprep.subr.mxu0 0.0
    %v1325 = vand.u32 %v93, 4294901760
    %v1326 = vsub.f32 %v93, %v1325
    %1327 = vmatpush1.msra.mxu0 %v1326
    %1328 = vmatprep.subr.mxu0 0.0
    %v1329 = vand.u32 %v94, 4294901760
    %v1330 = vsub.f32 %v94, %v1329
    %1331 = vmatpush1.msra.mxu0 %v1330
    %1332 = vmatprep.subr.mxu0 0.0
    %v1333 = vand.u32 %v95, 4294901760
    %v1334 = vsub.f32 %v95, %v1333
    %1335 = vmatpush1.msra.mxu0 %v1334
    %1336 = vmatprep.subr.mxu0 0.0
    %v1337 = vand.u32 %v96, 4294901760
    %v1338 = vsub.f32 %v96, %v1337
    %1339 = vmatpush1.msra.mxu0 %v1338
    %1340 = vmatprep.subr.mxu0 0.0
    %v1341 = vand.u32 %v97, 4294901760
    %v1342 = vsub.f32 %v97, %v1341
    %1343 = vmatpush1.msra.mxu0 %v1342
    %1344 = vmatprep.subr.mxu0 0.0
    %v1345 = vand.u32 %v98, 4294901760
    %v1346 = vsub.f32 %v98, %v1345
    %1347 = vmatpush1.msra.mxu0 %v1346
    %1348 = vmatprep.subr.mxu0 0.0
    %1349 = vmatpush1.msra.mxu0 0.0
    %1350 = vmatprep.subr.mxu0 0.0
    %1351 = vmatpush1.msra.mxu0 0.0
    %1352 = vmatprep.subr.mxu0 0.0
    %1353 = vmatpush1.msra.mxu0 0.0
    %1354 = vmatprep.subr.mxu0 0.0
    %1355 = vmatpush1.msra.mxu0 0.0
    %1356 = vmatprep.subr.mxu0 0.0
    %1357 = vmatpush1.msra.mxu0 0.0
    %1358 = vmatprep.subr.mxu0 0.0
    %1359 = vmatpush1.msra.mxu0 0.0
    %1360 = vmatprep.subr.mxu0 0.0
    %1361 = vmatpush1.msra.mxu0 0.0
    %1362 = vmatprep.subr.mxu0 0.0
    %1363 = vmatpush1.msra.mxu0 0.0
    %1364 = vmatprep.subr.mxu0 0.0
    %1365 = vmatpush1.msra.mxu0 0.0
    %1366 = vmatprep.subr.mxu0 0.0
    %1367 = vmatpush1.msra.mxu0 0.0
    %1368 = vmatprep.subr.mxu0 0.0
    %1369 = vmatpush1.msra.mxu0 0.0
    %1370 = vmatprep.subr.mxu0 0.0
    %1371 = vmatpush1.msra.mxu0 0.0
    %1372 = vmatprep.subr.mxu0 0.0
    %1373 = vmatpush1.msra.mxu0 0.0
    %1374 = vmatprep.subr.mxu0 0.0
    %1375 = vmatpush1.msra.mxu0 0.0
    %1376 = vmatprep.subr.mxu0 0.0
    %1377 = vmatpush1.msra.mxu0 0.0
    %1378 = vmatprep.subr.mxu0 0.0
    %1379 = vmatpush1.msra.mxu0 0.0
    %1380 = vmatprep.subr.mxu0 0.0
    %1381 = vmatpush1.msra.mxu0 0.0
    %1382 = vmatprep.subr.mxu0 0.0
    %1383 = vmatpush1.msra.mxu0 0.0
    %1384 = vmatprep.subr.mxu0 0.0
    %1385 = vmatpush1.msra.mxu0 0.0
    %1386 = vmatprep.subr.mxu0 0.0
    %1387 = vmatpush1.msra.mxu0 0.0
    %1388 = vmatprep.subr.mxu0 0.0
    %1389 = vmatpush1.msra.mxu0 0.0
    %1390 = vmatprep.subr.mxu0 0.0
    %1391 = vmatpush1.msra.mxu0 0.0
    %1392 = vmatprep.subr.mxu0 0.0
    %1393 = vmatpush1.msra.mxu0 0.0
    %1394 = vmatprep.subr.mxu0 0.0
    %1395 = vmatpush1.msra.mxu0 0.0
    %1396 = vmatprep.mubr.f32.mxu0 0.0
    %v1397 = vand.u32 %v987, 4294901760
    %v1398 = vsub.f32 %v987, %v1397
    %1399 = vmatmul.mubr.f32.gmra.mrb[0].mxu0 %v1398
    %v1400 = vpop.f32.mrb[0].mxu0
    %v1401 = vadd.f32 %v1271, %v1400
    %v1402 = vpop.f32.mrb[0].mxu0
    %1403 = vmatprep.mubr.f32.mxu0 0.0
    %v1404 = vand.u32 %v990, 4294901760
    %v1405 = vsub.f32 %v990, %v1404
    %1406 = vmatmul.mubr.f32.gmra.mrb[0].mxu0 %v1405
    %v1407 = vpop.f32.mrb[0].mxu0
    %v1408 = vadd.f32 %v1277, %v1407
    %v1409 = vpop.f32.mrb[0].mxu0
    %1410 = vmatprep.mubr.f32.mxu0 0.0
    %v1411 = vand.u32 %v993, 4294901760
    %v1412 = vsub.f32 %v993, %v1411
    %1413 = vmatmul.mubr.f32.gmra.mrb[0].mxu0 %v1412
    %v1414 = vpop.f32.mrb[0].mxu0
    %v1415 = vadd.f32 %v1283, %v1414
    %v1416 = vpop.f32.mrb[0].mxu0
    %1417 = vmatprep.mubr.f32.mxu0 0.0
    %v1418 = vand.u32 %v996, 4294901760
    %v1419 = vsub.f32 %v996, %v1418
    %1420 = vmatmul.mubr.f32.gmra.mrb[0].mxu0 %v1419
    %v1421 = vpop.f32.mrb[0].mxu0
    %v1422 = vadd.f32 %v1289, %v1421
    %v1423 = vpop.f32.mrb[0].mxu0
    %1424 = vmatprep.mubr.f32.mxu0 0.0
    %v1425 = vand.u32 %v999, 4294901760
    %v1426 = vsub.f32 %v999, %v1425
    %1427 = vmatmul.mubr.f32.gmra.mrb[0].mxu0 %v1426
    %v1428 = vpop.f32.mrb[0].mxu0
    %v1429 = vadd.f32 %v1295, %v1428
    %v1430 = vpop.f32.mrb[0].mxu0
    %1431 = vmatprep.mubr.f32.mxu0 0.0
    %v1432 = vand.u32 %v1002, 4294901760
    %v1433 = vsub.f32 %v1002, %v1432
    %1434 = vmatmul.mubr.f32.gmra.mrb[0].mxu0 %v1433
    %v1435 = vpop.f32.mrb[0].mxu0
    %v1436 = vadd.f32 %v1301, %v1435
    %v1437 = vpop.f32.mrb[0].mxu0
    %1438 = vmatprep.mubr.f32.mxu0 0.0
    %v1439 = vand.u32 %v1005, 4294901760
    %v1440 = vsub.f32 %v1005, %v1439
    %1441 = vmatmul.mubr.f32.gmra.mrb[0].mxu0 %v1440
    %v1442 = vpop.f32.mrb[0].mxu0
    %v1443 = vadd.f32 %v1307, %v1442
    %v1444 = vpop.f32.mrb[0].mxu0
    %1445 = vmatprep.mubr.f32.mxu0 0.0
    %v1446 = vand.u32 %v1008, 4294901760
    %v1447 = vsub.f32 %v1008, %v1446
    %1448 = vmatmul.mubr.f32.gmra.mrb[0].mxu0 %v1447
    %v1449 = vpop.f32.mrb[0].mxu0
    %v1450 = vadd.f32 %v1313, %v1449
    %v1451 = vpop.f32.mrb[0].mxu0
    %1452 = vdwg.mxu0
    %1453 = vmatprep.subr.mxu0 0.0
    %v1454 = vand.u32 %v91, 4294901760
    %1455 = vmatpush1.msra.mxu0 %v1454
    %1456 = vmatprep.subr.mxu0 0.0
    %v1457 = vand.u32 %v92, 4294901760
    %1458 = vmatpush1.msra.mxu0 %v1457
    %1459 = vmatprep.subr.mxu0 0.0
    %v1460 = vand.u32 %v93, 4294901760
    %1461 = vmatpush1.msra.mxu0 %v1460
    %1462 = vmatprep.subr.mxu0 0.0
    %v1463 = vand.u32 %v94, 4294901760
    %1464 = vmatpush1.msra.mxu0 %v1463
    %1465 = vmatprep.subr.mxu0 0.0
    %v1466 = vand.u32 %v95, 4294901760
    %1467 = vmatpush1.msra.mxu0 %v1466
    %1468 = vmatprep.subr.mxu0 0.0
    %v1469 = vand.u32 %v96, 4294901760
    %1470 = vmatpush1.msra.mxu0 %v1469
    %1471 = vmatprep.subr.mxu0 0.0
    %v1472 = vand.u32 %v97, 4294901760
    %1473 = vmatpush1.msra.mxu0 %v1472
    %1474 = vmatprep.subr.mxu0 0.0
    %v1475 = vand.u32 %v98, 4294901760
    %1476 = vmatpush1.msra.mxu0 %v1475
    %1477 = vmatprep.subr.mxu0 0.0
    %1478 = vmatpush1.msra.mxu0 0.0
    %1479 = vmatprep.subr.mxu0 0.0
    %1480 = vmatpush1.msra.mxu0 0.0
    %1481 = vmatprep.subr.mxu0 0.0
    %1482 = vmatpush1.msra.mxu0 0.0
    %1483 = vmatprep.subr.mxu0 0.0
    %1484 = vmatpush1.msra.mxu0 0.0
    %1485 = vmatprep.subr.mxu0 0.0
    %1486 = vmatpush1.msra.mxu0 0.0
    %1487 = vmatprep.subr.mxu0 0.0
    %1488 = vmatpush1.msra.mxu0 0.0
    %1489 = vmatprep.subr.mxu0 0.0
    %1490 = vmatpush1.msra.mxu0 0.0
    %1491 = vmatprep.subr.mxu0 0.0
    %1492 = vmatpush1.msra.mxu0 0.0
    %1493 = vmatprep.subr.mxu0 0.0
    %1494 = vmatpush1.msra.mxu0 0.0
    %1495 = vmatprep.subr.mxu0 0.0
    %1496 = vmatpush1.msra.mxu0 0.0
    %1497 = vmatprep.subr.mxu0 0.0
    %1498 = vmatpush1.msra.mxu0 0.0
    %1499 = vmatprep.subr.mxu0 0.0
    %1500 = vmatpush1.msra.mxu0 0.0
    %1501 = vmatprep.subr.mxu0 0.0
    %1502 = vmatpush1.msra.mxu0 0.0
    %1503 = vmatprep.subr.mxu0 0.0
    %1504 = vmatpush1.msra.mxu0 0.0
    %1505 = vmatprep.subr.mxu0 0.0
    %1506 = vmatpush1.msra.mxu0 0.0
    %1507 = vmatprep.subr.mxu0 0.0
    %1508 = vmatpush1.msra.mxu0 0.0
    %1509 = vmatprep.subr.mxu0 0.0
    %1510 = vmatpush1.msra.mxu0 0.0
    %1511 = vmatprep.subr.mxu0 0.0
    %1512 = vmatpush1.msra.mxu0 0.0
    %1513 = vmatprep.subr.mxu0 0.0
    %1514 = vmatpush1.msra.mxu0 0.0
    %1515 = vmatprep.subr.mxu0 0.0
    %1516 = vmatpush1.msra.mxu0 0.0
    %1517 = vmatprep.subr.mxu0 0.0
    %1518 = vmatpush1.msra.mxu0 0.0
    %1519 = vmatprep.subr.mxu0 0.0
    %1520 = vmatpush1.msra.mxu0 0.0
    %1521 = vmatprep.subr.mxu0 0.0
    %1522 = vmatpush1.msra.mxu0 0.0
    %1523 = vmatprep.subr.mxu0 0.0
    %1524 = vmatpush1.msra.mxu0 0.0
    %1525 = vmatprep.mubr.f32.mxu0 0.0
    %v1526 = vand.u32 %v987, 4294901760
    %v1527 = vsub.f32 %v987, %v1526
    %v1528 = vand.u32 %v1527, 4294901760
    %1529 = vmatmul.mubr.f32.gmra.mrb[0].mxu0 %v1528
    %v1530 = vpop.f32.mrb[0].mxu0
    %v1531 = vadd.f32 %v1401, %v1530
    %v1532 = vpop.f32.mrb[0].mxu0
    %1533 = vmatprep.mubr.f32.mxu0 0.0
    %v1534 = vand.u32 %v990, 4294901760
    %v1535 = vsub.f32 %v990, %v1534
    %v1536 = vand.u32 %v1535, 4294901760
    %1537 = vmatmul.mubr.f32.gmra.mrb[0].mxu0 %v1536
    %v1538 = vpop.f32.mrb[0].mxu0
    %v1539 = vadd.f32 %v1408, %v1538
    %v1540 = vpop.f32.mrb[0].mxu0
    %1541 = vmatprep.mubr.f32.mxu0 0.0
    %v1542 = vand.u32 %v993, 4294901760
    %v1543 = vsub.f32 %v993, %v1542
    %v1544 = vand.u32 %v1543, 4294901760
    %1545 = vmatmul.mubr.f32.gmra.mrb[0].mxu0 %v1544
    %v1546 = vpop.f32.mrb[0].mxu0
    %v1547 = vadd.f32 %v1415, %v1546
    %v1548 = vpop.f32.mrb[0].mxu0
    %1549 = vmatprep.mubr.f32.mxu0 0.0
    %v1550 = vand.u32 %v996, 4294901760
    %v1551 = vsub.f32 %v996, %v1550
    %v1552 = vand.u32 %v1551, 4294901760
    %1553 = vmatmul.mubr.f32.gmra.mrb[0].mxu0 %v1552
    %v1554 = vpop.f32.mrb[0].mxu0
    %v1555 = vadd.f32 %v1422, %v1554
    %v1556 = vpop.f32.mrb[0].mxu0
    %1557 = vmatprep.mubr.f32.mxu0 0.0
    %v1558 = vand.u32 %v999, 4294901760
    %v1559 = vsub.f32 %v999, %v1558
    %v1560 = vand.u32 %v1559, 4294901760
    %1561 = vmatmul.mubr.f32.gmra.mrb[0].mxu0 %v1560
    %v1562 = vpop.f32.mrb[0].mxu0
    %v1563 = vadd.f32 %v1429, %v1562
    %v1564 = vpop.f32.mrb[0].mxu0
    %1565 = vmatprep.mubr.f32.mxu0 0.0
    %v1566 = vand.u32 %v1002, 4294901760
    %v1567 = vsub.f32 %v1002, %v1566
    %v1568 = vand.u32 %v1567, 4294901760
    %1569 = vmatmul.mubr.f32.gmra.mrb[0].mxu0 %v1568
    %v1570 = vpop.f32.mrb[0].mxu0
    %v1571 = vadd.f32 %v1436, %v1570
    %v1572 = vpop.f32.mrb[0].mxu0
    %1573 = vmatprep.mubr.f32.mxu0 0.0
    %v1574 = vand.u32 %v1005, 4294901760
    %v1575 = vsub.f32 %v1005, %v1574
    %v1576 = vand.u32 %v1575, 4294901760
    %1577 = vmatmul.mubr.f32.gmra.mrb[0].mxu0 %v1576
    %v1578 = vpop.f32.mrb[0].mxu0
    %v1579 = vadd.f32 %v1443, %v1578
    %v1580 = vpop.f32.mrb[0].mxu0
    %1581 = vmatprep.mubr.f32.mxu0 0.0
    %v1582 = vand.u32 %v1008, 4294901760
    %v1583 = vsub.f32 %v1008, %v1582
    %v1584 = vand.u32 %v1583, 4294901760
    %1585 = vmatmul.mubr.f32.gmra.mrb[0].mxu0 %v1584
    %v1586 = vpop.f32.mrb[0].mxu0
    %v1587 = vadd.f32 %v1450, %v1586
    %v1588 = vpop.f32.mrb[0].mxu0
    %1589 = vdwg.mxu0
    %1590 = vmatprep.subr.mxu0 0.0
    %v1591 = vand.u32 %v91, 4294901760
    %v1592 = vsub.f32 %v91, %v1591
    %v1593 = vand.u32 %v1592, 4294901760
    %1594 = vmatpush1.msra.mxu0 %v1593
    %1595 = vmatprep.subr.mxu0 0.0
    %v1596 = vand.u32 %v92, 4294901760
    %v1597 = vsub.f32 %v92, %v1596
    %v1598 = vand.u32 %v1597, 4294901760
    %1599 = vmatpush1.msra.mxu0 %v1598
    %1600 = vmatprep.subr.mxu0 0.0
    %v1601 = vand.u32 %v93, 4294901760
    %v1602 = vsub.f32 %v93, %v1601
    %v1603 = vand.u32 %v1602, 4294901760
    %1604 = vmatpush1.msra.mxu0 %v1603
    %1605 = vmatprep.subr.mxu0 0.0
    %v1606 = vand.u32 %v94, 4294901760
    %v1607 = vsub.f32 %v94, %v1606
    %v1608 = vand.u32 %v1607, 4294901760
    %1609 = vmatpush1.msra.mxu0 %v1608
    %1610 = vmatprep.subr.mxu0 0.0
    %v1611 = vand.u32 %v95, 4294901760
    %v1612 = vsub.f32 %v95, %v1611
    %v1613 = vand.u32 %v1612, 4294901760
    %1614 = vmatpush1.msra.mxu0 %v1613
    %1615 = vmatprep.subr.mxu0 0.0
    %v1616 = vand.u32 %v96, 4294901760
    %v1617 = vsub.f32 %v96, %v1616
    %v1618 = vand.u32 %v1617, 4294901760
    %1619 = vmatpush1.msra.mxu0 %v1618
    %1620 = vmatprep.subr.mxu0 0.0
    %v1621 = vand.u32 %v97, 4294901760
    %v1622 = vsub.f32 %v97, %v1621
    %v1623 = vand.u32 %v1622, 4294901760
    %1624 = vmatpush1.msra.mxu0 %v1623
    %1625 = vmatprep.subr.mxu0 0.0
    %v1626 = vand.u32 %v98, 4294901760
    %v1627 = vsub.f32 %v98, %v1626
    %v1628 = vand.u32 %v1627, 4294901760
    %1629 = vmatpush1.msra.mxu0 %v1628
    %1630 = vmatprep.subr.mxu0 0.0
    %1631 = vmatpush1.msra.mxu0 0.0
    %1632 = vmatprep.subr.mxu0 0.0
    %1633 = vmatpush1.msra.mxu0 0.0
    %1634 = vmatprep.subr.mxu0 0.0
    %1635 = vmatpush1.msra.mxu0 0.0
    %1636 = vmatprep.subr.mxu0 0.0
    %1637 = vmatpush1.msra.mxu0 0.0
    %1638 = vmatprep.subr.mxu0 0.0
    %1639 = vmatpush1.msra.mxu0 0.0
    %1640 = vmatprep.subr.mxu0 0.0
    %1641 = vmatpush1.msra.mxu0 0.0
    %1642 = vmatprep.subr.mxu0 0.0
    %1643 = vmatpush1.msra.mxu0 0.0
    %1644 = vmatprep.subr.mxu0 0.0
    %1645 = vmatpush1.msra.mxu0 0.0
    %1646 = vmatprep.subr.mxu0 0.0
    %1647 = vmatpush1.msra.mxu0 0.0
    %1648 = vmatprep.subr.mxu0 0.0
    %1649 = vmatpush1.msra.mxu0 0.0
    %1650 = vmatprep.subr.mxu0 0.0
    %1651 = vmatpush1.msra.mxu0 0.0
    %1652 = vmatprep.subr.mxu0 0.0
    %1653 = vmatpush1.msra.mxu0 0.0
    %1654 = vmatprep.subr.mxu0 0.0
    %1655 = vmatpush1.msra.mxu0 0.0
    %1656 = vmatprep.subr.mxu0 0.0
    %1657 = vmatpush1.msra.mxu0 0.0
    %1658 = vmatprep.subr.mxu0 0.0
    %1659 = vmatpush1.msra.mxu0 0.0
    %1660 = vmatprep.subr.mxu0 0.0
    %1661 = vmatpush1.msra.mxu0 0.0
    %1662 = vmatprep.subr.mxu0 0.0
    %1663 = vmatpush1.msra.mxu0 0.0
    %1664 = vmatprep.subr.mxu0 0.0
    %1665 = vmatpush1.msra.mxu0 0.0
    %1666 = vmatprep.subr.mxu0 0.0
    %1667 = vmatpush1.msra.mxu0 0.0
    %1668 = vmatprep.subr.mxu0 0.0
    %1669 = vmatpush1.msra.mxu0 0.0
    %1670 = vmatprep.subr.mxu0 0.0
    %1671 = vmatpush1.msra.mxu0 0.0
    %1672 = vmatprep.subr.mxu0 0.0
    %1673 = vmatpush1.msra.mxu0 0.0
    %1674 = vmatprep.subr.mxu0 0.0
    %1675 = vmatpush1.msra.mxu0 0.0
    %1676 = vmatprep.subr.mxu0 0.0
    %1677 = vmatpush1.msra.mxu0 0.0
    %1678 = vmatprep.mubr.f32.mxu0 0.0
    %v1679 = vand.u32 %v987, 4294901760
    %1680 = vmatmul.mubr.f32.gmra.mrb[0].mxu0 %v1679
    %v1681 = vpop.f32.mrb[0].mxu0
    %v1682 = vadd.f32 %v1531, %v1681
    %v1683 = vpop.f32.mrb[0].mxu0
    %1684 = vmatprep.mubr.f32.mxu0 0.0
    %v1685 = vand.u32 %v990, 4294901760
    %1686 = vmatmul.mubr.f32.gmra.mrb[0].mxu0 %v1685
    %v1687 = vpop.f32.mrb[0].mxu0
    %v1688 = vadd.f32 %v1539, %v1687
    %v1689 = vpop.f32.mrb[0].mxu0
    %1690 = vmatprep.mubr.f32.mxu0 0.0
    %v1691 = vand.u32 %v993, 4294901760
    %1692 = vmatmul.mubr.f32.gmra.mrb[0].mxu0 %v1691
    %v1693 = vpop.f32.mrb[0].mxu0
    %v1694 = vadd.f32 %v1547, %v1693
    %v1695 = vpop.f32.mrb[0].mxu0
    %1696 = vmatprep.mubr.f32.mxu0 0.0
    %v1697 = vand.u32 %v996, 4294901760
    %1698 = vmatmul.mubr.f32.gmra.mrb[0].mxu0 %v1697
    %v1699 = vpop.f32.mrb[0].mxu0
    %v1700 = vadd.f32 %v1555, %v1699
    %v1701 = vpop.f32.mrb[0].mxu0
    %1702 = vmatprep.mubr.f32.mxu0 0.0
    %v1703 = vand.u32 %v999, 4294901760
    %1704 = vmatmul.mubr.f32.gmra.mrb[0].mxu0 %v1703
    %v1705 = vpop.f32.mrb[0].mxu0
    %v1706 = vadd.f32 %v1563, %v1705
    %v1707 = vpop.f32.mrb[0].mxu0
    %1708 = vmatprep.mubr.f32.mxu0 0.0
    %v1709 = vand.u32 %v1002, 4294901760
    %1710 = vmatmul.mubr.f32.gmra.mrb[0].mxu0 %v1709
    %v1711 = vpop.f32.mrb[0].mxu0
    %v1712 = vadd.f32 %v1571, %v1711
    %v1713 = vpop.f32.mrb[0].mxu0
    %1714 = vmatprep.mubr.f32.mxu0 0.0
    %v1715 = vand.u32 %v1005, 4294901760
    %1716 = vmatmul.mubr.f32.gmra.mrb[0].mxu0 %v1715
    %v1717 = vpop.f32.mrb[0].mxu0
    %v1718 = vadd.f32 %v1579, %v1717
    %v1719 = vpop.f32.mrb[0].mxu0
    %1720 = vmatprep.mubr.f32.mxu0 0.0
    %v1721 = vand.u32 %v1008, 4294901760
    %1722 = vmatmul.mubr.f32.gmra.mrb[0].mxu0 %v1721
    %v1723 = vpop.f32.mrb[0].mxu0
    %v1724 = vadd.f32 %v1587, %v1723
    %v1725 = vpop.f32.mrb[0].mxu0
    %1726 = vdwg.mxu0
    %1727 = vmatprep.subr.mxu0 0.0
    %v1728 = vand.u32 %v91, 4294901760
    %1729 = vmatpush1.msra.mxu0 %v1728
    %1730 = vmatprep.subr.mxu0 0.0
    %v1731 = vand.u32 %v92, 4294901760
    %1732 = vmatpush1.msra.mxu0 %v1731
    %1733 = vmatprep.subr.mxu0 0.0
    %v1734 = vand.u32 %v93, 4294901760
    %1735 = vmatpush1.msra.mxu0 %v1734
    %1736 = vmatprep.subr.mxu0 0.0
    %v1737 = vand.u32 %v94, 4294901760
    %1738 = vmatpush1.msra.mxu0 %v1737
    %1739 = vmatprep.subr.mxu0 0.0
    %v1740 = vand.u32 %v95, 4294901760
    %1741 = vmatpush1.msra.mxu0 %v1740
    %1742 = vmatprep.subr.mxu0 0.0
    %v1743 = vand.u32 %v96, 4294901760
    %1744 = vmatpush1.msra.mxu0 %v1743
    %1745 = vmatprep.subr.mxu0 0.0
    %v1746 = vand.u32 %v97, 4294901760
    %1747 = vmatpush1.msra.mxu0 %v1746
    %1748 = vmatprep.subr.mxu0 0.0
    %v1749 = vand.u32 %v98, 4294901760
    %1750 = vmatpush1.msra.mxu0 %v1749
    %1751 = vmatprep.subr.mxu0 0.0
    %1752 = vmatpush1.msra.mxu0 0.0
    %1753 = vmatprep.subr.mxu0 0.0
    %1754 = vmatpush1.msra.mxu0 0.0
    %1755 = vmatprep.subr.mxu0 0.0
    %1756 = vmatpush1.msra.mxu0 0.0
    %1757 = vmatprep.subr.mxu0 0.0
    %1758 = vmatpush1.msra.mxu0 0.0
    %1759 = vmatprep.subr.mxu0 0.0
    %1760 = vmatpush1.msra.mxu0 0.0
    %1761 = vmatprep.subr.mxu0 0.0
    %1762 = vmatpush1.msra.mxu0 0.0
    %1763 = vmatprep.subr.mxu0 0.0
    %1764 = vmatpush1.msra.mxu0 0.0
    %1765 = vmatprep.subr.mxu0 0.0
    %1766 = vmatpush1.msra.mxu0 0.0
    %1767 = vmatprep.subr.mxu0 0.0
    %1768 = vmatpush1.msra.mxu0 0.0
    %1769 = vmatprep.subr.mxu0 0.0
    %1770 = vmatpush1.msra.mxu0 0.0
    %1771 = vmatprep.subr.mxu0 0.0
    %1772 = vmatpush1.msra.mxu0 0.0
    %1773 = vmatprep.subr.mxu0 0.0
    %1774 = vmatpush1.msra.mxu0 0.0
    %1775 = vmatprep.subr.mxu0 0.0
    %1776 = vmatpush1.msra.mxu0 0.0
    %1777 = vmatprep.subr.mxu0 0.0
    %1778 = vmatpush1.msra.mxu0 0.0
    %1779 = vmatprep.subr.mxu0 0.0
    %1780 = vmatpush1.msra.mxu0 0.0
    %1781 = vmatprep.subr.mxu0 0.0
    %1782 = vmatpush1.msra.mxu0 0.0
    %1783 = vmatprep.subr.mxu0 0.0
    %1784 = vmatpush1.msra.mxu0 0.0
    %1785 = vmatprep.subr.mxu0 0.0
    %1786 = vmatpush1.msra.mxu0 0.0
    %1787 = vmatprep.subr.mxu0 0.0
    %1788 = vmatpush1.msra.mxu0 0.0
    %1789 = vmatprep.subr.mxu0 0.0
    %1790 = vmatpush1.msra.mxu0 0.0
    %1791 = vmatprep.subr.mxu0 0.0
    %1792 = vmatpush1.msra.mxu0 0.0
    %1793 = vmatprep.subr.mxu0 0.0
    %1794 = vmatpush1.msra.mxu0 0.0
    %1795 = vmatprep.subr.mxu0 0.0
    %1796 = vmatpush1.msra.mxu0 0.0
    %1797 = vmatprep.subr.mxu0 0.0
    %1798 = vmatpush1.msra.mxu0 0.0
    %1799 = vmatprep.mubr.f32.mxu0 0.0
    %v1800 = vand.u32 %v987, 4294901760
    %1801 = vmatmul.mubr.f32.gmra.mrb[0].mxu0 %v1800
    %v1802 = vpop.f32.mrb[0].mxu0
    %v1803 = vadd.f32 %v1682, %v1802
    %v1804 = vpop.f32.mrb[0].mxu0
    %1805 = vmatprep.mubr.f32.mxu0 0.0
    %v1806 = vand.u32 %v990, 4294901760
    %1807 = vmatmul.mubr.f32.gmra.mrb[0].mxu0 %v1806
    %v1808 = vpop.f32.mrb[0].mxu0
    %v1809 = vadd.f32 %v1688, %v1808
    %v1810 = vpop.f32.mrb[0].mxu0
    %1811 = vmatprep.mubr.f32.mxu0 0.0
    %v1812 = vand.u32 %v993, 4294901760
    %1813 = vmatmul.mubr.f32.gmra.mrb[0].mxu0 %v1812
    %v1814 = vpop.f32.mrb[0].mxu0
    %v1815 = vadd.f32 %v1694, %v1814
    %v1816 = vpop.f32.mrb[0].mxu0
    %1817 = vmatprep.mubr.f32.mxu0 0.0
    %v1818 = vand.u32 %v996, 4294901760
    %1819 = vmatmul.mubr.f32.gmra.mrb[0].mxu0 %v1818
    %v1820 = vpop.f32.mrb[0].mxu0
    %v1821 = vadd.f32 %v1700, %v1820
    %v1822 = vpop.f32.mrb[0].mxu0
    %1823 = vmatprep.mubr.f32.mxu0 0.0
    %v1824 = vand.u32 %v999, 4294901760
    %1825 = vmatmul.mubr.f32.gmra.mrb[0].mxu0 %v1824
    %v1826 = vpop.f32.mrb[0].mxu0
    %v1827 = vadd.f32 %v1706, %v1826
    %v1828 = vpop.f32.mrb[0].mxu0
    %1829 = vmatprep.mubr.f32.mxu0 0.0
    %v1830 = vand.u32 %v1002, 4294901760
    %1831 = vmatmul.mubr.f32.gmra.mrb[0].mxu0 %v1830
    %v1832 = vpop.f32.mrb[0].mxu0
    %v1833 = vadd.f32 %v1712, %v1832
    %v1834 = vpop.f32.mrb[0].mxu0
    %1835 = vmatprep.mubr.f32.mxu0 0.0
    %v1836 = vand.u32 %v1005, 4294901760
    %1837 = vmatmul.mubr.f32.gmra.mrb[0].mxu0 %v1836
    %v1838 = vpop.f32.mrb[0].mxu0
    %v1839 = vadd.f32 %v1718, %v1838
    %v1840 = vpop.f32.mrb[0].mxu0
    %1841 = vmatprep.mubr.f32.mxu0 0.0
    %v1842 = vand.u32 %v1008, 4294901760
    %1843 = vmatmul.mubr.f32.gmra.mrb[0].mxu0 %v1842
    %v1844 = vpop.f32.mrb[0].mxu0
    %v1845 = vadd.f32 %v1724, %v1844
    %v1846 = vpop.f32.mrb[0].mxu0
    %1847 = vdwg.mxu0
    %v1848 = vld [vmem:[#allocation6] sm:$0xff]
    %v1849 = vld [vmem:[#allocation6 + $0x8] sm:$0xff]
    %v1850 = vld [vmem:[#allocation6 + $0x10] sm:$0xff]
    %v1851 = vld [vmem:[#allocation6 + $0x18] sm:$0xff]
    %v1852 = vld [vmem:[#allocation6 + $0x20] sm:$0xff]
    %v1853 = vld [vmem:[#allocation6 + $0x28] sm:$0xff]
    %v1854 = vld [vmem:[#allocation6 + $0x30] sm:$0xff]
    %v1855 = vld [vmem:[#allocation6 + $0x38] sm:$0xff]
    %v1856 = vld [vmem:[#allocation9] sm:$0xff]
    %v1857 = vld [vmem:[#allocation9 + $0x8] sm:$0xff]
    %v1858 = vld [vmem:[#allocation9 + $0x10] sm:$0xff]
    %v1859 = vld [vmem:[#allocation9 + $0x18] sm:$0xff]
    %v1860 = vld [vmem:[#allocation9 + $0x20] sm:$0xff]
    %v1861 = vld [vmem:[#allocation9 + $0x28] sm:$0xff]
    %v1862 = vld [vmem:[#allocation9 + $0x30] sm:$0xff]
    %v1863 = vld [vmem:[#allocation9 + $0x38] sm:$0xff]
    %v1865 = vsel %vm107, %v1848, 0
    %v1868 = vsel %vm107, %v1849, 0
    %v1871 = vsel %vm107, %v1850, 0
    %v1874 = vsel %vm107, %v1851, 0
    %v1877 = vsel %vm107, %v1852, 0
    %v1880 = vsel %vm107, %v1853, 0
    %v1883 = vsel %vm107, %v1854, 0
    %v1886 = vsel %vm107, %v1855, 0
    %1888 = vmatprep.subr.mxu0 0.0
    %v1889 = vand.u32 %v1856, 4294901760
    %1890 = vmatpush1.msra.mxu0 %v1889
    %1891 = vmatprep.subr.mxu0 0.0
    %v1892 = vand.u32 %v1857, 4294901760
    %1893 = vmatpush1.msra.mxu0 %v1892
    %1894 = vmatprep.subr.mxu0 0.0
    %v1895 = vand.u32 %v1858, 4294901760
    %1896 = vmatpush1.msra.mxu0 %v1895
    %1897 = vmatprep.subr.mxu0 0.0
    %v1898 = vand.u32 %v1859, 4294901760
    %1899 = vmatpush1.msra.mxu0 %v1898
    %1900 = vmatprep.subr.mxu0 0.0
    %v1901 = vand.u32 %v1860, 4294901760
    %1902 = vmatpush1.msra.mxu0 %v1901
    %1903 = vmatprep.subr.mxu0 0.0
    %v1904 = vand.u32 %v1861, 4294901760
    %1905 = vmatpush1.msra.mxu0 %v1904
    %1906 = vmatprep.subr.mxu0 0.0
    %v1907 = vand.u32 %v1862, 4294901760
    %1908 = vmatpush1.msra.mxu0 %v1907
    %1909 = vmatprep.subr.mxu0 0.0
    %v1910 = vand.u32 %v1863, 4294901760
    %1911 = vmatpush1.msra.mxu0 %v1910
    %1912 = vmatprep.subr.mxu0 0.0
    %1913 = vmatpush1.msra.mxu0 0.0
    %1914 = vmatprep.subr.mxu0 0.0
    %1915 = vmatpush1.msra.mxu0 0.0
    %1916 = vmatprep.subr.mxu0 0.0
    %1917 = vmatpush1.msra.mxu0 0.0
    %1918 = vmatprep.subr.mxu0 0.0
    %1919 = vmatpush1.msra.mxu0 0.0
    %1920 = vmatprep.subr.mxu0 0.0
    %1921 = vmatpush1.msra.mxu0 0.0
    %1922 = vmatprep.subr.mxu0 0.0
    %1923 = vmatpush1.msra.mxu0 0.0
    %1924 = vmatprep.subr.mxu0 0.0
    %1925 = vmatpush1.msra.mxu0 0.0
    %1926 = vmatprep.subr.mxu0 0.0
    %1927 = vmatpush1.msra.mxu0 0.0
    %1928 = vmatprep.subr.mxu0 0.0
    %1929 = vmatpush1.msra.mxu0 0.0
    %1930 = vmatprep.subr.mxu0 0.0
    %1931 = vmatpush1.msra.mxu0 0.0
    %1932 = vmatprep.subr.mxu0 0.0
    %1933 = vmatpush1.msra.mxu0 0.0
    %1934 = vmatprep.subr.mxu0 0.0
    %1935 = vmatpush1.msra.mxu0 0.0
    %1936 = vmatprep.subr.mxu0 0.0
    %1937 = vmatpush1.msra.mxu0 0.0
    %1938 = vmatprep.subr.mxu0 0.0
    %1939 = vmatpush1.msra.mxu0 0.0
    %1940 = vmatprep.subr.mxu0 0.0
    %1941 = vmatpush1.msra.mxu0 0.0
    %1942 = vmatprep.subr.mxu0 0.0
    %1943 = vmatpush1.msra.mxu0 0.0
    %1944 = vmatprep.subr.mxu0 0.0
    %1945 = vmatpush1.msra.mxu0 0.0
    %1946 = vmatprep.subr.mxu0 0.0
    %1947 = vmatpush1.msra.mxu0 0.0
    %1948 = vmatprep.subr.mxu0 0.0
    %1949 = vmatpush1.msra.mxu0 0.0
    %1950 = vmatprep.subr.mxu0 0.0
    %1951 = vmatpush1.msra.mxu0 0.0
    %1952 = vmatprep.subr.mxu0 0.0
    %1953 = vmatpush1.msra.mxu0 0.0
    %1954 = vmatprep.subr.mxu0 0.0
    %1955 = vmatpush1.msra.mxu0 0.0
    %1956 = vmatprep.subr.mxu0 0.0
    %1957 = vmatpush1.msra.mxu0 0.0
    %1958 = vmatprep.subr.mxu0 0.0
    %1959 = vmatpush1.msra.mxu0 0.0
    %1960 = vmatprep.mubr.f32.mxu0 0.0
    %v1961 = vand.u32 %v1865, 4294901760
    %v1962 = vsub.f32 %v1865, %v1961
    %v1963 = vand.u32 %v1962, 4294901760
    %v1964 = vsub.f32 %v1962, %v1963
    %v1965 = vand.u32 %v1964, 4294901760
    %1966 = vmatmul.mubr.f32.gmra.mrb[0].mxu0 %v1965
    %v1967 = vpop.f32.mrb[0].mxu0
    %v1968 = vadd.f32 0.0, %v1967
    %v1969 = vpop.f32.mrb[0].mxu0
    %1970 = vmatprep.mubr.f32.mxu0 0.0
    %v1971 = vand.u32 %v1868, 4294901760
    %v1972 = vsub.f32 %v1868, %v1971
    %v1973 = vand.u32 %v1972, 4294901760
    %v1974 = vsub.f32 %v1972, %v1973
    %v1975 = vand.u32 %v1974, 4294901760
    %1976 = vmatmul.mubr.f32.gmra.mrb[0].mxu0 %v1975
    %v1977 = vpop.f32.mrb[0].mxu0
    %v1978 = vadd.f32 0.0, %v1977
    %v1979 = vpop.f32.mrb[0].mxu0
    %1980 = vmatprep.mubr.f32.mxu0 0.0
    %v1981 = vand.u32 %v1871, 4294901760
    %v1982 = vsub.f32 %v1871, %v1981
    %v1983 = vand.u32 %v1982, 4294901760
    %v1984 = vsub.f32 %v1982, %v1983
    %v1985 = vand.u32 %v1984, 4294901760
    %1986 = vmatmul.mubr.f32.gmra.mrb[0].mxu0 %v1985
    %v1987 = vpop.f32.mrb[0].mxu0
    %v1988 = vadd.f32 0.0, %v1987
    %v1989 = vpop.f32.mrb[0].mxu0
    %1990 = vmatprep.mubr.f32.mxu0 0.0
    %v1991 = vand.u32 %v1874, 4294901760
    %v1992 = vsub.f32 %v1874, %v1991
    %v1993 = vand.u32 %v1992, 4294901760
    %v1994 = vsub.f32 %v1992, %v1993
    %v1995 = vand.u32 %v1994, 4294901760
    %1996 = vmatmul.mubr.f32.gmra.mrb[0].mxu0 %v1995
    %v1997 = vpop.f32.mrb[0].mxu0
    %v1998 = vadd.f32 0.0, %v1997
    %v1999 = vpop.f32.mrb[0].mxu0
    %2000 = vmatprep.mubr.f32.mxu0 0.0
    %v2001 = vand.u32 %v1877, 4294901760
    %v2002 = vsub.f32 %v1877, %v2001
    %v2003 = vand.u32 %v2002, 4294901760
    %v2004 = vsub.f32 %v2002, %v2003
    %v2005 = vand.u32 %v2004, 4294901760
    %2006 = vmatmul.mubr.f32.gmra.mrb[0].mxu0 %v2005
    %v2007 = vpop.f32.mrb[0].mxu0
    %v2008 = vadd.f32 0.0, %v2007
    %v2009 = vpop.f32.mrb[0].mxu0
    %2010 = vmatprep.mubr.f32.mxu0 0.0
    %v2011 = vand.u32 %v1880, 4294901760
    %v2012 = vsub.f32 %v1880, %v2011
    %v2013 = vand.u32 %v2012, 4294901760
    %v2014 = vsub.f32 %v2012, %v2013
    %v2015 = vand.u32 %v2014, 4294901760
    %2016 = vmatmul.mubr.f32.gmra.mrb[0].mxu0 %v2015
    %v2017 = vpop.f32.mrb[0].mxu0
    %v2018 = vadd.f32 0.0, %v2017
    %v2019 = vpop.f32.mrb[0].mxu0
    %2020 = vmatprep.mubr.f32.mxu0 0.0
    %v2021 = vand.u32 %v1883, 4294901760
    %v2022 = vsub.f32 %v1883, %v2021
    %v2023 = vand.u32 %v2022, 4294901760
    %v2024 = vsub.f32 %v2022, %v2023
    %v2025 = vand.u32 %v2024, 4294901760
    %2026 = vmatmul.mubr.f32.gmra.mrb[0].mxu0 %v2025
    %v2027 = vpop.f32.mrb[0].mxu0
    %v2028 = vadd.f32 0.0, %v2027
    %v2029 = vpop.f32.mrb[0].mxu0
    %2030 = vmatprep.mubr.f32.mxu0 0.0
    %v2031 = vand.u32 %v1886, 4294901760
    %v2032 = vsub.f32 %v1886, %v2031
    %v2033 = vand.u32 %v2032, 4294901760
    %v2034 = vsub.f32 %v2032, %v2033
    %v2035 = vand.u32 %v2034, 4294901760
    %2036 = vmatmul.mubr.f32.gmra.mrb[0].mxu0 %v2035
    %v2037 = vpop.f32.mrb[0].mxu0
    %v2038 = vadd.f32 0.0, %v2037
    %v2039 = vpop.f32.mrb[0].mxu0
    %2040 = vdwg.mxu0
    %2041 = vmatprep.subr.mxu0 0.0
    %v2042 = vand.u32 %v1856, 4294901760
    %v2043 = vsub.f32 %v1856, %v2042
    %v2044 = vand.u32 %v2043, 4294901760
    %v2045 = vsub.f32 %v2043, %v2044
    %v2046 = vand.u32 %v2045, 4294901760
    %2047 = vmatpush1.msra.mxu0 %v2046
    %2048 = vmatprep.subr.mxu0 0.0
    %v2049 = vand.u32 %v1857, 4294901760
    %v2050 = vsub.f32 %v1857, %v2049
    %v2051 = vand.u32 %v2050, 4294901760
    %v2052 = vsub.f32 %v2050, %v2051
    %v2053 = vand.u32 %v2052, 4294901760
    %2054 = vmatpush1.msra.mxu0 %v2053
    %2055 = vmatprep.subr.mxu0 0.0
    %v2056 = vand.u32 %v1858, 4294901760
    %v2057 = vsub.f32 %v1858, %v2056
    %v2058 = vand.u32 %v2057, 4294901760
    %v2059 = vsub.f32 %v2057, %v2058
    %v2060 = vand.u32 %v2059, 4294901760
    %2061 = vmatpush1.msra.mxu0 %v2060
    %2062 = vmatprep.subr.mxu0 0.0
    %v2063 = vand.u32 %v1859, 4294901760
    %v2064 = vsub.f32 %v1859, %v2063
    %v2065 = vand.u32 %v2064, 4294901760
    %v2066 = vsub.f32 %v2064, %v2065
    %v2067 = vand.u32 %v2066, 4294901760
    %2068 = vmatpush1.msra.mxu0 %v2067
    %2069 = vmatprep.subr.mxu0 0.0
    %v2070 = vand.u32 %v1860, 4294901760
    %v2071 = vsub.f32 %v1860, %v2070
    %v2072 = vand.u32 %v2071, 4294901760
    %v2073 = vsub.f32 %v2071, %v2072
    %v2074 = vand.u32 %v2073, 4294901760
    %2075 = vmatpush1.msra.mxu0 %v2074
    %2076 = vmatprep.subr.mxu0 0.0
    %v2077 = vand.u32 %v1861, 4294901760
    %v2078 = vsub.f32 %v1861, %v2077
    %v2079 = vand.u32 %v2078, 4294901760
    %v2080 = vsub.f32 %v2078, %v2079
    %v2081 = vand.u32 %v2080, 4294901760
    %2082 = vmatpush1.msra.mxu0 %v2081
    %2083 = vmatprep.subr.mxu0 0.0
    %v2084 = vand.u32 %v1862, 4294901760
    %v2085 = vsub.f32 %v1862, %v2084
    %v2086 = vand.u32 %v2085, 4294901760
    %v2087 = vsub.f32 %v2085, %v2086
    %v2088 = vand.u32 %v2087, 4294901760
    %2089 = vmatpush1.msra.mxu0 %v2088
    %2090 = vmatprep.subr.mxu0 0.0
    %v2091 = vand.u32 %v1863, 4294901760
    %v2092 = vsub.f32 %v1863, %v2091
    %v2093 = vand.u32 %v2092, 4294901760
    %v2094 = vsub.f32 %v2092, %v2093
    %v2095 = vand.u32 %v2094, 4294901760
    %2096 = vmatpush1.msra.mxu0 %v2095
    %2097 = vmatprep.subr.mxu0 0.0
    %2098 = vmatpush1.msra.mxu0 0.0
    %2099 = vmatprep.subr.mxu0 0.0
    %2100 = vmatpush1.msra.mxu0 0.0
    %2101 = vmatprep.subr.mxu0 0.0
    %2102 = vmatpush1.msra.mxu0 0.0
    %2103 = vmatprep.subr.mxu0 0.0
    %2104 = vmatpush1.msra.mxu0 0.0
    %2105 = vmatprep.subr.mxu0 0.0
    %2106 = vmatpush1.msra.mxu0 0.0
    %2107 = vmatprep.subr.mxu0 0.0
    %2108 = vmatpush1.msra.mxu0 0.0
    %2109 = vmatprep.subr.mxu0 0.0
    %2110 = vmatpush1.msra.mxu0 0.0
    %2111 = vmatprep.subr.mxu0 0.0
    %2112 = vmatpush1.msra.mxu0 0.0
    %2113 = vmatprep.subr.mxu0 0.0
    %2114 = vmatpush1.msra.mxu0 0.0
    %2115 = vmatprep.subr.mxu0 0.0
    %2116 = vmatpush1.msra.mxu0 0.0
    %2117 = vmatprep.subr.mxu0 0.0
    %2118 = vmatpush1.msra.mxu0 0.0
    %2119 = vmatprep.subr.mxu0 0.0
    %2120 = vmatpush1.msra.mxu0 0.0
    %2121 = vmatprep.subr.mxu0 0.0
    %2122 = vmatpush1.msra.mxu0 0.0
    %2123 = vmatprep.subr.mxu0 0.0
    %2124 = vmatpush1.msra.mxu0 0.0
    %2125 = vmatprep.subr.mxu0 0.0
    %2126 = vmatpush1.msra.mxu0 0.0
    %2127 = vmatprep.subr.mxu0 0.0
    %2128 = vmatpush1.msra.mxu0 0.0
    %2129 = vmatprep.subr.mxu0 0.0
    %2130 = vmatpush1.msra.mxu0 0.0
    %2131 = vmatprep.subr.mxu0 0.0
    %2132 = vmatpush1.msra.mxu0 0.0
    %2133 = vmatprep.subr.mxu0 0.0
    %2134 = vmatpush1.msra.mxu0 0.0
    %2135 = vmatprep.subr.mxu0 0.0
    %2136 = vmatpush1.msra.mxu0 0.0
    %2137 = vmatprep.subr.mxu0 0.0
    %2138 = vmatpush1.msra.mxu0 0.0
    %2139 = vmatprep.subr.mxu0 0.0
    %2140 = vmatpush1.msra.mxu0 0.0
    %2141 = vmatprep.subr.mxu0 0.0
    %2142 = vmatpush1.msra.mxu0 0.0
    %2143 = vmatprep.subr.mxu0 0.0
    %2144 = vmatpush1.msra.mxu0 0.0
    %2145 = vmatprep.mubr.f32.mxu0 0.0
    %v2146 = vand.u32 %v1865, 4294901760
    %2147 = vmatmul.mubr.f32.gmra.mrb[0].mxu0 %v2146
    %v2148 = vpop.f32.mrb[0].mxu0
    %v2149 = vadd.f32 %v1968, %v2148
    %v2150 = vpop.f32.mrb[0].mxu0
    %2151 = vmatprep.mubr.f32.mxu0 0.0
    %v2152 = vand.u32 %v1868, 4294901760
    %2153 = vmatmul.mubr.f32.gmra.mrb[0].mxu0 %v2152
    %v2154 = vpop.f32.mrb[0].mxu0
    %v2155 = vadd.f32 %v1978, %v2154
    %v2156 = vpop.f32.mrb[0].mxu0
    %2157 = vmatprep.mubr.f32.mxu0 0.0
    %v2158 = vand.u32 %v1871, 4294901760
    %2159 = vmatmul.mubr.f32.gmra.mrb[0].mxu0 %v2158
    %v2160 = vpop.f32.mrb[0].mxu0
    %v2161 = vadd.f32 %v1988, %v2160
    %v2162 = vpop.f32.mrb[0].mxu0
    %2163 = vmatprep.mubr.f32.mxu0 0.0
    %v2164 = vand.u32 %v1874, 4294901760
    %2165 = vmatmul.mubr.f32.gmra.mrb[0].mxu0 %v2164
    %v2166 = vpop.f32.mrb[0].mxu0
    %v2167 = vadd.f32 %v1998, %v2166
    %v2168 = vpop.f32.mrb[0].mxu0
    %2169 = vmatprep.mubr.f32.mxu0 0.0
    %v2170 = vand.u32 %v1877, 4294901760
    %2171 = vmatmul.mubr.f32.gmra.mrb[0].mxu0 %v2170
    %v2172 = vpop.f32.mrb[0].mxu0
    %v2173 = vadd.f32 %v2008, %v2172
    %v2174 = vpop.f32.mrb[0].mxu0
    %2175 = vmatprep.mubr.f32.mxu0 0.0
    %v2176 = vand.u32 %v1880, 4294901760
    %2177 = vmatmul.mubr.f32.gmra.mrb[0].mxu0 %v2176
    %v2178 = vpop.f32.mrb[0].mxu0
    %v2179 = vadd.f32 %v2018, %v2178
    %v2180 = vpop.f32.mrb[0].mxu0
    %2181 = vmatprep.mubr.f32.mxu0 0.0
    %v2182 = vand.u32 %v1883, 4294901760
    %2183 = vmatmul.mubr.f32.gmra.mrb[0].mxu0 %v2182
    %v2184 = vpop.f32.mrb[0].mxu0
    %v2185 = vadd.f32 %v2028, %v2184
    %v2186 = vpop.f32.mrb[0].mxu0
    %2187 = vmatprep.mubr.f32.mxu0 0.0
    %v2188 = vand.u32 %v1886, 4294901760
    %2189 = vmatmul.mubr.f32.gmra.mrb[0].mxu0 %v2188
    %v2190 = vpop.f32.mrb[0].mxu0
    %v2191 = vadd.f32 %v2038, %v2190
    %v2192 = vpop.f32.mrb[0].mxu0
    %2193 = vdwg.mxu0
    %2194 = vmatprep.subr.mxu0 0.0
    %v2195 = vand.u32 %v1856, 4294901760
    %v2196 = vsub.f32 %v1856, %v2195
    %2197 = vmatpush1.msra.mxu0 %v2196
    %2198 = vmatprep.subr.mxu0 0.0
    %v2199 = vand.u32 %v1857, 4294901760
    %v2200 = vsub.f32 %v1857, %v2199
    %2201 = vmatpush1.msra.mxu0 %v2200
    %2202 = vmatprep.subr.mxu0 0.0
    %v2203 = vand.u32 %v1858, 4294901760
    %v2204 = vsub.f32 %v1858, %v2203
    %2205 = vmatpush1.msra.mxu0 %v2204
    %2206 = vmatprep.subr.mxu0 0.0
    %v2207 = vand.u32 %v1859, 4294901760
    %v2208 = vsub.f32 %v1859, %v2207
    %2209 = vmatpush1.msra.mxu0 %v2208
    %2210 = vmatprep.subr.mxu0 0.0
    %v2211 = vand.u32 %v1860, 4294901760
    %v2212 = vsub.f32 %v1860, %v2211
    %2213 = vmatpush1.msra.mxu0 %v2212
    %2214 = vmatprep.subr.mxu0 0.0
    %v2215 = vand.u32 %v1861, 4294901760
    %v2216 = vsub.f32 %v1861, %v2215
    %2217 = vmatpush1.msra.mxu0 %v2216
    %2218 = vmatprep.subr.mxu0 0.0
    %v2219 = vand.u32 %v1862, 4294901760
    %v2220 = vsub.f32 %v1862, %v2219
    %2221 = vmatpush1.msra.mxu0 %v2220
    %2222 = vmatprep.subr.mxu0 0.0
    %v2223 = vand.u32 %v1863, 4294901760
    %v2224 = vsub.f32 %v1863, %v2223
    %2225 = vmatpush1.msra.mxu0 %v2224
    %2226 = vmatprep.subr.mxu0 0.0
    %2227 = vmatpush1.msra.mxu0 0.0
    %2228 = vmatprep.subr.mxu0 0.0
    %2229 = vmatpush1.msra.mxu0 0.0
    %2230 = vmatprep.subr.mxu0 0.0
    %2231 = vmatpush1.msra.mxu0 0.0
    %2232 = vmatprep.subr.mxu0 0.0
    %2233 = vmatpush1.msra.mxu0 0.0
    %2234 = vmatprep.subr.mxu0 0.0
    %2235 = vmatpush1.msra.mxu0 0.0
    %2236 = vmatprep.subr.mxu0 0.0
    %2237 = vmatpush1.msra.mxu0 0.0
    %2238 = vmatprep.subr.mxu0 0.0
    %2239 = vmatpush1.msra.mxu0 0.0
    %2240 = vmatprep.subr.mxu0 0.0
    %2241 = vmatpush1.msra.mxu0 0.0
    %2242 = vmatprep.subr.mxu0 0.0
    %2243 = vmatpush1.msra.mxu0 0.0
    %2244 = vmatprep.subr.mxu0 0.0
    %2245 = vmatpush1.msra.mxu0 0.0
    %2246 = vmatprep.subr.mxu0 0.0
    %2247 = vmatpush1.msra.mxu0 0.0
    %2248 = vmatprep.subr.mxu0 0.0
    %2249 = vmatpush1.msra.mxu0 0.0
    %2250 = vmatprep.subr.mxu0 0.0
    %2251 = vmatpush1.msra.mxu0 0.0
    %2252 = vmatprep.subr.mxu0 0.0
    %2253 = vmatpush1.msra.mxu0 0.0
    %2254 = vmatprep.subr.mxu0 0.0
    %2255 = vmatpush1.msra.mxu0 0.0
    %2256 = vmatprep.subr.mxu0 0.0
    %2257 = vmatpush1.msra.mxu0 0.0
    %2258 = vmatprep.subr.mxu0 0.0
    %2259 = vmatpush1.msra.mxu0 0.0
    %2260 = vmatprep.subr.mxu0 0.0
    %2261 = vmatpush1.msra.mxu0 0.0
    %2262 = vmatprep.subr.mxu0 0.0
    %2263 = vmatpush1.msra.mxu0 0.0
    %2264 = vmatprep.subr.mxu0 0.0
    %2265 = vmatpush1.msra.mxu0 0.0
    %2266 = vmatprep.subr.mxu0 0.0
    %2267 = vmatpush1.msra.mxu0 0.0
    %2268 = vmatprep.subr.mxu0 0.0
    %2269 = vmatpush1.msra.mxu0 0.0
    %2270 = vmatprep.subr.mxu0 0.0
    %2271 = vmatpush1.msra.mxu0 0.0
    %2272 = vmatprep.subr.mxu0 0.0
    %2273 = vmatpush1.msra.mxu0 0.0
    %2274 = vmatprep.mubr.f32.mxu0 0.0
    %v2275 = vand.u32 %v1865, 4294901760
    %v2276 = vsub.f32 %v1865, %v2275
    %2277 = vmatmul.mubr.f32.gmra.mrb[0].mxu0 %v2276
    %v2278 = vpop.f32.mrb[0].mxu0
    %v2279 = vadd.f32 %v2149, %v2278
    %v2280 = vpop.f32.mrb[0].mxu0
    %2281 = vmatprep.mubr.f32.mxu0 0.0
    %v2282 = vand.u32 %v1868, 4294901760
    %v2283 = vsub.f32 %v1868, %v2282
    %2284 = vmatmul.mubr.f32.gmra.mrb[0].mxu0 %v2283
    %v2285 = vpop.f32.mrb[0].mxu0
    %v2286 = vadd.f32 %v2155, %v2285
    %v2287 = vpop.f32.mrb[0].mxu0
    %2288 = vmatprep.mubr.f32.mxu0 0.0
    %v2289 = vand.u32 %v1871, 4294901760
    %v2290 = vsub.f32 %v1871, %v2289
    %2291 = vmatmul.mubr.f32.gmra.mrb[0].mxu0 %v2290
    %v2292 = vpop.f32.mrb[0].mxu0
    %v2293 = vadd.f32 %v2161, %v2292
    %v2294 = vpop.f32.mrb[0].mxu0
    %2295 = vmatprep.mubr.f32.mxu0 0.0
    %v2296 = vand.u32 %v1874, 4294901760
    %v2297 = vsub.f32 %v1874, %v2296
    %2298 = vmatmul.mubr.f32.gmra.mrb[0].mxu0 %v2297
    %v2299 = vpop.f32.mrb[0].mxu0
    %v2300 = vadd.f32 %v2167, %v2299
    %v2301 = vpop.f32.mrb[0].mxu0
    %2302 = vmatprep.mubr.f32.mxu0 0.0
    %v2303 = vand.u32 %v1877, 4294901760
    %v2304 = vsub.f32 %v1877, %v2303
    %2305 = vmatmul.mubr.f32.gmra.mrb[0].mxu0 %v2304
    %v2306 = vpop.f32.mrb[0].mxu0
    %v2307 = vadd.f32 %v2173, %v2306
    %v2308 = vpop.f32.mrb[0].mxu0
    %2309 = vmatprep.mubr.f32.mxu0 0.0
    %v2310 = vand.u32 %v1880, 4294901760
    %v2311 = vsub.f32 %v1880, %v2310
    %2312 = vmatmul.mubr.f32.gmra.mrb[0].mxu0 %v2311
    %v2313 = vpop.f32.mrb[0].mxu0
    %v2314 = vadd.f32 %v2179, %v2313
    %v2315 = vpop.f32.mrb[0].mxu0
    %2316 = vmatprep.mubr.f32.mxu0 0.0
    %v2317 = vand.u32 %v1883, 4294901760
    %v2318 = vsub.f32 %v1883, %v2317
    %2319 = vmatmul.mubr.f32.gmra.mrb[0].mxu0 %v2318
    %v2320 = vpop.f32.mrb[0].mxu0
    %v2321 = vadd.f32 %v2185, %v2320
    %v2322 = vpop.f32.mrb[0].mxu0
    %2323 = vmatprep.mubr.f32.mxu0 0.0
    %v2324 = vand.u32 %v1886, 4294901760
    %v2325 = vsub.f32 %v1886, %v2324
    %2326 = vmatmul.mubr.f32.gmra.mrb[0].mxu0 %v2325
    %v2327 = vpop.f32.mrb[0].mxu0
    %v2328 = vadd.f32 %v2191, %v2327
    %v2329 = vpop.f32.mrb[0].mxu0
    %2330 = vdwg.mxu0
    %2331 = vmatprep.subr.mxu0 0.0
    %v2332 = vand.u32 %v1856, 4294901760
    %2333 = vmatpush1.msra.mxu0 %v2332
    %2334 = vmatprep.subr.mxu0 0.0
    %v2335 = vand.u32 %v1857, 4294901760
    %2336 = vmatpush1.msra.mxu0 %v2335
    %2337 = vmatprep.subr.mxu0 0.0
    %v2338 = vand.u32 %v1858, 4294901760
    %2339 = vmatpush1.msra.mxu0 %v2338
    %2340 = vmatprep.subr.mxu0 0.0
    %v2341 = vand.u32 %v1859, 4294901760
    %2342 = vmatpush1.msra.mxu0 %v2341
    %2343 = vmatprep.subr.mxu0 0.0
    %v2344 = vand.u32 %v1860, 4294901760
    %2345 = vmatpush1.msra.mxu0 %v2344
    %2346 = vmatprep.subr.mxu0 0.0
    %v2347 = vand.u32 %v1861, 4294901760
    %2348 = vmatpush1.msra.mxu0 %v2347
    %2349 = vmatprep.subr.mxu0 0.0
    %v2350 = vand.u32 %v1862, 4294901760
    %2351 = vmatpush1.msra.mxu0 %v2350
    %2352 = vmatprep.subr.mxu0 0.0
    %v2353 = vand.u32 %v1863, 4294901760
    %2354 = vmatpush1.msra.mxu0 %v2353
    %2355 = vmatprep.subr.mxu0 0.0
    %2356 = vmatpush1.msra.mxu0 0.0
    %2357 = vmatprep.subr.mxu0 0.0
    %2358 = vmatpush1.msra.mxu0 0.0
    %2359 = vmatprep.subr.mxu0 0.0
    %2360 = vmatpush1.msra.mxu0 0.0
    %2361 = vmatprep.subr.mxu0 0.0
    %2362 = vmatpush1.msra.mxu0 0.0
    %2363 = vmatprep.subr.mxu0 0.0
    %2364 = vmatpush1.msra.mxu0 0.0
    %2365 = vmatprep.subr.mxu0 0.0
    %2366 = vmatpush1.msra.mxu0 0.0
    %2367 = vmatprep.subr.mxu0 0.0
    %2368 = vmatpush1.msra.mxu0 0.0
    %2369 = vmatprep.subr.mxu0 0.0
    %2370 = vmatpush1.msra.mxu0 0.0
    %2371 = vmatprep.subr.mxu0 0.0
    %2372 = vmatpush1.msra.mxu0 0.0
    %2373 = vmatprep.subr.mxu0 0.0
    %2374 = vmatpush1.msra.mxu0 0.0
    %2375 = vmatprep.subr.mxu0 0.0
    %2376 = vmatpush1.msra.mxu0 0.0
    %2377 = vmatprep.subr.mxu0 0.0
    %2378 = vmatpush1.msra.mxu0 0.0
    %2379 = vmatprep.subr.mxu0 0.0
    %2380 = vmatpush1.msra.mxu0 0.0
    %2381 = vmatprep.subr.mxu0 0.0
    %2382 = vmatpush1.msra.mxu0 0.0
    %2383 = vmatprep.subr.mxu0 0.0
    %2384 = vmatpush1.msra.mxu0 0.0
    %2385 = vmatprep.subr.mxu0 0.0
    %2386 = vmatpush1.msra.mxu0 0.0
    %2387 = vmatprep.subr.mxu0 0.0
    %2388 = vmatpush1.msra.mxu0 0.0
    %2389 = vmatprep.subr.mxu0 0.0
    %2390 = vmatpush1.msra.mxu0 0.0
    %2391 = vmatprep.subr.mxu0 0.0
    %2392 = vmatpush1.msra.mxu0 0.0
    %2393 = vmatprep.subr.mxu0 0.0
    %2394 = vmatpush1.msra.mxu0 0.0
    %2395 = vmatprep.subr.mxu0 0.0
    %2396 = vmatpush1.msra.mxu0 0.0
    %2397 = vmatprep.subr.mxu0 0.0
    %2398 = vmatpush1.msra.mxu0 0.0
    %2399 = vmatprep.subr.mxu0 0.0
    %2400 = vmatpush1.msra.mxu0 0.0
    %2401 = vmatprep.subr.mxu0 0.0
    %2402 = vmatpush1.msra.mxu0 0.0
    %2403 = vmatprep.mubr.f32.mxu0 0.0
    %v2404 = vand.u32 %v1865, 4294901760
    %v2405 = vsub.f32 %v1865, %v2404
    %v2406 = vand.u32 %v2405, 4294901760
    %2407 = vmatmul.mubr.f32.gmra.mrb[0].mxu0 %v2406
    %v2408 = vpop.f32.mrb[0].mxu0
    %v2409 = vadd.f32 %v2279, %v2408
    %v2410 = vpop.f32.mrb[0].mxu0
    %2411 = vmatprep.mubr.f32.mxu0 0.0
    %v2412 = vand.u32 %v1868, 4294901760
    %v2413 = vsub.f32 %v1868, %v2412
    %v2414 = vand.u32 %v2413, 4294901760
    %2415 = vmatmul.mubr.f32.gmra.mrb[0].mxu0 %v2414
    %v2416 = vpop.f32.mrb[0].mxu0
    %v2417 = vadd.f32 %v2286, %v2416
    %v2418 = vpop.f32.mrb[0].mxu0
    %2419 = vmatprep.mubr.f32.mxu0 0.0
    %v2420 = vand.u32 %v1871, 4294901760
    %v2421 = vsub.f32 %v1871, %v2420
    %v2422 = vand.u32 %v2421, 4294901760
    %2423 = vmatmul.mubr.f32.gmra.mrb[0].mxu0 %v2422
    %v2424 = vpop.f32.mrb[0].mxu0
    %v2425 = vadd.f32 %v2293, %v2424
    %v2426 = vpop.f32.mrb[0].mxu0
    %2427 = vmatprep.mubr.f32.mxu0 0.0
    %v2428 = vand.u32 %v1874, 4294901760
    %v2429 = vsub.f32 %v1874, %v2428
    %v2430 = vand.u32 %v2429, 4294901760
    %2431 = vmatmul.mubr.f32.gmra.mrb[0].mxu0 %v2430
    %v2432 = vpop.f32.mrb[0].mxu0
    %v2433 = vadd.f32 %v2300, %v2432
    %v2434 = vpop.f32.mrb[0].mxu0
    %2435 = vmatprep.mubr.f32.mxu0 0.0
    %v2436 = vand.u32 %v1877, 4294901760
    %v2437 = vsub.f32 %v1877, %v2436
    %v2438 = vand.u32 %v2437, 4294901760
    %2439 = vmatmul.mubr.f32.gmra.mrb[0].mxu0 %v2438
    %v2440 = vpop.f32.mrb[0].mxu0
    %v2441 = vadd.f32 %v2307, %v2440
    %v2442 = vpop.f32.mrb[0].mxu0
    %2443 = vmatprep.mubr.f32.mxu0 0.0
    %v2444 = vand.u32 %v1880, 4294901760
    %v2445 = vsub.f32 %v1880, %v2444
    %v2446 = vand.u32 %v2445, 4294901760
    %2447 = vmatmul.mubr.f32.gmra.mrb[0].mxu0 %v2446
    %v2448 = vpop.f32.mrb[0].mxu0
    %v2449 = vadd.f32 %v2314, %v2448
    %v2450 = vpop.f32.mrb[0].mxu0
    %2451 = vmatprep.mubr.f32.mxu0 0.0
    %v2452 = vand.u32 %v1883, 4294901760
    %v2453 = vsub.f32 %v1883, %v2452
    %v2454 = vand.u32 %v2453, 4294901760
    %2455 = vmatmul.mubr.f32.gmra.mrb[0].mxu0 %v2454
    %v2456 = vpop.f32.mrb[0].mxu0
    %v2457 = vadd.f32 %v2321, %v2456
    %v2458 = vpop.f32.mrb[0].mxu0
    %2459 = vmatprep.mubr.f32.mxu0 0.0
    %v2460 = vand.u32 %v1886, 4294901760
    %v2461 = vsub.f32 %v1886, %v2460
    %v2462 = vand.u32 %v2461, 4294901760
    %2463 = vmatmul.mubr.f32.gmra.mrb[0].mxu0 %v2462
    %v2464 = vpop.f32.mrb[0].mxu0
    %v2465 = vadd.f32 %v2328, %v2464
    %v2466 = vpop.f32.mrb[0].mxu0
    %2467 = vdwg.mxu0
    %2468 = vmatprep.subr.mxu0 0.0
    %v2469 = vand.u32 %v1856, 4294901760
    %v2470 = vsub.f32 %v1856, %v2469
    %v2471 = vand.u32 %v2470, 4294901760
    %2472 = vmatpush1.msra.mxu0 %v2471
    %2473 = vmatprep.subr.mxu0 0.0
    %v2474 = vand.u32 %v1857, 4294901760
    %v2475 = vsub.f32 %v1857, %v2474
    %v2476 = vand.u32 %v2475, 4294901760
    %2477 = vmatpush1.msra.mxu0 %v2476
    %2478 = vmatprep.subr.mxu0 0.0
    %v2479 = vand.u32 %v1858, 4294901760
    %v2480 = vsub.f32 %v1858, %v2479
    %v2481 = vand.u32 %v2480, 4294901760
    %2482 = vmatpush1.msra.mxu0 %v2481
    %2483 = vmatprep.subr.mxu0 0.0
    %v2484 = vand.u32 %v1859, 4294901760
    %v2485 = vsub.f32 %v1859, %v2484
    %v2486 = vand.u32 %v2485, 4294901760
    %2487 = vmatpush1.msra.mxu0 %v2486
    %2488 = vmatprep.subr.mxu0 0.0
    %v2489 = vand.u32 %v1860, 4294901760
    %v2490 = vsub.f32 %v1860, %v2489
    %v2491 = vand.u32 %v2490, 4294901760
    %2492 = vmatpush1.msra.mxu0 %v2491
    %2493 = vmatprep.subr.mxu0 0.0
    %v2494 = vand.u32 %v1861, 4294901760
    %v2495 = vsub.f32 %v1861, %v2494
    %v2496 = vand.u32 %v2495, 4294901760
    %2497 = vmatpush1.msra.mxu0 %v2496
    %2498 = vmatprep.subr.mxu0 0.0
    %v2499 = vand.u32 %v1862, 4294901760
    %v2500 = vsub.f32 %v1862, %v2499
    %v2501 = vand.u32 %v2500, 4294901760
    %2502 = vmatpush1.msra.mxu0 %v2501
    %2503 = vmatprep.subr.mxu0 0.0
    %v2504 = vand.u32 %v1863, 4294901760
    %v2505 = vsub.f32 %v1863, %v2504
    %v2506 = vand.u32 %v2505, 4294901760
    %2507 = vmatpush1.msra.mxu0 %v2506
    %2508 = vmatprep.subr.mxu0 0.0
    %2509 = vmatpush1.msra.mxu0 0.0
    %2510 = vmatprep.subr.mxu0 0.0
    %2511 = vmatpush1.msra.mxu0 0.0
    %2512 = vmatprep.subr.mxu0 0.0
    %2513 = vmatpush1.msra.mxu0 0.0
    %2514 = vmatprep.subr.mxu0 0.0
    %2515 = vmatpush1.msra.mxu0 0.0
    %2516 = vmatprep.subr.mxu0 0.0
    %2517 = vmatpush1.msra.mxu0 0.0
    %2518 = vmatprep.subr.mxu0 0.0
    %2519 = vmatpush1.msra.mxu0 0.0
    %2520 = vmatprep.subr.mxu0 0.0
    %2521 = vmatpush1.msra.mxu0 0.0
    %2522 = vmatprep.subr.mxu0 0.0
    %2523 = vmatpush1.msra.mxu0 0.0
    %2524 = vmatprep.subr.mxu0 0.0
    %2525 = vmatpush1.msra.mxu0 0.0
    %2526 = vmatprep.subr.mxu0 0.0
    %2527 = vmatpush1.msra.mxu0 0.0
    %2528 = vmatprep.subr.mxu0 0.0
    %2529 = vmatpush1.msra.mxu0 0.0
    %2530 = vmatprep.subr.mxu0 0.0
    %2531 = vmatpush1.msra.mxu0 0.0
    %2532 = vmatprep.subr.mxu0 0.0
    %2533 = vmatpush1.msra.mxu0 0.0
    %2534 = vmatprep.subr.mxu0 0.0
    %2535 = vmatpush1.msra.mxu0 0.0
    %2536 = vmatprep.subr.mxu0 0.0
    %2537 = vmatpush1.msra.mxu0 0.0
    %2538 = vmatprep.subr.mxu0 0.0
    %2539 = vmatpush1.msra.mxu0 0.0
    %2540 = vmatprep.subr.mxu0 0.0
    %2541 = vmatpush1.msra.mxu0 0.0
    %2542 = vmatprep.subr.mxu0 0.0
    %2543 = vmatpush1.msra.mxu0 0.0
    %2544 = vmatprep.subr.mxu0 0.0
    %2545 = vmatpush1.msra.mxu0 0.0
    %2546 = vmatprep.subr.mxu0 0.0
    %2547 = vmatpush1.msra.mxu0 0.0
    %2548 = vmatprep.subr.mxu0 0.0
    %2549 = vmatpush1.msra.mxu0 0.0
    %2550 = vmatprep.subr.mxu0 0.0
    %2551 = vmatpush1.msra.mxu0 0.0
    %2552 = vmatprep.subr.mxu0 0.0
    %2553 = vmatpush1.msra.mxu0 0.0
    %2554 = vmatprep.subr.mxu0 0.0
    %2555 = vmatpush1.msra.mxu0 0.0
    %2556 = vmatprep.mubr.f32.mxu0 0.0
    %v2557 = vand.u32 %v1865, 4294901760
    %2558 = vmatmul.mubr.f32.gmra.mrb[0].mxu0 %v2557
    %v2559 = vpop.f32.mrb[0].mxu0
    %v2560 = vadd.f32 %v2409, %v2559
    %v2561 = vpop.f32.mrb[0].mxu0
    %2562 = vmatprep.mubr.f32.mxu0 0.0
    %v2563 = vand.u32 %v1868, 4294901760
    %2564 = vmatmul.mubr.f32.gmra.mrb[0].mxu0 %v2563
    %v2565 = vpop.f32.mrb[0].mxu0
    %v2566 = vadd.f32 %v2417, %v2565
    %v2567 = vpop.f32.mrb[0].mxu0
    %2568 = vmatprep.mubr.f32.mxu0 0.0
    %v2569 = vand.u32 %v1871, 4294901760
    %2570 = vmatmul.mubr.f32.gmra.mrb[0].mxu0 %v2569
    %v2571 = vpop.f32.mrb[0].mxu0
    %v2572 = vadd.f32 %v2425, %v2571
    %v2573 = vpop.f32.mrb[0].mxu0
    %2574 = vmatprep.mubr.f32.mxu0 0.0
    %v2575 = vand.u32 %v1874, 4294901760
    %2576 = vmatmul.mubr.f32.gmra.mrb[0].mxu0 %v2575
    %v2577 = vpop.f32.mrb[0].mxu0
    %v2578 = vadd.f32 %v2433, %v2577
    %v2579 = vpop.f32.mrb[0].mxu0
    %2580 = vmatprep.mubr.f32.mxu0 0.0
    %v2581 = vand.u32 %v1877, 4294901760
    %2582 = vmatmul.mubr.f32.gmra.mrb[0].mxu0 %v2581
    %v2583 = vpop.f32.mrb[0].mxu0
    %v2584 = vadd.f32 %v2441, %v2583
    %v2585 = vpop.f32.mrb[0].mxu0
    %2586 = vmatprep.mubr.f32.mxu0 0.0
    %v2587 = vand.u32 %v1880, 4294901760
    %2588 = vmatmul.mubr.f32.gmra.mrb[0].mxu0 %v2587
    %v2589 = vpop.f32.mrb[0].mxu0
    %v2590 = vadd.f32 %v2449, %v2589
    %v2591 = vpop.f32.mrb[0].mxu0
    %2592 = vmatprep.mubr.f32.mxu0 0.0
    %v2593 = vand.u32 %v1883, 4294901760
    %2594 = vmatmul.mubr.f32.gmra.mrb[0].mxu0 %v2593
    %v2595 = vpop.f32.mrb[0].mxu0
    %v2596 = vadd.f32 %v2457, %v2595
    %v2597 = vpop.f32.mrb[0].mxu0
    %2598 = vmatprep.mubr.f32.mxu0 0.0
    %v2599 = vand.u32 %v1886, 4294901760
    %2600 = vmatmul.mubr.f32.gmra.mrb[0].mxu0 %v2599
    %v2601 = vpop.f32.mrb[0].mxu0
    %v2602 = vadd.f32 %v2465, %v2601
    %v2603 = vpop.f32.mrb[0].mxu0
    %2604 = vdwg.mxu0
    %2605 = vmatprep.subr.mxu0 0.0
    %v2606 = vand.u32 %v1856, 4294901760
    %2607 = vmatpush1.msra.mxu0 %v2606
    %2608 = vmatprep.subr.mxu0 0.0
    %v2609 = vand.u32 %v1857, 4294901760
    %2610 = vmatpush1.msra.mxu0 %v2609
    %2611 = vmatprep.subr.mxu0 0.0
    %v2612 = vand.u32 %v1858, 4294901760
    %2613 = vmatpush1.msra.mxu0 %v2612
    %2614 = vmatprep.subr.mxu0 0.0
    %v2615 = vand.u32 %v1859, 4294901760
    %2616 = vmatpush1.msra.mxu0 %v2615
    %2617 = vmatprep.subr.mxu0 0.0
    %v2618 = vand.u32 %v1860, 4294901760
    %2619 = vmatpush1.msra.mxu0 %v2618
    %2620 = vmatprep.subr.mxu0 0.0
    %v2621 = vand.u32 %v1861, 4294901760
    %2622 = vmatpush1.msra.mxu0 %v2621
    %2623 = vmatprep.subr.mxu0 0.0
    %v2624 = vand.u32 %v1862, 4294901760
    %2625 = vmatpush1.msra.mxu0 %v2624
    %2626 = vmatprep.subr.mxu0 0.0
    %v2627 = vand.u32 %v1863, 4294901760
    %2628 = vmatpush1.msra.mxu0 %v2627
    %2629 = vmatprep.subr.mxu0 0.0
    %2630 = vmatpush1.msra.mxu0 0.0
    %2631 = vmatprep.subr.mxu0 0.0
    %2632 = vmatpush1.msra.mxu0 0.0
    %2633 = vmatprep.subr.mxu0 0.0
    %2634 = vmatpush1.msra.mxu0 0.0
    %2635 = vmatprep.subr.mxu0 0.0
    %2636 = vmatpush1.msra.mxu0 0.0
    %2637 = vmatprep.subr.mxu0 0.0
    %2638 = vmatpush1.msra.mxu0 0.0
    %2639 = vmatprep.subr.mxu0 0.0
    %2640 = vmatpush1.msra.mxu0 0.0
    %2641 = vmatprep.subr.mxu0 0.0
    %2642 = vmatpush1.msra.mxu0 0.0
    %2643 = vmatprep.subr.mxu0 0.0
    %2644 = vmatpush1.msra.mxu0 0.0
    %2645 = vmatprep.subr.mxu0 0.0
    %2646 = vmatpush1.msra.mxu0 0.0
    %2647 = vmatprep.subr.mxu0 0.0
    %2648 = vmatpush1.msra.mxu0 0.0
    %2649 = vmatprep.subr.mxu0 0.0
    %2650 = vmatpush1.msra.mxu0 0.0
    %2651 = vmatprep.subr.mxu0 0.0
    %2652 = vmatpush1.msra.mxu0 0.0
    %2653 = vmatprep.subr.mxu0 0.0
    %2654 = vmatpush1.msra.mxu0 0.0
    %2655 = vmatprep.subr.mxu0 0.0
    %2656 = vmatpush1.msra.mxu0 0.0
    %2657 = vmatprep.subr.mxu0 0.0
    %2658 = vmatpush1.msra.mxu0 0.0
    %2659 = vmatprep.subr.mxu0 0.0
    %2660 = vmatpush1.msra.mxu0 0.0
    %2661 = vmatprep.subr.mxu0 0.0
    %2662 = vmatpush1.msra.mxu0 0.0
    %2663 = vmatprep.subr.mxu0 0.0
    %2664 = vmatpush1.msra.mxu0 0.0
    %2665 = vmatprep.subr.mxu0 0.0
    %2666 = vmatpush1.msra.mxu0 0.0
    %2667 = vmatprep.subr.mxu0 0.0
    %2668 = vmatpush1.msra.mxu0 0.0
    %2669 = vmatprep.subr.mxu0 0.0
    %2670 = vmatpush1.msra.mxu0 0.0
    %2671 = vmatprep.subr.mxu0 0.0
    %2672 = vmatpush1.msra.mxu0 0.0
    %2673 = vmatprep.subr.mxu0 0.0
    %2674 = vmatpush1.msra.mxu0 0.0
    %2675 = vmatprep.subr.mxu0 0.0
    %2676 = vmatpush1.msra.mxu0 0.0
    %2677 = vmatprep.mubr.f32.mxu0 0.0
    %v2678 = vand.u32 %v1865, 4294901760
    %2679 = vmatmul.mubr.f32.gmra.mrb[0].mxu0 %v2678
    %v2680 = vpop.f32.mrb[0].mxu0
    %v2681 = vadd.f32 %v2560, %v2680
    %v2682 = vpop.f32.mrb[0].mxu0
    %2683 = vmatprep.mubr.f32.mxu0 0.0
    %v2684 = vand.u32 %v1868, 4294901760
    %2685 = vmatmul.mubr.f32.gmra.mrb[0].mxu0 %v2684
    %v2686 = vpop.f32.mrb[0].mxu0
    %v2687 = vadd.f32 %v2566, %v2686
    %v2688 = vpop.f32.mrb[0].mxu0
    %2689 = vmatprep.mubr.f32.mxu0 0.0
    %v2690 = vand.u32 %v1871, 4294901760
    %2691 = vmatmul.mubr.f32.gmra.mrb[0].mxu0 %v2690
    %v2692 = vpop.f32.mrb[0].mxu0
    %v2693 = vadd.f32 %v2572, %v2692
    %v2694 = vpop.f32.mrb[0].mxu0
    %2695 = vmatprep.mubr.f32.mxu0 0.0
    %v2696 = vand.u32 %v1874, 4294901760
    %2697 = vmatmul.mubr.f32.gmra.mrb[0].mxu0 %v2696
    %v2698 = vpop.f32.mrb[0].mxu0
    %v2699 = vadd.f32 %v2578, %v2698
    %v2700 = vpop.f32.mrb[0].mxu0
    %2701 = vmatprep.mubr.f32.mxu0 0.0
    %v2702 = vand.u32 %v1877, 4294901760
    %2703 = vmatmul.mubr.f32.gmra.mrb[0].mxu0 %v2702
    %v2704 = vpop.f32.mrb[0].mxu0
    %v2705 = vadd.f32 %v2584, %v2704
    %v2706 = vpop.f32.mrb[0].mxu0
    %2707 = vmatprep.mubr.f32.mxu0 0.0
    %v2708 = vand.u32 %v1880, 4294901760
    %2709 = vmatmul.mubr.f32.gmra.mrb[0].mxu0 %v2708
    %v2710 = vpop.f32.mrb[0].mxu0
    %v2711 = vadd.f32 %v2590, %v2710
    %v2712 = vpop.f32.mrb[0].mxu0
    %2713 = vmatprep.mubr.f32.mxu0 0.0
    %v2714 = vand.u32 %v1883, 4294901760
    %2715 = vmatmul.mubr.f32.gmra.mrb[0].mxu0 %v2714
    %v2716 = vpop.f32.mrb[0].mxu0
    %v2717 = vadd.f32 %v2596, %v2716
    %v2718 = vpop.f32.mrb[0].mxu0
    %2719 = vmatprep.mubr.f32.mxu0 0.0
    %v2720 = vand.u32 %v1886, 4294901760
    %2721 = vmatmul.mubr.f32.gmra.mrb[0].mxu0 %v2720
    %v2722 = vpop.f32.mrb[0].mxu0
    %v2723 = vadd.f32 %v2602, %v2722
    %v2724 = vpop.f32.mrb[0].mxu0
    %2725 = vdwg.mxu0
    %v2727 = vsel %vm107, %v970, 0
    %v2730 = vsel %vm107, %v971, 0
    %v2733 = vsel %vm107, %v972, 0
    %v2736 = vsel %vm107, %v973, 0
    %v2739 = vsel %vm107, %v974, 0
    %v2742 = vsel %vm107, %v975, 0
    %v2745 = vsel %vm107, %v976, 0
    %v2748 = vsel %vm107, %v977, 0
    %v2751 = vsel %vm107, %v1803, 0
    %v2754 = vsel %vm107, %v1809, 0
    %v2757 = vsel %vm107, %v1815, 0
    %v2760 = vsel %vm107, %v1821, 0
    %v2763 = vsel %vm107, %v1827, 0
    %v2766 = vsel %vm107, %v1833, 0
    %v2769 = vsel %vm107, %v1839, 0
    %v2772 = vsel %vm107, %v1845, 0
    %2774 = vmatprep.subr.mxu0 0.0
    %v2775 = vand.u32 %v2751, 4294901760
    %2776 = vmatpush1.xpose.msra.mxu0 %v2775
    %2777 = vmatprep.subr.mxu0 0.0
    %v2778 = vand.u32 %v2754, 4294901760
    %2779 = vmatpush1.xpose.msra.mxu0 %v2778
    %2780 = vmatprep.subr.mxu0 0.0
    %v2781 = vand.u32 %v2757, 4294901760
    %2782 = vmatpush1.xpose.msra.mxu0 %v2781
    %2783 = vmatprep.subr.mxu0 0.0
    %v2784 = vand.u32 %v2760, 4294901760
    %2785 = vmatpush1.xpose.msra.mxu0 %v2784
    %2786 = vmatprep.subr.mxu0 0.0
    %v2787 = vand.u32 %v2763, 4294901760
    %2788 = vmatpush1.xpose.msra.mxu0 %v2787
    %2789 = vmatprep.subr.mxu0 0.0
    %v2790 = vand.u32 %v2766, 4294901760
    %2791 = vmatpush1.xpose.msra.mxu0 %v2790
    %2792 = vmatprep.subr.mxu0 0.0
    %v2793 = vand.u32 %v2769, 4294901760
    %2794 = vmatpush1.xpose.msra.mxu0 %v2793
    %2795 = vmatprep.subr.mxu0 0.0
    %v2796 = vand.u32 %v2772, 4294901760
    %2797 = vmatpush1.xpose.msra.mxu0 %v2796
    %2798 = vmatprep.subr.mxu0 0.0
    %2799 = vmatpush1.xpose.msra.mxu0 0.0
    %2800 = vmatprep.subr.mxu0 0.0
    %2801 = vmatpush1.xpose.msra.mxu0 0.0
    %2802 = vmatprep.subr.mxu0 0.0
    %2803 = vmatpush1.xpose.msra.mxu0 0.0
    %2804 = vmatprep.subr.mxu0 0.0
    %2805 = vmatpush1.xpose.msra.mxu0 0.0
    %2806 = vmatprep.subr.mxu0 0.0
    %2807 = vmatpush1.xpose.msra.mxu0 0.0
    %2808 = vmatprep.subr.mxu0 0.0
    %2809 = vmatpush1.xpose.msra.mxu0 0.0
    %2810 = vmatprep.subr.mxu0 0.0
    %2811 = vmatpush1.xpose.msra.mxu0 0.0
    %2812 = vmatprep.subr.mxu0 0.0
    %2813 = vmatpush1.xpose.msra.mxu0 0.0
    %2814 = vmatprep.subr.mxu0 0.0
    %2815 = vmatpush1.xpose.msra.mxu0 0.0
    %2816 = vmatprep.subr.mxu0 0.0
    %2817 = vmatpush1.xpose.msra.mxu0 0.0
    %2818 = vmatprep.subr.mxu0 0.0
    %2819 = vmatpush1.xpose.msra.mxu0 0.0
    %2820 = vmatprep.subr.mxu0 0.0
    %2821 = vmatpush1.xpose.msra.mxu0 0.0
    %2822 = vmatprep.subr.mxu0 0.0
    %2823 = vmatpush1.xpose.msra.mxu0 0.0
    %2824 = vmatprep.subr.mxu0 0.0
    %2825 = vmatpush1.xpose.msra.mxu0 0.0
    %2826 = vmatprep.subr.mxu0 0.0
    %2827 = vmatpush1.xpose.msra.mxu0 0.0
    %2828 = vmatprep.subr.mxu0 0.0
    %2829 = vmatpush1.xpose.msra.mxu0 0.0
    %2830 = vmatprep.subr.mxu0 0.0
    %2831 = vmatpush1.xpose.msra.mxu0 0.0
    %2832 = vmatprep.subr.mxu0 0.0
    %2833 = vmatpush1.xpose.msra.mxu0 0.0
    %2834 = vmatprep.subr.mxu0 0.0
    %2835 = vmatpush1.xpose.msra.mxu0 0.0
    %2836 = vmatprep.subr.mxu0 0.0
    %2837 = vmatpush1.xpose.msra.mxu0 0.0
    %2838 = vmatprep.subr.mxu0 0.0
    %2839 = vmatpush1.xpose.msra.mxu0 0.0
    %2840 = vmatprep.subr.mxu0 0.0
    %2841 = vmatpush1.xpose.msra.mxu0 0.0
    %2842 = vmatprep.subr.mxu0 0.0
    %2843 = vmatpush1.xpose.msra.mxu0 0.0
    %2844 = vmatprep.subr.mxu0 0.0
    %2845 = vmatpush1.xpose.msra.mxu0 0.0
    %2846 = vmatprep.mubr.f32.mxu0 0.0
    %v2847 = vand.u32 %v2727, 4294901760
    %v2848 = vsub.f32 %v2727, %v2847
    %v2849 = vand.u32 %v2848, 4294901760
    %v2850 = vsub.f32 %v2848, %v2849
    %v2851 = vand.u32 %v2850, 4294901760
    %2852 = vmatmul.mubr.f32.gmra.mrb[0].mxu0 %v2851
    %v2853 = vpop.f32.mrb[0].mxu0
    %v2854 = vadd.f32 0.0, %v2853
    %v2855 = vpop.f32.mrb[0].mxu0
    %2856 = vmatprep.mubr.f32.mxu0 0.0
    %v2857 = vand.u32 %v2730, 4294901760
    %v2858 = vsub.f32 %v2730, %v2857
    %v2859 = vand.u32 %v2858, 4294901760
    %v2860 = vsub.f32 %v2858, %v2859
    %v2861 = vand.u32 %v2860, 4294901760
    %2862 = vmatmul.mubr.f32.gmra.mrb[0].mxu0 %v2861
    %v2863 = vpop.f32.mrb[0].mxu0
    %v2864 = vadd.f32 0.0, %v2863
    %v2865 = vpop.f32.mrb[0].mxu0
    %2866 = vmatprep.mubr.f32.mxu0 0.0
    %v2867 = vand.u32 %v2733, 4294901760
    %v2868 = vsub.f32 %v2733, %v2867
    %v2869 = vand.u32 %v2868, 4294901760
    %v2870 = vsub.f32 %v2868, %v2869
    %v2871 = vand.u32 %v2870, 4294901760
    %2872 = vmatmul.mubr.f32.gmra.mrb[0].mxu0 %v2871
    %v2873 = vpop.f32.mrb[0].mxu0
    %v2874 = vadd.f32 0.0, %v2873
    %v2875 = vpop.f32.mrb[0].mxu0
    %2876 = vmatprep.mubr.f32.mxu0 0.0
    %v2877 = vand.u32 %v2736, 4294901760
    %v2878 = vsub.f32 %v2736, %v2877
    %v2879 = vand.u32 %v2878, 4294901760
    %v2880 = vsub.f32 %v2878, %v2879
    %v2881 = vand.u32 %v2880, 4294901760
    %2882 = vmatmul.mubr.f32.gmra.mrb[0].mxu0 %v2881
    %v2883 = vpop.f32.mrb[0].mxu0
    %v2884 = vadd.f32 0.0, %v2883
    %v2885 = vpop.f32.mrb[0].mxu0
    %2886 = vmatprep.mubr.f32.mxu0 0.0
    %v2887 = vand.u32 %v2739, 4294901760
    %v2888 = vsub.f32 %v2739, %v2887
    %v2889 = vand.u32 %v2888, 4294901760
    %v2890 = vsub.f32 %v2888, %v2889
    %v2891 = vand.u32 %v2890, 4294901760
    %2892 = vmatmul.mubr.f32.gmra.mrb[0].mxu0 %v2891
    %v2893 = vpop.f32.mrb[0].mxu0
    %v2894 = vadd.f32 0.0, %v2893
    %v2895 = vpop.f32.mrb[0].mxu0
    %2896 = vmatprep.mubr.f32.mxu0 0.0
    %v2897 = vand.u32 %v2742, 4294901760
    %v2898 = vsub.f32 %v2742, %v2897
    %v2899 = vand.u32 %v2898, 4294901760
    %v2900 = vsub.f32 %v2898, %v2899
    %v2901 = vand.u32 %v2900, 4294901760
    %2902 = vmatmul.mubr.f32.gmra.mrb[0].mxu0 %v2901
    %v2903 = vpop.f32.mrb[0].mxu0
    %v2904 = vadd.f32 0.0, %v2903
    %v2905 = vpop.f32.mrb[0].mxu0
    %2906 = vmatprep.mubr.f32.mxu0 0.0
    %v2907 = vand.u32 %v2745, 4294901760
    %v2908 = vsub.f32 %v2745, %v2907
    %v2909 = vand.u32 %v2908, 4294901760
    %v2910 = vsub.f32 %v2908, %v2909
    %v2911 = vand.u32 %v2910, 4294901760
    %2912 = vmatmul.mubr.f32.gmra.mrb[0].mxu0 %v2911
    %v2913 = vpop.f32.mrb[0].mxu0
    %v2914 = vadd.f32 0.0, %v2913
    %v2915 = vpop.f32.mrb[0].mxu0
    %2916 = vmatprep.mubr.f32.mxu0 0.0
    %v2917 = vand.u32 %v2748, 4294901760
    %v2918 = vsub.f32 %v2748, %v2917
    %v2919 = vand.u32 %v2918, 4294901760
    %v2920 = vsub.f32 %v2918, %v2919
    %v2921 = vand.u32 %v2920, 4294901760
    %2922 = vmatmul.mubr.f32.gmra.mrb[0].mxu0 %v2921
    %v2923 = vpop.f32.mrb[0].mxu0
    %v2924 = vadd.f32 0.0, %v2923
    %v2925 = vpop.f32.mrb[0].mxu0
    %2926 = vdwg.mxu0
    %2927 = vmatprep.subr.mxu0 0.0
    %v2928 = vand.u32 %v2751, 4294901760
    %v2929 = vsub.f32 %v2751, %v2928
    %v2930 = vand.u32 %v2929, 4294901760
    %v2931 = vsub.f32 %v2929, %v2930
    %v2932 = vand.u32 %v2931, 4294901760
    %2933 = vmatpush1.xpose.msra.mxu0 %v2932
    %2934 = vmatprep.subr.mxu0 0.0
    %v2935 = vand.u32 %v2754, 4294901760
    %v2936 = vsub.f32 %v2754, %v2935
    %v2937 = vand.u32 %v2936, 4294901760
    %v2938 = vsub.f32 %v2936, %v2937
    %v2939 = vand.u32 %v2938, 4294901760
    %2940 = vmatpush1.xpose.msra.mxu0 %v2939
    %2941 = vmatprep.subr.mxu0 0.0
    %v2942 = vand.u32 %v2757, 4294901760
    %v2943 = vsub.f32 %v2757, %v2942
    %v2944 = vand.u32 %v2943, 4294901760
    %v2945 = vsub.f32 %v2943, %v2944
    %v2946 = vand.u32 %v2945, 4294901760
    %2947 = vmatpush1.xpose.msra.mxu0 %v2946
    %2948 = vmatprep.subr.mxu0 0.0
    %v2949 = vand.u32 %v2760, 4294901760
    %v2950 = vsub.f32 %v2760, %v2949
    %v2951 = vand.u32 %v2950, 4294901760
    %v2952 = vsub.f32 %v2950, %v2951
    %v2953 = vand.u32 %v2952, 4294901760
    %2954 = vmatpush1.xpose.msra.mxu0 %v2953
    %2955 = vmatprep.subr.mxu0 0.0
    %v2956 = vand.u32 %v2763, 4294901760
    %v2957 = vsub.f32 %v2763, %v2956
    %v2958 = vand.u32 %v2957, 4294901760
    %v2959 = vsub.f32 %v2957, %v2958
    %v2960 = vand.u32 %v2959, 4294901760
    %2961 = vmatpush1.xpose.msra.mxu0 %v2960
    %2962 = vmatprep.subr.mxu0 0.0
    %v2963 = vand.u32 %v2766, 4294901760
    %v2964 = vsub.f32 %v2766, %v2963
    %v2965 = vand.u32 %v2964, 4294901760
    %v2966 = vsub.f32 %v2964, %v2965
    %v2967 = vand.u32 %v2966, 4294901760
    %2968 = vmatpush1.xpose.msra.mxu0 %v2967
    %2969 = vmatprep.subr.mxu0 0.0
    %v2970 = vand.u32 %v2769, 4294901760
    %v2971 = vsub.f32 %v2769, %v2970
    %v2972 = vand.u32 %v2971, 4294901760
    %v2973 = vsub.f32 %v2971, %v2972
    %v2974 = vand.u32 %v2973, 4294901760
    %2975 = vmatpush1.xpose.msra.mxu0 %v2974
    %2976 = vmatprep.subr.mxu0 0.0
    %v2977 = vand.u32 %v2772, 4294901760
    %v2978 = vsub.f32 %v2772, %v2977
    %v2979 = vand.u32 %v2978, 4294901760
    %v2980 = vsub.f32 %v2978, %v2979
    %v2981 = vand.u32 %v2980, 4294901760
    %2982 = vmatpush1.xpose.msra.mxu0 %v2981
    %2983 = vmatprep.subr.mxu0 0.0
    %2984 = vmatpush1.xpose.msra.mxu0 0.0
    %2985 = vmatprep.subr.mxu0 0.0
    %2986 = vmatpush1.xpose.msra.mxu0 0.0
    %2987 = vmatprep.subr.mxu0 0.0
    %2988 = vmatpush1.xpose.msra.mxu0 0.0
    %2989 = vmatprep.subr.mxu0 0.0
    %2990 = vmatpush1.xpose.msra.mxu0 0.0
    %2991 = vmatprep.subr.mxu0 0.0
    %2992 = vmatpush1.xpose.msra.mxu0 0.0
    %2993 = vmatprep.subr.mxu0 0.0
    %2994 = vmatpush1.xpose.msra.mxu0 0.0
    %2995 = vmatprep.subr.mxu0 0.0
    %2996 = vmatpush1.xpose.msra.mxu0 0.0
    %2997 = vmatprep.subr.mxu0 0.0
    %2998 = vmatpush1.xpose.msra.mxu0 0.0
    %2999 = vmatprep.subr.mxu0 0.0
    %3000 = vmatpush1.xpose.msra.mxu0 0.0
    %3001 = vmatprep.subr.mxu0 0.0
    %3002 = vmatpush1.xpose.msra.mxu0 0.0
    %3003 = vmatprep.subr.mxu0 0.0
    %3004 = vmatpush1.xpose.msra.mxu0 0.0
    %3005 = vmatprep.subr.mxu0 0.0
    %3006 = vmatpush1.xpose.msra.mxu0 0.0
    %3007 = vmatprep.subr.mxu0 0.0
    %3008 = vmatpush1.xpose.msra.mxu0 0.0
    %3009 = vmatprep.subr.mxu0 0.0
    %3010 = vmatpush1.xpose.msra.mxu0 0.0
    %3011 = vmatprep.subr.mxu0 0.0
    %3012 = vmatpush1.xpose.msra.mxu0 0.0
    %3013 = vmatprep.subr.mxu0 0.0
    %3014 = vmatpush1.xpose.msra.mxu0 0.0
    %3015 = vmatprep.subr.mxu0 0.0
    %3016 = vmatpush1.xpose.msra.mxu0 0.0
    %3017 = vmatprep.subr.mxu0 0.0
    %3018 = vmatpush1.xpose.msra.mxu0 0.0
    %3019 = vmatprep.subr.mxu0 0.0
    %3020 = vmatpush1.xpose.msra.mxu0 0.0
    %3021 = vmatprep.subr.mxu0 0.0
    %3022 = vmatpush1.xpose.msra.mxu0 0.0
    %3023 = vmatprep.subr.mxu0 0.0
    %3024 = vmatpush1.xpose.msra.mxu0 0.0
    %3025 = vmatprep.subr.mxu0 0.0
    %3026 = vmatpush1.xpose.msra.mxu0 0.0
    %3027 = vmatprep.subr.mxu0 0.0
    %3028 = vmatpush1.xpose.msra.mxu0 0.0
    %3029 = vmatprep.subr.mxu0 0.0
    %3030 = vmatpush1.xpose.msra.mxu0 0.0
    %3031 = vmatprep.mubr.f32.mxu0 0.0
    %v3032 = vand.u32 %v2727, 4294901760
    %3033 = vmatmul.mubr.f32.gmra.mrb[0].mxu0 %v3032
    %v3034 = vpop.f32.mrb[0].mxu0
    %v3035 = vadd.f32 %v2854, %v3034
    %v3036 = vpop.f32.mrb[0].mxu0
    %3037 = vmatprep.mubr.f32.mxu0 0.0
    %v3038 = vand.u32 %v2730, 4294901760
    %3039 = vmatmul.mubr.f32.gmra.mrb[0].mxu0 %v3038
    %v3040 = vpop.f32.mrb[0].mxu0
    %v3041 = vadd.f32 %v2864, %v3040
    %v3042 = vpop.f32.mrb[0].mxu0
    %3043 = vmatprep.mubr.f32.mxu0 0.0
    %v3044 = vand.u32 %v2733, 4294901760
    %3045 = vmatmul.mubr.f32.gmra.mrb[0].mxu0 %v3044
    %v3046 = vpop.f32.mrb[0].mxu0
    %v3047 = vadd.f32 %v2874, %v3046
    %v3048 = vpop.f32.mrb[0].mxu0
    %3049 = vmatprep.mubr.f32.mxu0 0.0
    %v3050 = vand.u32 %v2736, 4294901760
    %3051 = vmatmul.mubr.f32.gmra.mrb[0].mxu0 %v3050
    %v3052 = vpop.f32.mrb[0].mxu0
    %v3053 = vadd.f32 %v2884, %v3052
    %v3054 = vpop.f32.mrb[0].mxu0
    %3055 = vmatprep.mubr.f32.mxu0 0.0
    %v3056 = vand.u32 %v2739, 4294901760
    %3057 = vmatmul.mubr.f32.gmra.mrb[0].mxu0 %v3056
    %v3058 = vpop.f32.mrb[0].mxu0
    %v3059 = vadd.f32 %v2894, %v3058
    %v3060 = vpop.f32.mrb[0].mxu0
    %3061 = vmatprep.mubr.f32.mxu0 0.0
    %v3062 = vand.u32 %v2742, 4294901760
    %3063 = vmatmul.mubr.f32.gmra.mrb[0].mxu0 %v3062
    %v3064 = vpop.f32.mrb[0].mxu0
    %v3065 = vadd.f32 %v2904, %v3064
    %v3066 = vpop.f32.mrb[0].mxu0
    %3067 = vmatprep.mubr.f32.mxu0 0.0
    %v3068 = vand.u32 %v2745, 4294901760
    %3069 = vmatmul.mubr.f32.gmra.mrb[0].mxu0 %v3068
    %v3070 = vpop.f32.mrb[0].mxu0
    %v3071 = vadd.f32 %v2914, %v3070
    %v3072 = vpop.f32.mrb[0].mxu0
    %3073 = vmatprep.mubr.f32.mxu0 0.0
    %v3074 = vand.u32 %v2748, 4294901760
    %3075 = vmatmul.mubr.f32.gmra.mrb[0].mxu0 %v3074
    %v3076 = vpop.f32.mrb[0].mxu0
    %v3077 = vadd.f32 %v2924, %v3076
    %v3078 = vpop.f32.mrb[0].mxu0
    %3079 = vdwg.mxu0
    %3080 = vmatprep.subr.mxu0 0.0
    %v3081 = vand.u32 %v2751, 4294901760
    %v3082 = vsub.f32 %v2751, %v3081
    %3083 = vmatpush1.xpose.msra.mxu0 %v3082
    %3084 = vmatprep.subr.mxu0 0.0
    %v3085 = vand.u32 %v2754, 4294901760
    %v3086 = vsub.f32 %v2754, %v3085
    %3087 = vmatpush1.xpose.msra.mxu0 %v3086
    %3088 = vmatprep.subr.mxu0 0.0
    %v3089 = vand.u32 %v2757, 4294901760
    %v3090 = vsub.f32 %v2757, %v3089
    %3091 = vmatpush1.xpose.msra.mxu0 %v3090
    %3092 = vmatprep.subr.mxu0 0.0
    %v3093 = vand.u32 %v2760, 4294901760
    %v3094 = vsub.f32 %v2760, %v3093
    %3095 = vmatpush1.xpose.msra.mxu0 %v3094
    %3096 = vmatprep.subr.mxu0 0.0
    %v3097 = vand.u32 %v2763, 4294901760
    %v3098 = vsub.f32 %v2763, %v3097
    %3099 = vmatpush1.xpose.msra.mxu0 %v3098
    %3100 = vmatprep.subr.mxu0 0.0
    %v3101 = vand.u32 %v2766, 4294901760
    %v3102 = vsub.f32 %v2766, %v3101
    %3103 = vmatpush1.xpose.msra.mxu0 %v3102
    %3104 = vmatprep.subr.mxu0 0.0
    %v3105 = vand.u32 %v2769, 4294901760
    %v3106 = vsub.f32 %v2769, %v3105
    %3107 = vmatpush1.xpose.msra.mxu0 %v3106
    %3108 = vmatprep.subr.mxu0 0.0
    %v3109 = vand.u32 %v2772, 4294901760
    %v3110 = vsub.f32 %v2772, %v3109
    %3111 = vmatpush1.xpose.msra.mxu0 %v3110
    %3112 = vmatprep.subr.mxu0 0.0
    %3113 = vmatpush1.xpose.msra.mxu0 0.0
    %3114 = vmatprep.subr.mxu0 0.0
    %3115 = vmatpush1.xpose.msra.mxu0 0.0
    %3116 = vmatprep.subr.mxu0 0.0
    %3117 = vmatpush1.xpose.msra.mxu0 0.0
    %3118 = vmatprep.subr.mxu0 0.0
    %3119 = vmatpush1.xpose.msra.mxu0 0.0
    %3120 = vmatprep.subr.mxu0 0.0
    %3121 = vmatpush1.xpose.msra.mxu0 0.0
    %3122 = vmatprep.subr.mxu0 0.0
    %3123 = vmatpush1.xpose.msra.mxu0 0.0
    %3124 = vmatprep.subr.mxu0 0.0
    %3125 = vmatpush1.xpose.msra.mxu0 0.0
    %3126 = vmatprep.subr.mxu0 0.0
    %3127 = vmatpush1.xpose.msra.mxu0 0.0
    %3128 = vmatprep.subr.mxu0 0.0
    %3129 = vmatpush1.xpose.msra.mxu0 0.0
    %3130 = vmatprep.subr.mxu0 0.0
    %3131 = vmatpush1.xpose.msra.mxu0 0.0
    %3132 = vmatprep.subr.mxu0 0.0
    %3133 = vmatpush1.xpose.msra.mxu0 0.0
    %3134 = vmatprep.subr.mxu0 0.0
    %3135 = vmatpush1.xpose.msra.mxu0 0.0
    %3136 = vmatprep.subr.mxu0 0.0
    %3137 = vmatpush1.xpose.msra.mxu0 0.0
    %3138 = vmatprep.subr.mxu0 0.0
    %3139 = vmatpush1.xpose.msra.mxu0 0.0
    %3140 = vmatprep.subr.mxu0 0.0
    %3141 = vmatpush1.xpose.msra.mxu0 0.0
    %3142 = vmatprep.subr.mxu0 0.0
    %3143 = vmatpush1.xpose.msra.mxu0 0.0
    %3144 = vmatprep.subr.mxu0 0.0
    %3145 = vmatpush1.xpose.msra.mxu0 0.0
    %3146 = vmatprep.subr.mxu0 0.0
    %3147 = vmatpush1.xpose.msra.mxu0 0.0
    %3148 = vmatprep.subr.mxu0 0.0
    %3149 = vmatpush1.xpose.msra.mxu0 0.0
    %3150 = vmatprep.subr.mxu0 0.0
    %3151 = vmatpush1.xpose.msra.mxu0 0.0
    %3152 = vmatprep.subr.mxu0 0.0
    %3153 = vmatpush1.xpose.msra.mxu0 0.0
    %3154 = vmatprep.subr.mxu0 0.0
    %3155 = vmatpush1.xpose.msra.mxu0 0.0
    %3156 = vmatprep.subr.mxu0 0.0
    %3157 = vmatpush1.xpose.msra.mxu0 0.0
    %3158 = vmatprep.subr.mxu0 0.0
    %3159 = vmatpush1.xpose.msra.mxu0 0.0
    %3160 = vmatprep.mubr.f32.mxu0 0.0
    %v3161 = vand.u32 %v2727, 4294901760
    %v3162 = vsub.f32 %v2727, %v3161
    %3163 = vmatmul.mubr.f32.gmra.mrb[0].mxu0 %v3162
    %v3164 = vpop.f32.mrb[0].mxu0
    %v3165 = vadd.f32 %v3035, %v3164
    %v3166 = vpop.f32.mrb[0].mxu0
    %3167 = vmatprep.mubr.f32.mxu0 0.0
    %v3168 = vand.u32 %v2730, 4294901760
    %v3169 = vsub.f32 %v2730, %v3168
    %3170 = vmatmul.mubr.f32.gmra.mrb[0].mxu0 %v3169
    %v3171 = vpop.f32.mrb[0].mxu0
    %v3172 = vadd.f32 %v3041, %v3171
    %v3173 = vpop.f32.mrb[0].mxu0
    %3174 = vmatprep.mubr.f32.mxu0 0.0
    %v3175 = vand.u32 %v2733, 4294901760
    %v3176 = vsub.f32 %v2733, %v3175
    %3177 = vmatmul.mubr.f32.gmra.mrb[0].mxu0 %v3176
    %v3178 = vpop.f32.mrb[0].mxu0
    %v3179 = vadd.f32 %v3047, %v3178
    %v3180 = vpop.f32.mrb[0].mxu0
    %3181 = vmatprep.mubr.f32.mxu0 0.0
    %v3182 = vand.u32 %v2736, 4294901760
    %v3183 = vsub.f32 %v2736, %v3182
    %3184 = vmatmul.mubr.f32.gmra.mrb[0].mxu0 %v3183
    %v3185 = vpop.f32.mrb[0].mxu0
    %v3186 = vadd.f32 %v3053, %v3185
    %v3187 = vpop.f32.mrb[0].mxu0
    %3188 = vmatprep.mubr.f32.mxu0 0.0
    %v3189 = vand.u32 %v2739, 4294901760
    %v3190 = vsub.f32 %v2739, %v3189
    %3191 = vmatmul.mubr.f32.gmra.mrb[0].mxu0 %v3190
    %v3192 = vpop.f32.mrb[0].mxu0
    %v3193 = vadd.f32 %v3059, %v3192
    %v3194 = vpop.f32.mrb[0].mxu0
    %3195 = vmatprep.mubr.f32.mxu0 0.0
    %v3196 = vand.u32 %v2742, 4294901760
    %v3197 = vsub.f32 %v2742, %v3196
    %3198 = vmatmul.mubr.f32.gmra.mrb[0].mxu0 %v3197
    %v3199 = vpop.f32.mrb[0].mxu0
    %v3200 = vadd.f32 %v3065, %v3199
    %v3201 = vpop.f32.mrb[0].mxu0
    %3202 = vmatprep.mubr.f32.mxu0 0.0
    %v3203 = vand.u32 %v2745, 4294901760
    %v3204 = vsub.f32 %v2745, %v3203
    %3205 = vmatmul.mubr.f32.gmra.mrb[0].mxu0 %v3204
    %v3206 = vpop.f32.mrb[0].mxu0
    %v3207 = vadd.f32 %v3071, %v3206
    %v3208 = vpop.f32.mrb[0].mxu0
    %3209 = vmatprep.mubr.f32.mxu0 0.0
    %v3210 = vand.u32 %v2748, 4294901760
    %v3211 = vsub.f32 %v2748, %v3210
    %3212 = vmatmul.mubr.f32.gmra.mrb[0].mxu0 %v3211
    %v3213 = vpop.f32.mrb[0].mxu0
    %v3214 = vadd.f32 %v3077, %v3213
    %v3215 = vpop.f32.mrb[0].mxu0
    %3216 = vdwg.mxu0
    %3217 = vmatprep.subr.mxu0 0.0
    %v3218 = vand.u32 %v2751, 4294901760
    %3219 = vmatpush1.xpose.msra.mxu0 %v3218
    %3220 = vmatprep.subr.mxu0 0.0
    %v3221 = vand.u32 %v2754, 4294901760
    %3222 = vmatpush1.xpose.msra.mxu0 %v3221
    %3223 = vmatprep.subr.mxu0 0.0
    %v3224 = vand.u32 %v2757, 4294901760
    %3225 = vmatpush1.xpose.msra.mxu0 %v3224
    %3226 = vmatprep.subr.mxu0 0.0
    %v3227 = vand.u32 %v2760, 4294901760
    %3228 = vmatpush1.xpose.msra.mxu0 %v3227
    %3229 = vmatprep.subr.mxu0 0.0
    %v3230 = vand.u32 %v2763, 4294901760
    %3231 = vmatpush1.xpose.msra.mxu0 %v3230
    %3232 = vmatprep.subr.mxu0 0.0
    %v3233 = vand.u32 %v2766, 4294901760
    %3234 = vmatpush1.xpose.msra.mxu0 %v3233
    %3235 = vmatprep.subr.mxu0 0.0
    %v3236 = vand.u32 %v2769, 4294901760
    %3237 = vmatpush1.xpose.msra.mxu0 %v3236
    %3238 = vmatprep.subr.mxu0 0.0
    %v3239 = vand.u32 %v2772, 4294901760
    %3240 = vmatpush1.xpose.msra.mxu0 %v3239
    %3241 = vmatprep.subr.mxu0 0.0
    %3242 = vmatpush1.xpose.msra.mxu0 0.0
    %3243 = vmatprep.subr.mxu0 0.0
    %3244 = vmatpush1.xpose.msra.mxu0 0.0
    %3245 = vmatprep.subr.mxu0 0.0
    %3246 = vmatpush1.xpose.msra.mxu0 0.0
    %3247 = vmatprep.subr.mxu0 0.0
    %3248 = vmatpush1.xpose.msra.mxu0 0.0
    %3249 = vmatprep.subr.mxu0 0.0
    %3250 = vmatpush1.xpose.msra.mxu0 0.0
    %3251 = vmatprep.subr.mxu0 0.0
    %3252 = vmatpush1.xpose.msra.mxu0 0.0
    %3253 = vmatprep.subr.mxu0 0.0
    %3254 = vmatpush1.xpose.msra.mxu0 0.0
    %3255 = vmatprep.subr.mxu0 0.0
    %3256 = vmatpush1.xpose.msra.mxu0 0.0
    %3257 = vmatprep.subr.mxu0 0.0
    %3258 = vmatpush1.xpose.msra.mxu0 0.0
    %3259 = vmatprep.subr.mxu0 0.0
    %3260 = vmatpush1.xpose.msra.mxu0 0.0
    %3261 = vmatprep.subr.mxu0 0.0
    %3262 = vmatpush1.xpose.msra.mxu0 0.0
    %3263 = vmatprep.subr.mxu0 0.0
    %3264 = vmatpush1.xpose.msra.mxu0 0.0
    %3265 = vmatprep.subr.mxu0 0.0
    %3266 = vmatpush1.xpose.msra.mxu0 0.0
    %3267 = vmatprep.subr.mxu0 0.0
    %3268 = vmatpush1.xpose.msra.mxu0 0.0
    %3269 = vmatprep.subr.mxu0 0.0
    %3270 = vmatpush1.xpose.msra.mxu0 0.0
    %3271 = vmatprep.subr.mxu0 0.0
    %3272 = vmatpush1.xpose.msra.mxu0 0.0
    %3273 = vmatprep.subr.mxu0 0.0
    %3274 = vmatpush1.xpose.msra.mxu0 0.0
    %3275 = vmatprep.subr.mxu0 0.0
    %3276 = vmatpush1.xpose.msra.mxu0 0.0
    %3277 = vmatprep.subr.mxu0 0.0
    %3278 = vmatpush1.xpose.msra.mxu0 0.0
    %3279 = vmatprep.subr.mxu0 0.0
    %3280 = vmatpush1.xpose.msra.mxu0 0.0
    %3281 = vmatprep.subr.mxu0 0.0
    %3282 = vmatpush1.xpose.msra.mxu0 0.0
    %3283 = vmatprep.subr.mxu0 0.0
    %3284 = vmatpush1.xpose.msra.mxu0 0.0
    %3285 = vmatprep.subr.mxu0 0.0
    %3286 = vmatpush1.xpose.msra.mxu0 0.0
    %3287 = vmatprep.subr.mxu0 0.0
    %3288 = vmatpush1.xpose.msra.mxu0 0.0
    %3289 = vmatprep.mubr.f32.mxu0 0.0
    %v3290 = vand.u32 %v2727, 4294901760
    %v3291 = vsub.f32 %v2727, %v3290
    %v3292 = vand.u32 %v3291, 4294901760
    %3293 = vmatmul.mubr.f32.gmra.mrb[0].mxu0 %v3292
    %v3294 = vpop.f32.mrb[0].mxu0
    %v3295 = vadd.f32 %v3165, %v3294
    %v3296 = vpop.f32.mrb[0].mxu0
    %3297 = vmatprep.mubr.f32.mxu0 0.0
    %v3298 = vand.u32 %v2730, 4294901760
    %v3299 = vsub.f32 %v2730, %v3298
    %v3300 = vand.u32 %v3299, 4294901760
    %3301 = vmatmul.mubr.f32.gmra.mrb[0].mxu0 %v3300
    %v3302 = vpop.f32.mrb[0].mxu0
    %v3303 = vadd.f32 %v3172, %v3302
    %v3304 = vpop.f32.mrb[0].mxu0
    %3305 = vmatprep.mubr.f32.mxu0 0.0
    %v3306 = vand.u32 %v2733, 4294901760
    %v3307 = vsub.f32 %v2733, %v3306
    %v3308 = vand.u32 %v3307, 4294901760
    %3309 = vmatmul.mubr.f32.gmra.mrb[0].mxu0 %v3308
    %v3310 = vpop.f32.mrb[0].mxu0
    %v3311 = vadd.f32 %v3179, %v3310
    %v3312 = vpop.f32.mrb[0].mxu0
    %3313 = vmatprep.mubr.f32.mxu0 0.0
    %v3314 = vand.u32 %v2736, 4294901760
    %v3315 = vsub.f32 %v2736, %v3314
    %v3316 = vand.u32 %v3315, 4294901760
    %3317 = vmatmul.mubr.f32.gmra.mrb[0].mxu0 %v3316
    %v3318 = vpop.f32.mrb[0].mxu0
    %v3319 = vadd.f32 %v3186, %v3318
    %v3320 = vpop.f32.mrb[0].mxu0
    %3321 = vmatprep.mubr.f32.mxu0 0.0
    %v3322 = vand.u32 %v2739, 4294901760
    %v3323 = vsub.f32 %v2739, %v3322
    %v3324 = vand.u32 %v3323, 4294901760
    %3325 = vmatmul.mubr.f32.gmra.mrb[0].mxu0 %v3324
    %v3326 = vpop.f32.mrb[0].mxu0
    %v3327 = vadd.f32 %v3193, %v3326
    %v3328 = vpop.f32.mrb[0].mxu0
    %3329 = vmatprep.mubr.f32.mxu0 0.0
    %v3330 = vand.u32 %v2742, 4294901760
    %v3331 = vsub.f32 %v2742, %v3330
    %v3332 = vand.u32 %v3331, 4294901760
    %3333 = vmatmul.mubr.f32.gmra.mrb[0].mxu0 %v3332
    %v3334 = vpop.f32.mrb[0].mxu0
    %v3335 = vadd.f32 %v3200, %v3334
    %v3336 = vpop.f32.mrb[0].mxu0
    %3337 = vmatprep.mubr.f32.mxu0 0.0
    %v3338 = vand.u32 %v2745, 4294901760
    %v3339 = vsub.f32 %v2745, %v3338
    %v3340 = vand.u32 %v3339, 4294901760
    %3341 = vmatmul.mubr.f32.gmra.mrb[0].mxu0 %v3340
    %v3342 = vpop.f32.mrb[0].mxu0
    %v3343 = vadd.f32 %v3207, %v3342
    %v3344 = vpop.f32.mrb[0].mxu0
    %3345 = vmatprep.mubr.f32.mxu0 0.0
    %v3346 = vand.u32 %v2748, 4294901760
    %v3347 = vsub.f32 %v2748, %v3346
    %v3348 = vand.u32 %v3347, 4294901760
    %3349 = vmatmul.mubr.f32.gmra.mrb[0].mxu0 %v3348
    %v3350 = vpop.f32.mrb[0].mxu0
    %v3351 = vadd.f32 %v3214, %v3350
    %v3352 = vpop.f32.mrb[0].mxu0
    %3353 = vdwg.mxu0
    %3354 = vmatprep.subr.mxu0 0.0
    %v3355 = vand.u32 %v2751, 4294901760
    %v3356 = vsub.f32 %v2751, %v3355
    %v3357 = vand.u32 %v3356, 4294901760
    %3358 = vmatpush1.xpose.msra.mxu0 %v3357
    %3359 = vmatprep.subr.mxu0 0.0
    %v3360 = vand.u32 %v2754, 4294901760
    %v3361 = vsub.f32 %v2754, %v3360
    %v3362 = vand.u32 %v3361, 4294901760
    %3363 = vmatpush1.xpose.msra.mxu0 %v3362
    %3364 = vmatprep.subr.mxu0 0.0
    %v3365 = vand.u32 %v2757, 4294901760
    %v3366 = vsub.f32 %v2757, %v3365
    %v3367 = vand.u32 %v3366, 4294901760
    %3368 = vmatpush1.xpose.msra.mxu0 %v3367
    %3369 = vmatprep.subr.mxu0 0.0
    %v3370 = vand.u32 %v2760, 4294901760
    %v3371 = vsub.f32 %v2760, %v3370
    %v3372 = vand.u32 %v3371, 4294901760
    %3373 = vmatpush1.xpose.msra.mxu0 %v3372
    %3374 = vmatprep.subr.mxu0 0.0
    %v3375 = vand.u32 %v2763, 4294901760
    %v3376 = vsub.f32 %v2763, %v3375
    %v3377 = vand.u32 %v3376, 4294901760
    %3378 = vmatpush1.xpose.msra.mxu0 %v3377
    %3379 = vmatprep.subr.mxu0 0.0
    %v3380 = vand.u32 %v2766, 4294901760
    %v3381 = vsub.f32 %v2766, %v3380
    %v3382 = vand.u32 %v3381, 4294901760
    %3383 = vmatpush1.xpose.msra.mxu0 %v3382
    %3384 = vmatprep.subr.mxu0 0.0
    %v3385 = vand.u32 %v2769, 4294901760
    %v3386 = vsub.f32 %v2769, %v3385
    %v3387 = vand.u32 %v3386, 4294901760
    %3388 = vmatpush1.xpose.msra.mxu0 %v3387
    %3389 = vmatprep.subr.mxu0 0.0
    %v3390 = vand.u32 %v2772, 4294901760
    %v3391 = vsub.f32 %v2772, %v3390
    %v3392 = vand.u32 %v3391, 4294901760
    %3393 = vmatpush1.xpose.msra.mxu0 %v3392
    %3394 = vmatprep.subr.mxu0 0.0
    %3395 = vmatpush1.xpose.msra.mxu0 0.0
    %3396 = vmatprep.subr.mxu0 0.0
    %3397 = vmatpush1.xpose.msra.mxu0 0.0
    %3398 = vmatprep.subr.mxu0 0.0
    %3399 = vmatpush1.xpose.msra.mxu0 0.0
    %3400 = vmatprep.subr.mxu0 0.0
    %3401 = vmatpush1.xpose.msra.mxu0 0.0
    %3402 = vmatprep.subr.mxu0 0.0
    %3403 = vmatpush1.xpose.msra.mxu0 0.0
    %3404 = vmatprep.subr.mxu0 0.0
    %3405 = vmatpush1.xpose.msra.mxu0 0.0
    %3406 = vmatprep.subr.mxu0 0.0
    %3407 = vmatpush1.xpose.msra.mxu0 0.0
    %3408 = vmatprep.subr.mxu0 0.0
    %3409 = vmatpush1.xpose.msra.mxu0 0.0
    %3410 = vmatprep.subr.mxu0 0.0
    %3411 = vmatpush1.xpose.msra.mxu0 0.0
    %3412 = vmatprep.subr.mxu0 0.0
    %3413 = vmatpush1.xpose.msra.mxu0 0.0
    %3414 = vmatprep.subr.mxu0 0.0
    %3415 = vmatpush1.xpose.msra.mxu0 0.0
    %3416 = vmatprep.subr.mxu0 0.0
    %3417 = vmatpush1.xpose.msra.mxu0 0.0
    %3418 = vmatprep.subr.mxu0 0.0
    %3419 = vmatpush1.xpose.msra.mxu0 0.0
    %3420 = vmatprep.subr.mxu0 0.0
    %3421 = vmatpush1.xpose.msra.mxu0 0.0
    %3422 = vmatprep.subr.mxu0 0.0
    %3423 = vmatpush1.xpose.msra.mxu0 0.0
    %3424 = vmatprep.subr.mxu0 0.0
    %3425 = vmatpush1.xpose.msra.mxu0 0.0
    %3426 = vmatprep.subr.mxu0 0.0
    %3427 = vmatpush1.xpose.msra.mxu0 0.0
    %3428 = vmatprep.subr.mxu0 0.0
    %3429 = vmatpush1.xpose.msra.mxu0 0.0
    %3430 = vmatprep.subr.mxu0 0.0
    %3431 = vmatpush1.xpose.msra.mxu0 0.0
    %3432 = vmatprep.subr.mxu0 0.0
    %3433 = vmatpush1.xpose.msra.mxu0 0.0
    %3434 = vmatprep.subr.mxu0 0.0
    %3435 = vmatpush1.xpose.msra.mxu0 0.0
    %3436 = vmatprep.subr.mxu0 0.0
    %3437 = vmatpush1.xpose.msra.mxu0 0.0
    %3438 = vmatprep.subr.mxu0 0.0
    %3439 = vmatpush1.xpose.msra.mxu0 0.0
    %3440 = vmatprep.subr.mxu0 0.0
    %3441 = vmatpush1.xpose.msra.mxu0 0.0
    %3442 = vmatprep.mubr.f32.mxu0 0.0
    %v3443 = vand.u32 %v2727, 4294901760
    %3444 = vmatmul.mubr.f32.gmra.mrb[0].mxu0 %v3443
    %v3445 = vpop.f32.mrb[0].mxu0
    %v3446 = vadd.f32 %v3295, %v3445
    %v3447 = vpop.f32.mrb[0].mxu0
    %3448 = vmatprep.mubr.f32.mxu0 0.0
    %v3449 = vand.u32 %v2730, 4294901760
    %3450 = vmatmul.mubr.f32.gmra.mrb[0].mxu0 %v3449
    %v3451 = vpop.f32.mrb[0].mxu0
    %v3452 = vadd.f32 %v3303, %v3451
    %v3453 = vpop.f32.mrb[0].mxu0
    %3454 = vmatprep.mubr.f32.mxu0 0.0
    %v3455 = vand.u32 %v2733, 4294901760
    %3456 = vmatmul.mubr.f32.gmra.mrb[0].mxu0 %v3455
    %v3457 = vpop.f32.mrb[0].mxu0
    %v3458 = vadd.f32 %v3311, %v3457
    %v3459 = vpop.f32.mrb[0].mxu0
    %3460 = vmatprep.mubr.f32.mxu0 0.0
    %v3461 = vand.u32 %v2736, 4294901760
    %3462 = vmatmul.mubr.f32.gmra.mrb[0].mxu0 %v3461
    %v3463 = vpop.f32.mrb[0].mxu0
    %v3464 = vadd.f32 %v3319, %v3463
    %v3465 = vpop.f32.mrb[0].mxu0
    %3466 = vmatprep.mubr.f32.mxu0 0.0
    %v3467 = vand.u32 %v2739, 4294901760
    %3468 = vmatmul.mubr.f32.gmra.mrb[0].mxu0 %v3467
    %v3469 = vpop.f32.mrb[0].mxu0
    %v3470 = vadd.f32 %v3327, %v3469
    %v3471 = vpop.f32.mrb[0].mxu0
    %3472 = vmatprep.mubr.f32.mxu0 0.0
    %v3473 = vand.u32 %v2742, 4294901760
    %3474 = vmatmul.mubr.f32.gmra.mrb[0].mxu0 %v3473
    %v3475 = vpop.f32.mrb[0].mxu0
    %v3476 = vadd.f32 %v3335, %v3475
    %v3477 = vpop.f32.mrb[0].mxu0
    %3478 = vmatprep.mubr.f32.mxu0 0.0
    %v3479 = vand.u32 %v2745, 4294901760
    %3480 = vmatmul.mubr.f32.gmra.mrb[0].mxu0 %v3479
    %v3481 = vpop.f32.mrb[0].mxu0
    %v3482 = vadd.f32 %v3343, %v3481
    %v3483 = vpop.f32.mrb[0].mxu0
    %3484 = vmatprep.mubr.f32.mxu0 0.0
    %v3485 = vand.u32 %v2748, 4294901760
    %3486 = vmatmul.mubr.f32.gmra.mrb[0].mxu0 %v3485
    %v3487 = vpop.f32.mrb[0].mxu0
    %v3488 = vadd.f32 %v3351, %v3487
    %v3489 = vpop.f32.mrb[0].mxu0
    %3490 = vdwg.mxu0
    %3491 = vmatprep.subr.mxu0 0.0
    %v3492 = vand.u32 %v2751, 4294901760
    %3493 = vmatpush1.xpose.msra.mxu0 %v3492
    %3494 = vmatprep.subr.mxu0 0.0
    %v3495 = vand.u32 %v2754, 4294901760
    %3496 = vmatpush1.xpose.msra.mxu0 %v3495
    %3497 = vmatprep.subr.mxu0 0.0
    %v3498 = vand.u32 %v2757, 4294901760
    %3499 = vmatpush1.xpose.msra.mxu0 %v3498
    %3500 = vmatprep.subr.mxu0 0.0
    %v3501 = vand.u32 %v2760, 4294901760
    %3502 = vmatpush1.xpose.msra.mxu0 %v3501
    %3503 = vmatprep.subr.mxu0 0.0
    %v3504 = vand.u32 %v2763, 4294901760
    %3505 = vmatpush1.xpose.msra.mxu0 %v3504
    %3506 = vmatprep.subr.mxu0 0.0
    %v3507 = vand.u32 %v2766, 4294901760
    %3508 = vmatpush1.xpose.msra.mxu0 %v3507
    %3509 = vmatprep.subr.mxu0 0.0
    %v3510 = vand.u32 %v2769, 4294901760
    %3511 = vmatpush1.xpose.msra.mxu0 %v3510
    %3512 = vmatprep.subr.mxu0 0.0
    %v3513 = vand.u32 %v2772, 4294901760
    %3514 = vmatpush1.xpose.msra.mxu0 %v3513
    %3515 = vmatprep.subr.mxu0 0.0
    %3516 = vmatpush1.xpose.msra.mxu0 0.0
    %3517 = vmatprep.subr.mxu0 0.0
    %3518 = vmatpush1.xpose.msra.mxu0 0.0
    %3519 = vmatprep.subr.mxu0 0.0
    %3520 = vmatpush1.xpose.msra.mxu0 0.0
    %3521 = vmatprep.subr.mxu0 0.0
    %3522 = vmatpush1.xpose.msra.mxu0 0.0
    %3523 = vmatprep.subr.mxu0 0.0
    %3524 = vmatpush1.xpose.msra.mxu0 0.0
    %3525 = vmatprep.subr.mxu0 0.0
    %3526 = vmatpush1.xpose.msra.mxu0 0.0
    %3527 = vmatprep.subr.mxu0 0.0
    %3528 = vmatpush1.xpose.msra.mxu0 0.0
    %3529 = vmatprep.subr.mxu0 0.0
    %3530 = vmatpush1.xpose.msra.mxu0 0.0
    %3531 = vmatprep.subr.mxu0 0.0
    %3532 = vmatpush1.xpose.msra.mxu0 0.0
    %3533 = vmatprep.subr.mxu0 0.0
    %3534 = vmatpush1.xpose.msra.mxu0 0.0
    %3535 = vmatprep.subr.mxu0 0.0
    %3536 = vmatpush1.xpose.msra.mxu0 0.0
    %3537 = vmatprep.subr.mxu0 0.0
    %3538 = vmatpush1.xpose.msra.mxu0 0.0
    %3539 = vmatprep.subr.mxu0 0.0
    %3540 = vmatpush1.xpose.msra.mxu0 0.0
    %3541 = vmatprep.subr.mxu0 0.0
    %3542 = vmatpush1.xpose.msra.mxu0 0.0
    %3543 = vmatprep.subr.mxu0 0.0
    %3544 = vmatpush1.xpose.msra.mxu0 0.0
    %3545 = vmatprep.subr.mxu0 0.0
    %3546 = vmatpush1.xpose.msra.mxu0 0.0
    %3547 = vmatprep.subr.mxu0 0.0
    %3548 = vmatpush1.xpose.msra.mxu0 0.0
    %3549 = vmatprep.subr.mxu0 0.0
    %3550 = vmatpush1.xpose.msra.mxu0 0.0
    %3551 = vmatprep.subr.mxu0 0.0
    %3552 = vmatpush1.xpose.msra.mxu0 0.0
    %3553 = vmatprep.subr.mxu0 0.0
    %3554 = vmatpush1.xpose.msra.mxu0 0.0
    %3555 = vmatprep.subr.mxu0 0.0
    %3556 = vmatpush1.xpose.msra.mxu0 0.0
    %3557 = vmatprep.subr.mxu0 0.0
    %3558 = vmatpush1.xpose.msra.mxu0 0.0
    %3559 = vmatprep.subr.mxu0 0.0
    %3560 = vmatpush1.xpose.msra.mxu0 0.0
    %3561 = vmatprep.subr.mxu0 0.0
    %3562 = vmatpush1.xpose.msra.mxu0 0.0
    %3563 = vmatprep.mubr.f32.mxu0 0.0
    %v3564 = vand.u32 %v2727, 4294901760
    %3565 = vmatmul.mubr.f32.gmra.mrb[0].mxu0 %v3564
    %v3566 = vpop.f32.mrb[0].mxu0
    %v3567 = vadd.f32 %v3446, %v3566
    %v3568 = vpop.f32.mrb[0].mxu0
    %3569 = vmatprep.mubr.f32.mxu0 0.0
    %v3570 = vand.u32 %v2730, 4294901760
    %3571 = vmatmul.mubr.f32.gmra.mrb[0].mxu0 %v3570
    %v3572 = vpop.f32.mrb[0].mxu0
    %v3573 = vadd.f32 %v3452, %v3572
    %v3574 = vpop.f32.mrb[0].mxu0
    %3575 = vmatprep.mubr.f32.mxu0 0.0
    %v3576 = vand.u32 %v2733, 4294901760
    %3577 = vmatmul.mubr.f32.gmra.mrb[0].mxu0 %v3576
    %v3578 = vpop.f32.mrb[0].mxu0
    %v3579 = vadd.f32 %v3458, %v3578
    %v3580 = vpop.f32.mrb[0].mxu0
    %3581 = vmatprep.mubr.f32.mxu0 0.0
    %v3582 = vand.u32 %v2736, 4294901760
    %3583 = vmatmul.mubr.f32.gmra.mrb[0].mxu0 %v3582
    %v3584 = vpop.f32.mrb[0].mxu0
    %v3585 = vadd.f32 %v3464, %v3584
    %v3586 = vpop.f32.mrb[0].mxu0
    %3587 = vmatprep.mubr.f32.mxu0 0.0
    %v3588 = vand.u32 %v2739, 4294901760
    %3589 = vmatmul.mubr.f32.gmra.mrb[0].mxu0 %v3588
    %v3590 = vpop.f32.mrb[0].mxu0
    %v3591 = vadd.f32 %v3470, %v3590
    %v3592 = vpop.f32.mrb[0].mxu0
    %3593 = vmatprep.mubr.f32.mxu0 0.0
    %v3594 = vand.u32 %v2742, 4294901760
    %3595 = vmatmul.mubr.f32.gmra.mrb[0].mxu0 %v3594
    %v3596 = vpop.f32.mrb[0].mxu0
    %v3597 = vadd.f32 %v3476, %v3596
    %v3598 = vpop.f32.mrb[0].mxu0
    %3599 = vmatprep.mubr.f32.mxu0 0.0
    %v3600 = vand.u32 %v2745, 4294901760
    %3601 = vmatmul.mubr.f32.gmra.mrb[0].mxu0 %v3600
    %v3602 = vpop.f32.mrb[0].mxu0
    %v3603 = vadd.f32 %v3482, %v3602
    %v3604 = vpop.f32.mrb[0].mxu0
    %3605 = vmatprep.mubr.f32.mxu0 0.0
    %v3606 = vand.u32 %v2748, 4294901760
    %3607 = vmatmul.mubr.f32.gmra.mrb[0].mxu0 %v3606
    %v3608 = vpop.f32.mrb[0].mxu0
    %v3609 = vadd.f32 %v3488, %v3608
    %v3610 = vpop.f32.mrb[0].mxu0
    %3611 = vdwg.mxu0
    %v3612 = vsel %vm107, %v3567, -inf
    %3613 = vmax.xlane.f32.xlu0 %v3612
    %v3614 = vpop.xlane.xlu0 %3613
    %v3615 = vsel %vm107, %v3573, -inf
    %3616 = vmax.xlane.f32.xlu0 %v3615
    %v3617 = vpop.xlane.xlu0 %3616
    %v3618 = vsel %vm107, %v3579, -inf
    %3619 = vmax.xlane.f32.xlu0 %v3618
    %v3620 = vpop.xlane.xlu0 %3619
    %v3621 = vsel %vm107, %v3585, -inf
    %3622 = vmax.xlane.f32.xlu0 %v3621
    %v3623 = vpop.xlane.xlu0 %3622
    %v3624 = vsel %vm107, %v3591, -inf
    %3625 = vmax.xlane.f32.xlu0 %v3624
    %v3626 = vpop.xlane.xlu0 %3625
    %v3627 = vsel %vm107, %v3597, -inf
    %3628 = vmax.xlane.f32.xlu0 %v3627
    %v3629 = vpop.xlane.xlu0 %3628
    %v3630 = vsel %vm107, %v3603, -inf
    %3631 = vmax.xlane.f32.xlu0 %v3630
    %v3632 = vpop.xlane.xlu0 %3631
    %v3633 = vsel %vm107, %v3609, -inf
    %3634 = vmax.xlane.f32.xlu0 %v3633
    %v3635 = vpop.xlane.xlu0 %3634
    %v3636 = vsub.f32 %v3567, %v3614
    %v3637 = vsub.f32 %v3573, %v3617
    %v3638 = vsub.f32 %v3579, %v3620
    %v3639 = vsub.f32 %v3585, %v3623
    %v3640 = vsub.f32 %v3591, %v3626
    %v3641 = vsub.f32 %v3597, %v3629
    %v3642 = vsub.f32 %v3603, %v3632
    %v3643 = vsub.f32 %v3609, %v3635
    %v3644 = vmul.f32 %v3636, 1.442695
    %v3645 = vpow.pop %v3644
    %v3646 = vmul.f32 %v3637, 1.442695
    %v3647 = vpow.pop %v3646
    %v3648 = vmul.f32 %v3638, 1.442695
    %v3649 = vpow.pop %v3648
    %v3650 = vmul.f32 %v3639, 1.442695
    %v3651 = vpow.pop %v3650
    %v3652 = vmul.f32 %v3640, 1.442695
    %v3653 = vpow.pop %v3652
    %v3654 = vmul.f32 %v3641, 1.442695
    %v3655 = vpow.pop %v3654
    %v3656 = vmul.f32 %v3642, 1.442695
    %v3657 = vpow.pop %v3656
    %v3658 = vmul.f32 %v3643, 1.442695
    %v3659 = vpow.pop %v3658
    %v3660 = vsel %vm107, %v3645, 0.0
    %3661 = vadd.xlane.f32.xlu0 %v3660
    %v3662 = vpop.xlane.xlu0 %3661
    %v3663 = vsel %vm107, %v3647, 0.0
    %3664 = vadd.xlane.f32.xlu0 %v3663
    %v3665 = vpop.xlane.xlu0 %3664
    %v3666 = vsel %vm107, %v3649, 0.0
    %3667 = vadd.xlane.f32.xlu0 %v3666
    %v3668 = vpop.xlane.xlu0 %3667
    %v3669 = vsel %vm107, %v3651, 0.0
    %3670 = vadd.xlane.f32.xlu0 %v3669
    %v3671 = vpop.xlane.xlu0 %3670
    %v3672 = vsel %vm107, %v3653, 0.0
    %3673 = vadd.xlane.f32.xlu0 %v3672
    %v3674 = vpop.xlane.xlu0 %3673
    %v3675 = vsel %vm107, %v3655, 0.0
    %3676 = vadd.xlane.f32.xlu0 %v3675
    %v3677 = vpop.xlane.xlu0 %3676
    %v3678 = vsel %vm107, %v3657, 0.0
    %3679 = vadd.xlane.f32.xlu0 %v3678
    %v3680 = vpop.xlane.xlu0 %3679
    %v3681 = vsel %vm107, %v3659, 0.0
    %3682 = vadd.xlane.f32.xlu0 %v3681
    %v3683 = vpop.xlane.xlu0 %3682
    %v3684 = vrcp.pop %v3662
    %v3685 = vrcp.pop %v3665
    %v3686 = vrcp.pop %v3668
    %v3687 = vrcp.pop %v3671
    %v3688 = vrcp.pop %v3674
    %v3689 = vrcp.pop %v3677
    %v3690 = vrcp.pop %v3680
    %v3691 = vrcp.pop %v3683
    %v3692 = vmul.f32 %v3645, %v3684
    %v3693 = vmul.f32 %v3647, %v3685
    %v3694 = vmul.f32 %v3649, %v3686
    %v3695 = vmul.f32 %v3651, %v3687
    %v3696 = vmul.f32 %v3653, %v3688
    %v3697 = vmul.f32 %v3655, %v3689
    %v3698 = vmul.f32 %v3657, %v3690
    %v3699 = vmul.f32 %v3659, %v3691
    %v3700 = vld [vmem:[%s5] sm:$0x1]
    %v3702 = vlaneseq
    %v3703 = vshrl.u32 %v3702, 7
    %v3704 = vsub.s32 0, %v3703
    %v3705 = vrot.slane %v3700, %v3704
    %v3708 = vsel %vm107, %v3692, 0
    %v3711 = vsel %vm107, %v3693, 0
    %v3714 = vsel %vm107, %v3694, 0
    %v3717 = vsel %vm107, %v3695, 0
    %v3720 = vsel %vm107, %v3696, 0
    %v3723 = vsel %vm107, %v3697, 0
    %v3726 = vsel %vm107, %v3698, 0
    %v3729 = vsel %vm107, %v3699, 0
    %3731 = vmatprep.subr.mxu0 0.0
    %v3732 = vand.u32 %v2681, 4294901760
    %3733 = vmatpush1.msra.mxu0 %v3732
    %3734 = vmatprep.subr.mxu0 0.0
    %v3735 = vand.u32 %v2687, 4294901760
    %3736 = vmatpush1.msra.mxu0 %v3735
    %3737 = vmatprep.subr.mxu0 0.0
    %v3738 = vand.u32 %v2693, 4294901760
    %3739 = vmatpush1.msra.mxu0 %v3738
    %3740 = vmatprep.subr.mxu0 0.0
    %v3741 = vand.u32 %v2699, 4294901760
    %3742 = vmatpush1.msra.mxu0 %v3741
    %3743 = vmatprep.subr.mxu0 0.0
    %v3744 = vand.u32 %v2705, 4294901760
    %3745 = vmatpush1.msra.mxu0 %v3744
    %3746 = vmatprep.subr.mxu0 0.0
    %v3747 = vand.u32 %v2711, 4294901760
    %3748 = vmatpush1.msra.mxu0 %v3747
    %3749 = vmatprep.subr.mxu0 0.0
    %v3750 = vand.u32 %v2717, 4294901760
    %3751 = vmatpush1.msra.mxu0 %v3750
    %3752 = vmatprep.subr.mxu0 0.0
    %v3753 = vand.u32 %v2723, 4294901760
    %3754 = vmatpush1.msra.mxu0 %v3753
    %3755 = vmatprep.subr.mxu0 0.0
    %3756 = vmatpush1.msra.mxu0 0.0
    %3757 = vmatprep.subr.mxu0 0.0
    %3758 = vmatpush1.msra.mxu0 0.0
    %3759 = vmatprep.subr.mxu0 0.0
    %3760 = vmatpush1.msra.mxu0 0.0
    %3761 = vmatprep.subr.mxu0 0.0
    %3762 = vmatpush1.msra.mxu0 0.0
    %3763 = vmatprep.subr.mxu0 0.0
    %3764 = vmatpush1.msra.mxu0 0.0
    %3765 = vmatprep.subr.mxu0 0.0
    %3766 = vmatpush1.msra.mxu0 0.0
    %3767 = vmatprep.subr.mxu0 0.0
    %3768 = vmatpush1.msra.mxu0 0.0
    %3769 = vmatprep.subr.mxu0 0.0
    %3770 = vmatpush1.msra.mxu0 0.0
    %3771 = vmatprep.subr.mxu0 0.0
    %3772 = vmatpush1.msra.mxu0 0.0
    %3773 = vmatprep.subr.mxu0 0.0
    %3774 = vmatpush1.msra.mxu0 0.0
    %3775 = vmatprep.subr.mxu0 0.0
    %3776 = vmatpush1.msra.mxu0 0.0
    %3777 = vmatprep.subr.mxu0 0.0
    %3778 = vmatpush1.msra.mxu0 0.0
    %3779 = vmatprep.subr.mxu0 0.0
    %3780 = vmatpush1.msra.mxu0 0.0
    %3781 = vmatprep.subr.mxu0 0.0
    %3782 = vmatpush1.msra.mxu0 0.0
    %3783 = vmatprep.subr.mxu0 0.0
    %3784 = vmatpush1.msra.mxu0 0.0
    %3785 = vmatprep.subr.mxu0 0.0
    %3786 = vmatpush1.msra.mxu0 0.0
    %3787 = vmatprep.subr.mxu0 0.0
    %3788 = vmatpush1.msra.mxu0 0.0
    %3789 = vmatprep.subr.mxu0 0.0
    %3790 = vmatpush1.msra.mxu0 0.0
    %3791 = vmatprep.subr.mxu0 0.0
    %3792 = vmatpush1.msra.mxu0 0.0
    %3793 = vmatprep.subr.mxu0 0.0
    %3794 = vmatpush1.msra.mxu0 0.0
    %3795 = vmatprep.subr.mxu0 0.0
    %3796 = vmatpush1.msra.mxu0 0.0
    %3797 = vmatprep.subr.mxu0 0.0
    %3798 = vmatpush1.msra.mxu0 0.0
    %3799 = vmatprep.subr.mxu0 0.0
    %3800 = vmatpush1.msra.mxu0 0.0
    %3801 = vmatprep.subr.mxu0 0.0
    %3802 = vmatpush1.msra.mxu0 0.0
    %3803 = vmatprep.mubr.f32.mxu0 0.0
    %v3804 = vand.u32 %v3708, 4294901760
    %v3805 = vsub.f32 %v3708, %v3804
    %v3806 = vand.u32 %v3805, 4294901760
    %v3807 = vsub.f32 %v3805, %v3806
    %v3808 = vand.u32 %v3807, 4294901760
    %3809 = vmatmul.mubr.f32.gmra.mrb[0].mxu0 %v3808
    %v3810 = vpop.f32.mrb[0].mxu0
    %v3811 = vadd.f32 %v3705, %v3810
    %v3812 = vpop.f32.mrb[0].mxu0
    %3813 = vmatprep.mubr.f32.mxu0 0.0
    %v3814 = vand.u32 %v3711, 4294901760
    %v3815 = vsub.f32 %v3711, %v3814
    %v3816 = vand.u32 %v3815, 4294901760
    %v3817 = vsub.f32 %v3815, %v3816
    %v3818 = vand.u32 %v3817, 4294901760
    %3819 = vmatmul.mubr.f32.gmra.mrb[0].mxu0 %v3818
    %v3820 = vpop.f32.mrb[0].mxu0
    %v3821 = vadd.f32 %v3705, %v3820
    %v3822 = vpop.f32.mrb[0].mxu0
    %3823 = vmatprep.mubr.f32.mxu0 0.0
    %v3824 = vand.u32 %v3714, 4294901760
    %v3825 = vsub.f32 %v3714, %v3824
    %v3826 = vand.u32 %v3825, 4294901760
    %v3827 = vsub.f32 %v3825, %v3826
    %v3828 = vand.u32 %v3827, 4294901760
    %3829 = vmatmul.mubr.f32.gmra.mrb[0].mxu0 %v3828
    %v3830 = vpop.f32.mrb[0].mxu0
    %v3831 = vadd.f32 %v3705, %v3830
    %v3832 = vpop.f32.mrb[0].mxu0
    %3833 = vmatprep.mubr.f32.mxu0 0.0
    %v3834 = vand.u32 %v3717, 4294901760
    %v3835 = vsub.f32 %v3717, %v3834
    %v3836 = vand.u32 %v3835, 4294901760
    %v3837 = vsub.f32 %v3835, %v3836
    %v3838 = vand.u32 %v3837, 4294901760
    %3839 = vmatmul.mubr.f32.gmra.mrb[0].mxu0 %v3838
    %v3840 = vpop.f32.mrb[0].mxu0
    %v3841 = vadd.f32 %v3705, %v3840
    %v3842 = vpop.f32.mrb[0].mxu0
    %3843 = vmatprep.mubr.f32.mxu0 0.0
    %v3844 = vand.u32 %v3720, 4294901760
    %v3845 = vsub.f32 %v3720, %v3844
    %v3846 = vand.u32 %v3845, 4294901760
    %v3847 = vsub.f32 %v3845, %v3846
    %v3848 = vand.u32 %v3847, 4294901760
    %3849 = vmatmul.mubr.f32.gmra.mrb[0].mxu0 %v3848
    %v3850 = vpop.f32.mrb[0].mxu0
    %v3851 = vadd.f32 %v3705, %v3850
    %v3852 = vpop.f32.mrb[0].mxu0
    %3853 = vmatprep.mubr.f32.mxu0 0.0
    %v3854 = vand.u32 %v3723, 4294901760
    %v3855 = vsub.f32 %v3723, %v3854
    %v3856 = vand.u32 %v3855, 4294901760
    %v3857 = vsub.f32 %v3855, %v3856
    %v3858 = vand.u32 %v3857, 4294901760
    %3859 = vmatmul.mubr.f32.gmra.mrb[0].mxu0 %v3858
    %v3860 = vpop.f32.mrb[0].mxu0
    %v3861 = vadd.f32 %v3705, %v3860
    %v3862 = vpop.f32.mrb[0].mxu0
    %3863 = vmatprep.mubr.f32.mxu0 0.0
    %v3864 = vand.u32 %v3726, 4294901760
    %v3865 = vsub.f32 %v3726, %v3864
    %v3866 = vand.u32 %v3865, 4294901760
    %v3867 = vsub.f32 %v3865, %v3866
    %v3868 = vand.u32 %v3867, 4294901760
    %3869 = vmatmul.mubr.f32.gmra.mrb[0].mxu0 %v3868
    %v3870 = vpop.f32.mrb[0].mxu0
    %v3871 = vadd.f32 %v3705, %v3870
    %v3872 = vpop.f32.mrb[0].mxu0
    %3873 = vmatprep.mubr.f32.mxu0 0.0
    %v3874 = vand.u32 %v3729, 4294901760
    %v3875 = vsub.f32 %v3729, %v3874
    %v3876 = vand.u32 %v3875, 4294901760
    %v3877 = vsub.f32 %v3875, %v3876
    %v3878 = vand.u32 %v3877, 4294901760
    %3879 = vmatmul.mubr.f32.gmra.mrb[0].mxu0 %v3878
    %v3880 = vpop.f32.mrb[0].mxu0
    %v3881 = vadd.f32 %v3705, %v3880
    %v3882 = vpop.f32.mrb[0].mxu0
    %3883 = vdwg.mxu0
    %3884 = vmatprep.subr.mxu0 0.0
    %v3885 = vand.u32 %v2681, 4294901760
    %v3886 = vsub.f32 %v2681, %v3885
    %v3887 = vand.u32 %v3886, 4294901760
    %v3888 = vsub.f32 %v3886, %v3887
    %v3889 = vand.u32 %v3888, 4294901760
    %3890 = vmatpush1.msra.mxu0 %v3889
    %3891 = vmatprep.subr.mxu0 0.0
    %v3892 = vand.u32 %v2687, 4294901760
    %v3893 = vsub.f32 %v2687, %v3892
    %v3894 = vand.u32 %v3893, 4294901760
    %v3895 = vsub.f32 %v3893, %v3894
    %v3896 = vand.u32 %v3895, 4294901760
    %3897 = vmatpush1.msra.mxu0 %v3896
    %3898 = vmatprep.subr.mxu0 0.0
    %v3899 = vand.u32 %v2693, 4294901760
    %v3900 = vsub.f32 %v2693, %v3899
    %v3901 = vand.u32 %v3900, 4294901760
    %v3902 = vsub.f32 %v3900, %v3901
    %v3903 = vand.u32 %v3902, 4294901760
    %3904 = vmatpush1.msra.mxu0 %v3903
    %3905 = vmatprep.subr.mxu0 0.0
    %v3906 = vand.u32 %v2699, 4294901760
    %v3907 = vsub.f32 %v2699, %v3906
    %v3908 = vand.u32 %v3907, 4294901760
    %v3909 = vsub.f32 %v3907, %v3908
    %v3910 = vand.u32 %v3909, 4294901760
    %3911 = vmatpush1.msra.mxu0 %v3910
    %3912 = vmatprep.subr.mxu0 0.0
    %v3913 = vand.u32 %v2705, 4294901760
    %v3914 = vsub.f32 %v2705, %v3913
    %v3915 = vand.u32 %v3914, 4294901760
    %v3916 = vsub.f32 %v3914, %v3915
    %v3917 = vand.u32 %v3916, 4294901760
    %3918 = vmatpush1.msra.mxu0 %v3917
    %3919 = vmatprep.subr.mxu0 0.0
    %v3920 = vand.u32 %v2711, 4294901760
    %v3921 = vsub.f32 %v2711, %v3920
    %v3922 = vand.u32 %v3921, 4294901760
    %v3923 = vsub.f32 %v3921, %v3922
    %v3924 = vand.u32 %v3923, 4294901760
    %3925 = vmatpush1.msra.mxu0 %v3924
    %3926 = vmatprep.subr.mxu0 0.0
    %v3927 = vand.u32 %v2717, 4294901760
    %v3928 = vsub.f32 %v2717, %v3927
    %v3929 = vand.u32 %v3928, 4294901760
    %v3930 = vsub.f32 %v3928, %v3929
    %v3931 = vand.u32 %v3930, 4294901760
    %3932 = vmatpush1.msra.mxu0 %v3931
    %3933 = vmatprep.subr.mxu0 0.0
    %v3934 = vand.u32 %v2723, 4294901760
    %v3935 = vsub.f32 %v2723, %v3934
    %v3936 = vand.u32 %v3935, 4294901760
    %v3937 = vsub.f32 %v3935, %v3936
    %v3938 = vand.u32 %v3937, 4294901760
    %3939 = vmatpush1.msra.mxu0 %v3938
    %3940 = vmatprep.subr.mxu0 0.0
    %3941 = vmatpush1.msra.mxu0 0.0
    %3942 = vmatprep.subr.mxu0 0.0
    %3943 = vmatpush1.msra.mxu0 0.0
    %3944 = vmatprep.subr.mxu0 0.0
    %3945 = vmatpush1.msra.mxu0 0.0
    %3946 = vmatprep.subr.mxu0 0.0
    %3947 = vmatpush1.msra.mxu0 0.0
    %3948 = vmatprep.subr.mxu0 0.0
    %3949 = vmatpush1.msra.mxu0 0.0
    %3950 = vmatprep.subr.mxu0 0.0
    %3951 = vmatpush1.msra.mxu0 0.0
    %3952 = vmatprep.subr.mxu0 0.0
    %3953 = vmatpush1.msra.mxu0 0.0
    %3954 = vmatprep.subr.mxu0 0.0
    %3955 = vmatpush1.msra.mxu0 0.0
    %3956 = vmatprep.subr.mxu0 0.0
    %3957 = vmatpush1.msra.mxu0 0.0
    %3958 = vmatprep.subr.mxu0 0.0
    %3959 = vmatpush1.msra.mxu0 0.0
    %3960 = vmatprep.subr.mxu0 0.0
    %3961 = vmatpush1.msra.mxu0 0.0
    %3962 = vmatprep.subr.mxu0 0.0
    %3963 = vmatpush1.msra.mxu0 0.0
    %3964 = vmatprep.subr.mxu0 0.0
    %3965 = vmatpush1.msra.mxu0 0.0
    %3966 = vmatprep.subr.mxu0 0.0
    %3967 = vmatpush1.msra.mxu0 0.0
    %3968 = vmatprep.subr.mxu0 0.0
    %3969 = vmatpush1.msra.mxu0 0.0
    %3970 = vmatprep.subr.mxu0 0.0
    %3971 = vmatpush1.msra.mxu0 0.0
    %3972 = vmatprep.subr.mxu0 0.0
    %3973 = vmatpush1.msra.mxu0 0.0
    %3974 = vmatprep.subr.mxu0 0.0
    %3975 = vmatpush1.msra.mxu0 0.0
    %3976 = vmatprep.subr.mxu0 0.0
    %3977 = vmatpush1.msra.mxu0 0.0
    %3978 = vmatprep.subr.mxu0 0.0
    %3979 = vmatpush1.msra.mxu0 0.0
    %3980 = vmatprep.subr.mxu0 0.0
    %3981 = vmatpush1.msra.mxu0 0.0
    %3982 = vmatprep.subr.mxu0 0.0
    %3983 = vmatpush1.msra.mxu0 0.0
    %3984 = vmatprep.subr.mxu0 0.0
    %3985 = vmatpush1.msra.mxu0 0.0
    %3986 = vmatprep.subr.mxu0 0.0
    %3987 = vmatpush1.msra.mxu0 0.0
    %3988 = vmatprep.mubr.f32.mxu0 0.0
    %v3989 = vand.u32 %v3708, 4294901760
    %3990 = vmatmul.mubr.f32.gmra.mrb[0].mxu0 %v3989
    %v3991 = vpop.f32.mrb[0].mxu0
    %v3992 = vadd.f32 %v3811, %v3991
    %v3993 = vpop.f32.mrb[0].mxu0
    %3994 = vmatprep.mubr.f32.mxu0 0.0
    %v3995 = vand.u32 %v3711, 4294901760
    %3996 = vmatmul.mubr.f32.gmra.mrb[0].mxu0 %v3995
    %v3997 = vpop.f32.mrb[0].mxu0
    %v3998 = vadd.f32 %v3821, %v3997
    %v3999 = vpop.f32.mrb[0].mxu0
    %4000 = vmatprep.mubr.f32.mxu0 0.0
    %v4001 = vand.u32 %v3714, 4294901760
    %4002 = vmatmul.mubr.f32.gmra.mrb[0].mxu0 %v4001
    %v4003 = vpop.f32.mrb[0].mxu0
    %v4004 = vadd.f32 %v3831, %v4003
    %v4005 = vpop.f32.mrb[0].mxu0
    %4006 = vmatprep.mubr.f32.mxu0 0.0
    %v4007 = vand.u32 %v3717, 4294901760
    %4008 = vmatmul.mubr.f32.gmra.mrb[0].mxu0 %v4007
    %v4009 = vpop.f32.mrb[0].mxu0
    %v4010 = vadd.f32 %v3841, %v4009
    %v4011 = vpop.f32.mrb[0].mxu0
    %4012 = vmatprep.mubr.f32.mxu0 0.0
    %v4013 = vand.u32 %v3720, 4294901760
    %4014 = vmatmul.mubr.f32.gmra.mrb[0].mxu0 %v4013
    %v4015 = vpop.f32.mrb[0].mxu0
    %v4016 = vadd.f32 %v3851, %v4015
    %v4017 = vpop.f32.mrb[0].mxu0
    %4018 = vmatprep.mubr.f32.mxu0 0.0
    %v4019 = vand.u32 %v3723, 4294901760
    %4020 = vmatmul.mubr.f32.gmra.mrb[0].mxu0 %v4019
    %v4021 = vpop.f32.mrb[0].mxu0
    %v4022 = vadd.f32 %v3861, %v4021
    %v4023 = vpop.f32.mrb[0].mxu0
    %4024 = vmatprep.mubr.f32.mxu0 0.0
    %v4025 = vand.u32 %v3726, 4294901760
    %4026 = vmatmul.mubr.f32.gmra.mrb[0].mxu0 %v4025
    %v4027 = vpop.f32.mrb[0].mxu0
    %v4028 = vadd.f32 %v3871, %v4027
    %v4029 = vpop.f32.mrb[0].mxu0
    %4030 = vmatprep.mubr.f32.mxu0 0.0
    %v4031 = vand.u32 %v3729, 4294901760
    %4032 = vmatmul.mubr.f32.gmra.mrb[0].mxu0 %v4031
    %v4033 = vpop.f32.mrb[0].mxu0
    %v4034 = vadd.f32 %v3881, %v4033
    %v4035 = vpop.f32.mrb[0].mxu0
    %4036 = vdwg.mxu0
    %4037 = vmatprep.subr.mxu0 0.0
    %v4038 = vand.u32 %v2681, 4294901760
    %v4039 = vsub.f32 %v2681, %v4038
    %4040 = vmatpush1.msra.mxu0 %v4039
    %4041 = vmatprep.subr.mxu0 0.0
    %v4042 = vand.u32 %v2687, 4294901760
    %v4043 = vsub.f32 %v2687, %v4042
    %4044 = vmatpush1.msra.mxu0 %v4043
    %4045 = vmatprep.subr.mxu0 0.0
    %v4046 = vand.u32 %v2693, 4294901760
    %v4047 = vsub.f32 %v2693, %v4046
    %4048 = vmatpush1.msra.mxu0 %v4047
    %4049 = vmatprep.subr.mxu0 0.0
    %v4050 = vand.u32 %v2699, 4294901760
    %v4051 = vsub.f32 %v2699, %v4050
    %4052 = vmatpush1.msra.mxu0 %v4051
    %4053 = vmatprep.subr.mxu0 0.0
    %v4054 = vand.u32 %v2705, 4294901760
    %v4055 = vsub.f32 %v2705, %v4054
    %4056 = vmatpush1.msra.mxu0 %v4055
    %4057 = vmatprep.subr.mxu0 0.0
    %v4058 = vand.u32 %v2711, 4294901760
    %v4059 = vsub.f32 %v2711, %v4058
    %4060 = vmatpush1.msra.mxu0 %v4059
    %4061 = vmatprep.subr.mxu0 0.0
    %v4062 = vand.u32 %v2717, 4294901760
    %v4063 = vsub.f32 %v2717, %v4062
    %4064 = vmatpush1.msra.mxu0 %v4063
    %4065 = vmatprep.subr.mxu0 0.0
    %v4066 = vand.u32 %v2723, 4294901760
    %v4067 = vsub.f32 %v2723, %v4066
    %4068 = vmatpush1.msra.mxu0 %v4067
    %4069 = vmatprep.subr.mxu0 0.0
    %4070 = vmatpush1.msra.mxu0 0.0
    %4071 = vmatprep.subr.mxu0 0.0
    %4072 = vmatpush1.msra.mxu0 0.0
    %4073 = vmatprep.subr.mxu0 0.0
    %4074 = vmatpush1.msra.mxu0 0.0
    %4075 = vmatprep.subr.mxu0 0.0
    %4076 = vmatpush1.msra.mxu0 0.0
    %4077 = vmatprep.subr.mxu0 0.0
    %4078 = vmatpush1.msra.mxu0 0.0
    %4079 = vmatprep.subr.mxu0 0.0
    %4080 = vmatpush1.msra.mxu0 0.0
    %4081 = vmatprep.subr.mxu0 0.0
    %4082 = vmatpush1.msra.mxu0 0.0
    %4083 = vmatprep.subr.mxu0 0.0
    %4084 = vmatpush1.msra.mxu0 0.0
    %4085 = vmatprep.subr.mxu0 0.0
    %4086 = vmatpush1.msra.mxu0 0.0
    %4087 = vmatprep.subr.mxu0 0.0
    %4088 = vmatpush1.msra.mxu0 0.0
    %4089 = vmatprep.subr.mxu0 0.0
    %4090 = vmatpush1.msra.mxu0 0.0
    %4091 = vmatprep.subr.mxu0 0.0
    %4092 = vmatpush1.msra.mxu0 0.0
    %4093 = vmatprep.subr.mxu0 0.0
    %4094 = vmatpush1.msra.mxu0 0.0
    %4095 = vmatprep.subr.mxu0 0.0
    %4096 = vmatpush1.msra.mxu0 0.0
    %4097 = vmatprep.subr.mxu0 0.0
    %4098 = vmatpush1.msra.mxu0 0.0
    %4099 = vmatprep.subr.mxu0 0.0
    %4100 = vmatpush1.msra.mxu0 0.0
    %4101 = vmatprep.subr.mxu0 0.0
    %4102 = vmatpush1.msra.mxu0 0.0
    %4103 = vmatprep.subr.mxu0 0.0
    %4104 = vmatpush1.msra.mxu0 0.0
    %4105 = vmatprep.subr.mxu0 0.0
    %4106 = vmatpush1.msra.mxu0 0.0
    %4107 = vmatprep.subr.mxu0 0.0
    %4108 = vmatpush1.msra.mxu0 0.0
    %4109 = vmatprep.subr.mxu0 0.0
    %4110 = vmatpush1.msra.mxu0 0.0
    %4111 = vmatprep.subr.mxu0 0.0
    %4112 = vmatpush1.msra.mxu0 0.0
    %4113 = vmatprep.subr.mxu0 0.0
    %4114 = vmatpush1.msra.mxu0 0.0
    %4115 = vmatprep.subr.mxu0 0.0
    %4116 = vmatpush1.msra.mxu0 0.0
    %4117 = vmatprep.mubr.f32.mxu0 0.0
    %v4118 = vand.u32 %v3708, 4294901760
    %v4119 = vsub.f32 %v3708, %v4118
    %4120 = vmatmul.mubr.f32.gmra.mrb[0].mxu0 %v4119
    %v4121 = vpop.f32.mrb[0].mxu0
    %v4122 = vadd.f32 %v3992, %v4121
    %v4123 = vpop.f32.mrb[0].mxu0
    %4124 = vmatprep.mubr.f32.mxu0 0.0
    %v4125 = vand.u32 %v3711, 4294901760
    %v4126 = vsub.f32 %v3711, %v4125
    %4127 = vmatmul.mubr.f32.gmra.mrb[0].mxu0 %v4126
    %v4128 = vpop.f32.mrb[0].mxu0
    %v4129 = vadd.f32 %v3998, %v4128
    %v4130 = vpop.f32.mrb[0].mxu0
    %4131 = vmatprep.mubr.f32.mxu0 0.0
    %v4132 = vand.u32 %v3714, 4294901760
    %v4133 = vsub.f32 %v3714, %v4132
    %4134 = vmatmul.mubr.f32.gmra.mrb[0].mxu0 %v4133
    %v4135 = vpop.f32.mrb[0].mxu0
    %v4136 = vadd.f32 %v4004, %v4135
    %v4137 = vpop.f32.mrb[0].mxu0
    %4138 = vmatprep.mubr.f32.mxu0 0.0
    %v4139 = vand.u32 %v3717, 4294901760
    %v4140 = vsub.f32 %v3717, %v4139
    %4141 = vmatmul.mubr.f32.gmra.mrb[0].mxu0 %v4140
    %v4142 = vpop.f32.mrb[0].mxu0
    %v4143 = vadd.f32 %v4010, %v4142
    %v4144 = vpop.f32.mrb[0].mxu0
    %4145 = vmatprep.mubr.f32.mxu0 0.0
    %v4146 = vand.u32 %v3720, 4294901760
    %v4147 = vsub.f32 %v3720, %v4146
    %4148 = vmatmul.mubr.f32.gmra.mrb[0].mxu0 %v4147
    %v4149 = vpop.f32.mrb[0].mxu0
    %v4150 = vadd.f32 %v4016, %v4149
    %v4151 = vpop.f32.mrb[0].mxu0
    %4152 = vmatprep.mubr.f32.mxu0 0.0
    %v4153 = vand.u32 %v3723, 4294901760
    %v4154 = vsub.f32 %v3723, %v4153
    %4155 = vmatmul.mubr.f32.gmra.mrb[0].mxu0 %v4154
    %v4156 = vpop.f32.mrb[0].mxu0
    %v4157 = vadd.f32 %v4022, %v4156
    %v4158 = vpop.f32.mrb[0].mxu0
    %4159 = vmatprep.mubr.f32.mxu0 0.0
    %v4160 = vand.u32 %v3726, 4294901760
    %v4161 = vsub.f32 %v3726, %v4160
    %4162 = vmatmul.mubr.f32.gmra.mrb[0].mxu0 %v4161
    %v4163 = vpop.f32.mrb[0].mxu0
    %v4164 = vadd.f32 %v4028, %v4163
    %v4165 = vpop.f32.mrb[0].mxu0
    %4166 = vmatprep.mubr.f32.mxu0 0.0
    %v4167 = vand.u32 %v3729, 4294901760
    %v4168 = vsub.f32 %v3729, %v4167
    %4169 = vmatmul.mubr.f32.gmra.mrb[0].mxu0 %v4168
    %v4170 = vpop.f32.mrb[0].mxu0
    %v4171 = vadd.f32 %v4034, %v4170
    %v4172 = vpop.f32.mrb[0].mxu0
    %4173 = vdwg.mxu0
    %4174 = vmatprep.subr.mxu0 0.0
    %v4175 = vand.u32 %v2681, 4294901760
    %4176 = vmatpush1.msra.mxu0 %v4175
    %4177 = vmatprep.subr.mxu0 0.0
    %v4178 = vand.u32 %v2687, 4294901760
    %4179 = vmatpush1.msra.mxu0 %v4178
    %4180 = vmatprep.subr.mxu0 0.0
    %v4181 = vand.u32 %v2693, 4294901760
    %4182 = vmatpush1.msra.mxu0 %v4181
    %4183 = vmatprep.subr.mxu0 0.0
    %v4184 = vand.u32 %v2699, 4294901760
    %4185 = vmatpush1.msra.mxu0 %v4184
    %4186 = vmatprep.subr.mxu0 0.0
    %v4187 = vand.u32 %v2705, 4294901760
    %4188 = vmatpush1.msra.mxu0 %v4187
    %4189 = vmatprep.subr.mxu0 0.0
    %v4190 = vand.u32 %v2711, 4294901760
    %4191 = vmatpush1.msra.mxu0 %v4190
    %4192 = vmatprep.subr.mxu0 0.0
    %v4193 = vand.u32 %v2717, 4294901760
    %4194 = vmatpush1.msra.mxu0 %v4193
    %4195 = vmatprep.subr.mxu0 0.0
    %v4196 = vand.u32 %v2723, 4294901760
    %4197 = vmatpush1.msra.mxu0 %v4196
    %4198 = vmatprep.subr.mxu0 0.0
    %4199 = vmatpush1.msra.mxu0 0.0
    %4200 = vmatprep.subr.mxu0 0.0
    %4201 = vmatpush1.msra.mxu0 0.0
    %4202 = vmatprep.subr.mxu0 0.0
    %4203 = vmatpush1.msra.mxu0 0.0
    %4204 = vmatprep.subr.mxu0 0.0
    %4205 = vmatpush1.msra.mxu0 0.0
    %4206 = vmatprep.subr.mxu0 0.0
    %4207 = vmatpush1.msra.mxu0 0.0
    %4208 = vmatprep.subr.mxu0 0.0
    %4209 = vmatpush1.msra.mxu0 0.0
    %4210 = vmatprep.subr.mxu0 0.0
    %4211 = vmatpush1.msra.mxu0 0.0
    %4212 = vmatprep.subr.mxu0 0.0
    %4213 = vmatpush1.msra.mxu0 0.0
    %4214 = vmatprep.subr.mxu0 0.0
    %4215 = vmatpush1.msra.mxu0 0.0
    %4216 = vmatprep.subr.mxu0 0.0
    %4217 = vmatpush1.msra.mxu0 0.0
    %4218 = vmatprep.subr.mxu0 0.0
    %4219 = vmatpush1.msra.mxu0 0.0
    %4220 = vmatprep.subr.mxu0 0.0
    %4221 = vmatpush1.msra.mxu0 0.0
    %4222 = vmatprep.subr.mxu0 0.0
    %4223 = vmatpush1.msra.mxu0 0.0
    %4224 = vmatprep.subr.mxu0 0.0
    %4225 = vmatpush1.msra.mxu0 0.0
    %4226 = vmatprep.subr.mxu0 0.0
    %4227 = vmatpush1.msra.mxu0 0.0
    %4228 = vmatprep.subr.mxu0 0.0
    %4229 = vmatpush1.msra.mxu0 0.0
    %4230 = vmatprep.subr.mxu0 0.0
    %4231 = vmatpush1.msra.mxu0 0.0
    %4232 = vmatprep.subr.mxu0 0.0
    %4233 = vmatpush1.msra.mxu0 0.0
    %4234 = vmatprep.subr.mxu0 0.0
    %4235 = vmatpush1.msra.mxu0 0.0
    %4236 = vmatprep.subr.mxu0 0.0
    %4237 = vmatpush1.msra.mxu0 0.0
    %4238 = vmatprep.subr.mxu0 0.0
    %4239 = vmatpush1.msra.mxu0 0.0
    %4240 = vmatprep.subr.mxu0 0.0
    %4241 = vmatpush1.msra.mxu0 0.0
    %4242 = vmatprep.subr.mxu0 0.0
    %4243 = vmatpush1.msra.mxu0 0.0
    %4244 = vmatprep.subr.mxu0 0.0
    %4245 = vmatpush1.msra.mxu0 0.0
    %4246 = vmatprep.mubr.f32.mxu0 0.0
    %v4247 = vand.u32 %v3708, 4294901760
    %v4248 = vsub.f32 %v3708, %v4247
    %v4249 = vand.u32 %v4248, 4294901760
    %4250 = vmatmul.mubr.f32.gmra.mrb[0].mxu0 %v4249
    %v4251 = vpop.f32.mrb[0].mxu0
    %v4252 = vadd.f32 %v4122, %v4251
    %v4253 = vpop.f32.mrb[0].mxu0
    %4254 = vmatprep.mubr.f32.mxu0 0.0
    %v4255 = vand.u32 %v3711, 4294901760
    %v4256 = vsub.f32 %v3711, %v4255
    %v4257 = vand.u32 %v4256, 4294901760
    %4258 = vmatmul.mubr.f32.gmra.mrb[0].mxu0 %v4257
    %v4259 = vpop.f32.mrb[0].mxu0
    %v4260 = vadd.f32 %v4129, %v4259
    %v4261 = vpop.f32.mrb[0].mxu0
    %4262 = vmatprep.mubr.f32.mxu0 0.0
    %v4263 = vand.u32 %v3714, 4294901760
    %v4264 = vsub.f32 %v3714, %v4263
    %v4265 = vand.u32 %v4264, 4294901760
    %4266 = vmatmul.mubr.f32.gmra.mrb[0].mxu0 %v4265
    %v4267 = vpop.f32.mrb[0].mxu0
    %v4268 = vadd.f32 %v4136, %v4267
    %v4269 = vpop.f32.mrb[0].mxu0
    %4270 = vmatprep.mubr.f32.mxu0 0.0
    %v4271 = vand.u32 %v3717, 4294901760
    %v4272 = vsub.f32 %v3717, %v4271
    %v4273 = vand.u32 %v4272, 4294901760
    %4274 = vmatmul.mubr.f32.gmra.mrb[0].mxu0 %v4273
    %v4275 = vpop.f32.mrb[0].mxu0
    %v4276 = vadd.f32 %v4143, %v4275
    %v4277 = vpop.f32.mrb[0].mxu0
    %4278 = vmatprep.mubr.f32.mxu0 0.0
    %v4279 = vand.u32 %v3720, 4294901760
    %v4280 = vsub.f32 %v3720, %v4279
    %v4281 = vand.u32 %v4280, 4294901760
    %4282 = vmatmul.mubr.f32.gmra.mrb[0].mxu0 %v4281
    %v4283 = vpop.f32.mrb[0].mxu0
    %v4284 = vadd.f32 %v4150, %v4283
    %v4285 = vpop.f32.mrb[0].mxu0
    %4286 = vmatprep.mubr.f32.mxu0 0.0
    %v4287 = vand.u32 %v3723, 4294901760
    %v4288 = vsub.f32 %v3723, %v4287
    %v4289 = vand.u32 %v4288, 4294901760
    %4290 = vmatmul.mubr.f32.gmra.mrb[0].mxu0 %v4289
    %v4291 = vpop.f32.mrb[0].mxu0
    %v4292 = vadd.f32 %v4157, %v4291
    %v4293 = vpop.f32.mrb[0].mxu0
    %4294 = vmatprep.mubr.f32.mxu0 0.0
    %v4295 = vand.u32 %v3726, 4294901760
    %v4296 = vsub.f32 %v3726, %v4295
    %v4297 = vand.u32 %v4296, 4294901760
    %4298 = vmatmul.mubr.f32.gmra.mrb[0].mxu0 %v4297
    %v4299 = vpop.f32.mrb[0].mxu0
    %v4300 = vadd.f32 %v4164, %v4299
    %v4301 = vpop.f32.mrb[0].mxu0
    %4302 = vmatprep.mubr.f32.mxu0 0.0
    %v4303 = vand.u32 %v3729, 4294901760
    %v4304 = vsub.f32 %v3729, %v4303
    %v4305 = vand.u32 %v4304, 4294901760
    %4306 = vmatmul.mubr.f32.gmra.mrb[0].mxu0 %v4305
    %v4307 = vpop.f32.mrb[0].mxu0
    %v4308 = vadd.f32 %v4171, %v4307
    %v4309 = vpop.f32.mrb[0].mxu0
    %4310 = vdwg.mxu0
    %4311 = vmatprep.subr.mxu0 0.0
    %v4312 = vand.u32 %v2681, 4294901760
    %v4313 = vsub.f32 %v2681, %v4312
    %v4314 = vand.u32 %v4313, 4294901760
    %4315 = vmatpush1.msra.mxu0 %v4314
    %4316 = vmatprep.subr.mxu0 0.0
    %v4317 = vand.u32 %v2687, 4294901760
    %v4318 = vsub.f32 %v2687, %v4317
    %v4319 = vand.u32 %v4318, 4294901760
    %4320 = vmatpush1.msra.mxu0 %v4319
    %4321 = vmatprep.subr.mxu0 0.0
    %v4322 = vand.u32 %v2693, 4294901760
    %v4323 = vsub.f32 %v2693, %v4322
    %v4324 = vand.u32 %v4323, 4294901760
    %4325 = vmatpush1.msra.mxu0 %v4324
    %4326 = vmatprep.subr.mxu0 0.0
    %v4327 = vand.u32 %v2699, 4294901760
    %v4328 = vsub.f32 %v2699, %v4327
    %v4329 = vand.u32 %v4328, 4294901760
    %4330 = vmatpush1.msra.mxu0 %v4329
    %4331 = vmatprep.subr.mxu0 0.0
    %v4332 = vand.u32 %v2705, 4294901760
    %v4333 = vsub.f32 %v2705, %v4332
    %v4334 = vand.u32 %v4333, 4294901760
    %4335 = vmatpush1.msra.mxu0 %v4334
    %4336 = vmatprep.subr.mxu0 0.0
    %v4337 = vand.u32 %v2711, 4294901760
    %v4338 = vsub.f32 %v2711, %v4337
    %v4339 = vand.u32 %v4338, 4294901760
    %4340 = vmatpush1.msra.mxu0 %v4339
    %4341 = vmatprep.subr.mxu0 0.0
    %v4342 = vand.u32 %v2717, 4294901760
    %v4343 = vsub.f32 %v2717, %v4342
    %v4344 = vand.u32 %v4343, 4294901760
    %4345 = vmatpush1.msra.mxu0 %v4344
    %4346 = vmatprep.subr.mxu0 0.0
    %v4347 = vand.u32 %v2723, 4294901760
    %v4348 = vsub.f32 %v2723, %v4347
    %v4349 = vand.u32 %v4348, 4294901760
    %4350 = vmatpush1.msra.mxu0 %v4349
    %4351 = vmatprep.subr.mxu0 0.0
    %4352 = vmatpush1.msra.mxu0 0.0
    %4353 = vmatprep.subr.mxu0 0.0
    %4354 = vmatpush1.msra.mxu0 0.0
    %4355 = vmatprep.subr.mxu0 0.0
    %4356 = vmatpush1.msra.mxu0 0.0
    %4357 = vmatprep.subr.mxu0 0.0
    %4358 = vmatpush1.msra.mxu0 0.0
    %4359 = vmatprep.subr.mxu0 0.0
    %4360 = vmatpush1.msra.mxu0 0.0
    %4361 = vmatprep.subr.mxu0 0.0
    %4362 = vmatpush1.msra.mxu0 0.0
    %4363 = vmatprep.subr.mxu0 0.0
    %4364 = vmatpush1.msra.mxu0 0.0
    %4365 = vmatprep.subr.mxu0 0.0
    %4366 = vmatpush1.msra.mxu0 0.0
    %4367 = vmatprep.subr.mxu0 0.0
    %4368 = vmatpush1.msra.mxu0 0.0
    %4369 = vmatprep.subr.mxu0 0.0
    %4370 = vmatpush1.msra.mxu0 0.0
    %4371 = vmatprep.subr.mxu0 0.0
    %4372 = vmatpush1.msra.mxu0 0.0
    %4373 = vmatprep.subr.mxu0 0.0
    %4374 = vmatpush1.msra.mxu0 0.0
    %4375 = vmatprep.subr.mxu0 0.0
    %4376 = vmatpush1.msra.mxu0 0.0
    %4377 = vmatprep.subr.mxu0 0.0
    %4378 = vmatpush1.msra.mxu0 0.0
    %4379 = vmatprep.subr.mxu0 0.0
    %4380 = vmatpush1.msra.mxu0 0.0
    %4381 = vmatprep.subr.mxu0 0.0
    %4382 = vmatpush1.msra.mxu0 0.0
    %4383 = vmatprep.subr.mxu0 0.0
    %4384 = vmatpush1.msra.mxu0 0.0
    %4385 = vmatprep.subr.mxu0 0.0
    %4386 = vmatpush1.msra.mxu0 0.0
    %4387 = vmatprep.subr.mxu0 0.0
    %4388 = vmatpush1.msra.mxu0 0.0
    %4389 = vmatprep.subr.mxu0 0.0
    %4390 = vmatpush1.msra.mxu0 0.0
    %4391 = vmatprep.subr.mxu0 0.0
    %4392 = vmatpush1.msra.mxu0 0.0
    %4393 = vmatprep.subr.mxu0 0.0
    %4394 = vmatpush1.msra.mxu0 0.0
    %4395 = vmatprep.subr.mxu0 0.0
    %4396 = vmatpush1.msra.mxu0 0.0
    %4397 = vmatprep.subr.mxu0 0.0
    %4398 = vmatpush1.msra.mxu0 0.0
    %4399 = vmatprep.mubr.f32.mxu0 0.0
    %v4400 = vand.u32 %v3708, 4294901760
    %4401 = vmatmul.mubr.f32.gmra.mrb[0].mxu0 %v4400
    %v4402 = vpop.f32.mrb[0].mxu0
    %v4403 = vadd.f32 %v4252, %v4402
    %v4404 = vpop.f32.mrb[0].mxu0
    %4405 = vmatprep.mubr.f32.mxu0 0.0
    %v4406 = vand.u32 %v3711, 4294901760
    %4407 = vmatmul.mubr.f32.gmra.mrb[0].mxu0 %v4406
    %v4408 = vpop.f32.mrb[0].mxu0
    %v4409 = vadd.f32 %v4260, %v4408
    %v4410 = vpop.f32.mrb[0].mxu0
    %4411 = vmatprep.mubr.f32.mxu0 0.0
    %v4412 = vand.u32 %v3714, 4294901760
    %4413 = vmatmul.mubr.f32.gmra.mrb[0].mxu0 %v4412
    %v4414 = vpop.f32.mrb[0].mxu0
    %v4415 = vadd.f32 %v4268, %v4414
    %v4416 = vpop.f32.mrb[0].mxu0
    %4417 = vmatprep.mubr.f32.mxu0 0.0
    %v4418 = vand.u32 %v3717, 4294901760
    %4419 = vmatmul.mubr.f32.gmra.mrb[0].mxu0 %v4418
    %v4420 = vpop.f32.mrb[0].mxu0
    %v4421 = vadd.f32 %v4276, %v4420
    %v4422 = vpop.f32.mrb[0].mxu0
    %4423 = vmatprep.mubr.f32.mxu0 0.0
    %v4424 = vand.u32 %v3720, 4294901760
    %4425 = vmatmul.mubr.f32.gmra.mrb[0].mxu0 %v4424
    %v4426 = vpop.f32.mrb[0].mxu0
    %v4427 = vadd.f32 %v4284, %v4426
    %v4428 = vpop.f32.mrb[0].mxu0
    %4429 = vmatprep.mubr.f32.mxu0 0.0
    %v4430 = vand.u32 %v3723, 4294901760
    %4431 = vmatmul.mubr.f32.gmra.mrb[0].mxu0 %v4430
    %v4432 = vpop.f32.mrb[0].mxu0
    %v4433 = vadd.f32 %v4292, %v4432
    %v4434 = vpop.f32.mrb[0].mxu0
    %4435 = vmatprep.mubr.f32.mxu0 0.0
    %v4436 = vand.u32 %v3726, 4294901760
    %4437 = vmatmul.mubr.f32.gmra.mrb[0].mxu0 %v4436
    %v4438 = vpop.f32.mrb[0].mxu0
    %v4439 = vadd.f32 %v4300, %v4438
    %v4440 = vpop.f32.mrb[0].mxu0
    %4441 = vmatprep.mubr.f32.mxu0 0.0
    %v4442 = vand.u32 %v3729, 4294901760
    %4443 = vmatmul.mubr.f32.gmra.mrb[0].mxu0 %v4442
    %v4444 = vpop.f32.mrb[0].mxu0
    %v4445 = vadd.f32 %v4308, %v4444
    %v4446 = vpop.f32.mrb[0].mxu0
    %4447 = vdwg.mxu0
    %4448 = vmatprep.subr.mxu0 0.0
    %v4449 = vand.u32 %v2681, 4294901760
    %4450 = vmatpush1.msra.mxu0 %v4449
    %4451 = vmatprep.subr.mxu0 0.0
    %v4452 = vand.u32 %v2687, 4294901760
    %4453 = vmatpush1.msra.mxu0 %v4452
    %4454 = vmatprep.subr.mxu0 0.0
    %v4455 = vand.u32 %v2693, 4294901760
    %4456 = vmatpush1.msra.mxu0 %v4455
    %4457 = vmatprep.subr.mxu0 0.0
    %v4458 = vand.u32 %v2699, 4294901760
    %4459 = vmatpush1.msra.mxu0 %v4458
    %4460 = vmatprep.subr.mxu0 0.0
    %v4461 = vand.u32 %v2705, 4294901760
    %4462 = vmatpush1.msra.mxu0 %v4461
    %4463 = vmatprep.subr.mxu0 0.0
    %v4464 = vand.u32 %v2711, 4294901760
    %4465 = vmatpush1.msra.mxu0 %v4464
    %4466 = vmatprep.subr.mxu0 0.0
    %v4467 = vand.u32 %v2717, 4294901760
    %4468 = vmatpush1.msra.mxu0 %v4467
    %4469 = vmatprep.subr.mxu0 0.0
    %v4470 = vand.u32 %v2723, 4294901760
    %4471 = vmatpush1.msra.mxu0 %v4470
    %4472 = vmatprep.subr.mxu0 0.0
    %4473 = vmatpush1.msra.mxu0 0.0
    %4474 = vmatprep.subr.mxu0 0.0
    %4475 = vmatpush1.msra.mxu0 0.0
    %4476 = vmatprep.subr.mxu0 0.0
    %4477 = vmatpush1.msra.mxu0 0.0
    %4478 = vmatprep.subr.mxu0 0.0
    %4479 = vmatpush1.msra.mxu0 0.0
    %4480 = vmatprep.subr.mxu0 0.0
    %4481 = vmatpush1.msra.mxu0 0.0
    %4482 = vmatprep.subr.mxu0 0.0
    %4483 = vmatpush1.msra.mxu0 0.0
    %4484 = vmatprep.subr.mxu0 0.0
    %4485 = vmatpush1.msra.mxu0 0.0
    %4486 = vmatprep.subr.mxu0 0.0
    %4487 = vmatpush1.msra.mxu0 0.0
    %4488 = vmatprep.subr.mxu0 0.0
    %4489 = vmatpush1.msra.mxu0 0.0
    %4490 = vmatprep.subr.mxu0 0.0
    %4491 = vmatpush1.msra.mxu0 0.0
    %4492 = vmatprep.subr.mxu0 0.0
    %4493 = vmatpush1.msra.mxu0 0.0
    %4494 = vmatprep.subr.mxu0 0.0
    %4495 = vmatpush1.msra.mxu0 0.0
    %4496 = vmatprep.subr.mxu0 0.0
    %4497 = vmatpush1.msra.mxu0 0.0
    %4498 = vmatprep.subr.mxu0 0.0
    %4499 = vmatpush1.msra.mxu0 0.0
    %4500 = vmatprep.subr.mxu0 0.0
    %4501 = vmatpush1.msra.mxu0 0.0
    %4502 = vmatprep.subr.mxu0 0.0
    %4503 = vmatpush1.msra.mxu0 0.0
    %4504 = vmatprep.subr.mxu0 0.0
    %4505 = vmatpush1.msra.mxu0 0.0
    %4506 = vmatprep.subr.mxu0 0.0
    %4507 = vmatpush1.msra.mxu0 0.0
    %4508 = vmatprep.subr.mxu0 0.0
    %4509 = vmatpush1.msra.mxu0 0.0
    %4510 = vmatprep.subr.mxu0 0.0
    %4511 = vmatpush1.msra.mxu0 0.0
    %4512 = vmatprep.subr.mxu0 0.0
    %4513 = vmatpush1.msra.mxu0 0.0
    %4514 = vmatprep.subr.mxu0 0.0
    %4515 = vmatpush1.msra.mxu0 0.0
    %4516 = vmatprep.subr.mxu0 0.0
    %4517 = vmatpush1.msra.mxu0 0.0
    %4518 = vmatprep.subr.mxu0 0.0
    %4519 = vmatpush1.msra.mxu0 0.0
    %4520 = vmatprep.mubr.f32.mxu0 0.0
    %v4521 = vand.u32 %v3708, 4294901760
    %4522 = vmatmul.mubr.f32.gmra.mrb[0].mxu0 %v4521
    %v4523 = vpop.f32.mrb[0].mxu0
    %v4524 = vadd.f32 %v4403, %v4523
    %v4525 = vpop.f32.mrb[0].mxu0
    %4526 = vmatprep.mubr.f32.mxu0 0.0
    %v4527 = vand.u32 %v3711, 4294901760
    %4528 = vmatmul.mubr.f32.gmra.mrb[0].mxu0 %v4527
    %v4529 = vpop.f32.mrb[0].mxu0
    %v4530 = vadd.f32 %v4409, %v4529
    %v4531 = vpop.f32.mrb[0].mxu0
    %4532 = vmatprep.mubr.f32.mxu0 0.0
    %v4533 = vand.u32 %v3714, 4294901760
    %4534 = vmatmul.mubr.f32.gmra.mrb[0].mxu0 %v4533
    %v4535 = vpop.f32.mrb[0].mxu0
    %v4536 = vadd.f32 %v4415, %v4535
    %v4537 = vpop.f32.mrb[0].mxu0
    %4538 = vmatprep.mubr.f32.mxu0 0.0
    %v4539 = vand.u32 %v3717, 4294901760
    %4540 = vmatmul.mubr.f32.gmra.mrb[0].mxu0 %v4539
    %v4541 = vpop.f32.mrb[0].mxu0
    %v4542 = vadd.f32 %v4421, %v4541
    %v4543 = vpop.f32.mrb[0].mxu0
    %4544 = vmatprep.mubr.f32.mxu0 0.0
    %v4545 = vand.u32 %v3720, 4294901760
    %4546 = vmatmul.mubr.f32.gmra.mrb[0].mxu0 %v4545
    %v4547 = vpop.f32.mrb[0].mxu0
    %v4548 = vadd.f32 %v4427, %v4547
    %v4549 = vpop.f32.mrb[0].mxu0
    %4550 = vmatprep.mubr.f32.mxu0 0.0
    %v4551 = vand.u32 %v3723, 4294901760
    %4552 = vmatmul.mubr.f32.gmra.mrb[0].mxu0 %v4551
    %v4553 = vpop.f32.mrb[0].mxu0
    %v4554 = vadd.f32 %v4433, %v4553
    %v4555 = vpop.f32.mrb[0].mxu0
    %4556 = vmatprep.mubr.f32.mxu0 0.0
    %v4557 = vand.u32 %v3726, 4294901760
    %4558 = vmatmul.mubr.f32.gmra.mrb[0].mxu0 %v4557
    %v4559 = vpop.f32.mrb[0].mxu0
    %v4560 = vadd.f32 %v4439, %v4559
    %v4561 = vpop.f32.mrb[0].mxu0
    %4562 = vmatprep.mubr.f32.mxu0 0.0
    %v4563 = vand.u32 %v3729, 4294901760
    %4564 = vmatmul.mubr.f32.gmra.mrb[0].mxu0 %v4563
    %v4565 = vpop.f32.mrb[0].mxu0
    %v4566 = vadd.f32 %v4445, %v4565
    %v4567 = vpop.f32.mrb[0].mxu0
    %4568 = vdwg.mxu0
    %4569 = vst.msk [vmem:[%s6] sm:$0xff] %vm107, %v4524
    %4570 = vst.msk [vmem:[%s6 + $0x8] sm:$0xff] %vm107, %v4530
    %4571 = vst.msk [vmem:[%s6 + $0x10] sm:$0xff] %vm107, %v4536
    %4572 = vst.msk [vmem:[%s6 + $0x18] sm:$0xff] %vm107, %v4542
    %4573 = vst.msk [vmem:[%s6 + $0x20] sm:$0xff] %vm107, %v4548
    %4574 = vst.msk [vmem:[%s6 + $0x28] sm:$0xff] %vm107, %v4554
    %4575 = vst.msk [vmem:[%s6 + $0x30] sm:$0xff] %vm107, %v4560
    %4576 = vst.msk [vmem:[%s6 + $0x38] sm:$0xff] %vm107, %v4566
    %4577 = vrot.lane.b32.xlu0 %v3692, 64
    %v4578 = vpop.permute.xlu0 %4577
    %4579 = vrot.lane.b32.xlu0 %v3693, 64
    %v4580 = vpop.permute.xlu0 %4579
    %4581 = vrot.lane.b32.xlu0 %v3694, 64
    %v4582 = vpop.permute.xlu0 %4581
    %4583 = vrot.lane.b32.xlu0 %v3695, 64
    %v4584 = vpop.permute.xlu0 %4583
    %4585 = vrot.lane.b32.xlu0 %v3696, 64
    %v4586 = vpop.permute.xlu0 %4585
    %4587 = vrot.lane.b32.xlu0 %v3697, 64
    %v4588 = vpop.permute.xlu0 %4587
    %4589 = vrot.lane.b32.xlu0 %v3698, 64
    %v4590 = vpop.permute.xlu0 %4589
    %4591 = vrot.lane.b32.xlu0 %v3699, 64
    %v4592 = vpop.permute.xlu0 %4591
    %vm4601 = vcmask 1048064
    %4602 = vst.msk [vmem:[%s6] sm:$0xff] %vm4601, %v4578
    %4603 = vst.msk [vmem:[%s6 + $0x8] sm:$0xff] %vm4601, %v4580
    %4604 = vst.msk [vmem:[%s6 + $0x10] sm:$0xff] %vm4601, %v4582
    %4605 = vst.msk [vmem:[%s6 + $0x18] sm:$0xff] %vm4601, %v4584
    %4606 = vst.msk [vmem:[%s6 + $0x20] sm:$0xff] %vm4601, %v4586
    %4607 = vst.msk [vmem:[%s6 + $0x28] sm:$0xff] %vm4601, %v4588
    %4608 = vst.msk [vmem:[%s6 + $0x30] sm:$0xff] %vm4601, %v4590
    %4609 = vst.msk [vmem:[%s6 + $0x38] sm:$0xff] %vm4601, %v4592
    // Predicated region
    $region46: #{custom_multihead_attention.1} parent=1 // pred_check
      _
    $region47: #{custom_multihead_attention.1} parent=1 // pred_check_branch
      %4611 = sbr.rel (0) target = $region49
    $region48: #{custom_multihead_attention.1} parent=1 // pred_region
      _
    $region49: #{custom_multihead_attention.1} parent=1 // pred_fallthru
      _
    // Predicated region
    $region50: #{custom_multihead_attention.1} parent=1 // pred_check
      _
    $region51: #{custom_multihead_attention.1} parent=1 // pred_check_branch
      %4613 = sbr.rel (0) target = $region53
    $region52: #{custom_multihead_attention.1} parent=1 // pred_region
      _
    $region53: #{custom_multihead_attention.1} parent=1 // pred_fallthru
      _
    %4614 = vsyncpa [#allocation3], 1
    %4615 = vsyncpa [#allocation5], 1
    %4616 = vsyncpa [#allocation8], 1

</llo_original>
